<compile_context>
chip_gen: v5e
topology: v5e:2x2
jax: 0.10.0
libtpu: 0.0.40
codegen_flags: <defaults>
</compile_context>

<pallas_src>
import functools

import jax
import jax.numpy as jnp
from jax.experimental import pallas as pl
from jax.experimental.pallas import tpu as pltpu  # noqa: F401  (TPU-specific tuning hooks)

_NEG = -1e30  # bias padding for softmax -> exp underflows to exactly 0


# ---------------------------------------------------------------------------
# helpers
# ---------------------------------------------------------------------------
def _round_up(v, m):
    return ((v + m - 1) // m) * m


def _full_spec(shape):
    # whole-array block resident in VMEM (all shapes here are tiny)
    return pl.BlockSpec(shape, lambda: (0,) * len(shape))


def _pad_cols(a, width, value=0.0):
    pad = width - a.shape[1]
    if pad <= 0:
        return a
    return jnp.pad(a, ((0, 0), (0, pad)), constant_values=value)


def _pad_rows(a, height, value=0.0):
    pad = height - a.shape[0]
    if pad <= 0:
        return a
    return jnp.pad(a, ((0, pad), (0, 0)), constant_values=value)


# ---------------------------------------------------------------------------
# fused kernel: merged branches -> L2 normalize -> k-means (Lloyd) -> softmax head
# ---------------------------------------------------------------------------
def _make_fused_kernel(bat, B, K, n_iters):
    def _tail(z, wc, bc, out_ref, u_ref, lab_ref, cen_ref):
        # z: (2B, D1P) stacked [out1; out2] before normalization; padded cols are 0.
        D1P = z.shape[1]
        # row-wise L2 normalize (rsqrt -> EUP slot); matches F.normalize(eps=1e-12).
        z = z * jax.lax.rsqrt(jnp.maximum(jnp.sum(z * z, axis=1, keepdims=True), 1e-24))
        o2 = z[B:, :]  # branch-2 rows drive k-means

        # ---- k-means (Lloyd), fully vreg/VMEM resident ------------------------
        # TODO(synk): kmeans_pytorch uses random init + tolerance-based convergence
        # on GPU; here we use deterministic init (first K rows) and a fixed number
        # of fully-unrolled Lloyd iterations.
        ones_b = jnp.ones((B, 1), jnp.float32)
        o2aug = jnp.concatenate([o2, ones_b], axis=1)                  # (B, D1P+1)
        kcol = jax.lax.broadcasted_iota(jnp.int32, (B, K), 1)          # (B, K)

        def assign(centers):
            # score_k = ||c_k||^2 - 2 x.c_k  (same argmin as euclidean distance),
            # computed as one MXU matmul against [-2*C | ||C||^2].
            cc = jnp.sum(centers * centers, axis=1, keepdims=True)     # (K,1)
            caug = jnp.concatenate([-2.0 * centers, cc], axis=1)       # (K, D1P+1)
            d = jax.lax.dot_general(o2aug, caug, (((1,), (1,)), ((), ())),
                                    preferred_element_type=jnp.float32)  # (B,K)
            # first-argmin via an unrolled VPU compare/select chain (no XLU mins)
            best_d = d[:, 0:1]
            best_i = jnp.zeros((B, 1), jnp.int32)
            for k in range(1, K):
                dk = d[:, k:k + 1]
                take = dk < best_d
                best_d = jnp.where(take, dk, best_d)
                best_i = jnp.where(take, k, best_i)
            return best_i

        def lloyd(_, centers):
            labels = assign(centers)
            onehot = (labels == kcol).astype(jnp.float32)              # (B,K)
            # one matmul gives both per-cluster sums and counts (ones column)
            sums_aug = jax.lax.dot_general(onehot, o2aug, (((0,), (0,)), ((), ())),
                                           preferred_element_type=jnp.float32)  # (K, D1P+1)
            sums = sums_aug[:, :D1P]
            counts = sums_aug[:, D1P:D1P + 1]
            new_c = sums / jnp.maximum(counts, 1.0)
            return jnp.where(counts > 0.0, new_c, centers)

        centers = jax.lax.fori_loop(0, n_iters, lloyd, o2[:K, :], unroll=True)
        labels = assign(centers)  # final labels consistent with the final centers

        # ---- shared softmax head over both branches at once (lane-dense K pad) ----
        logits = jnp.dot(z, wc, preferred_element_type=jnp.float32) + bc
        m = jnp.max(logits, axis=1, keepdims=True)
        e = jnp.exp(logits - m)                                        # padded cols -> 0
        u = e * pl.reciprocal(jnp.sum(e, axis=1, keepdims=True), approx=True)

        out_ref[...] = z.astype(out_ref.dtype)
        u_ref[...] = u.astype(u_ref.dtype)
        lab_ref[...] = labels
        cen_ref[...] = centers.astype(cen_ref.dtype)

    if bat:
        def kernel(xcat_ref, w1cat_ref, w34cat_ref, b34_ref, wc_ref, bc_ref,
                   out_ref, u_ref, lab_ref, cen_ref):
            # layer 1 of BOTH branches in one matmul:
            #   xcat = [x | 0 | 1 | 0 ; 0 | xw | 0 | 1],  w1cat = [w1; w2; b1; b2]
            h = jnp.dot(xcat_ref[...], w1cat_ref[...],
                        preferred_element_type=jnp.float32)            # (2B, 1024)
            rows = jax.lax.broadcasted_iota(jnp.int32, (2 * B, 1), 0)
            m1 = (rows < B).astype(jnp.float32)
            # layer 2 of both branches: block-diag hidden (2B, 2048) @ [w3; w4]
            h_bd = jnp.concatenate([h * m1, h * (1.0 - m1)], axis=1)
            bias2 = jnp.where(rows < B, b34_ref[0:1, :], b34_ref[1:2, :])
            z = jnp.dot(h_bd, w34cat_ref[...],
                        preferred_element_type=jnp.float32) + bias2
            z = jnp.maximum(z, 0.0)  # PyTorch 'bat': Linear -> Linear -> ReLU
            _tail(z, wc_ref[...], bc_ref[...], out_ref, u_ref, lab_ref, cen_ref)
    else:
        def kernel(xcat_ref, w1cat_ref, wc_ref, bc_ref,
                   out_ref, u_ref, lab_ref, cen_ref):
            # single block-diagonal matmul does both branches (bias via indicator cols)
            z = jnp.dot(xcat_ref[...], w1cat_ref[...],
                        preferred_element_type=jnp.float32)            # (2B, D1P)
            _tail(z, wc_ref[...], bc_ref[...], out_ref, u_ref, lab_ref, cen_ref)

    return kernel


def _fused_call(params, xcat, *, bat, B, n_clusters, n_iters):
    wcp, bcp = params[-2], params[-1]
    D1P, KP = wcp.shape
    args = (xcat,) + tuple(params)
    kernel = _make_fused_kernel(bat, B, n_clusters, n_iters)
    out_shape = (
        jax.ShapeDtypeStruct((2 * B, D1P), jnp.float32),       # stacked out1/out2 (padded)
        jax.ShapeDtypeStruct((2 * B, KP), jnp.float32),        # stacked u1/u2     (padded)
        jax.ShapeDtypeStruct((B, 1), jnp.int32),               # k-means labels
        jax.ShapeDtypeStruct((n_clusters, D1P), jnp.float32),  # k-means centers (padded)
    )
    # TODO(synk): for real batch sizes add a 'parallel' row grid (2 TCs on v7x),
    # keep weights resident via constant index_maps, feed bf16 to the MXU on
    # v6e/v7x, and size tiles for 64 MiB VMEM (v7x) / 16 MiB scoped default (v5e).
    return pl.pallas_call(
        kernel,
        out_shape=out_shape,
        in_specs=[_full_spec(a.shape) for a in args],
        out_specs=tuple(_full_spec(s.shape) for s in out_shape),
    )(*args)


@functools.partial(jax.jit, static_argnames=("name", "n_clusters", "d1", "n_iters"))
def model_forward(params, x, xw, *, name, n_clusters, d1, n_iters):
    B, d0 = x.shape
    bat = (name == "bat")
    f32 = jnp.float32
    x = x.astype(f32)
    xw = xw.astype(f32)
    # block-diagonal stacked input with indicator columns carrying the biases
    ones = jnp.ones((B, 1), f32)
    zers = jnp.zeros((B, 1), f32)
    z0 = jnp.zeros((B, d0), f32)
    xcat = jnp.concatenate(
        [jnp.concatenate([x, z0, ones, zers], axis=1),
         jnp.concatenate([z0, xw, zers, ones], axis=1)], axis=0)   # (2B, 2*d0+2)

    out_pad, u_pad, labels, centers_pad = _fused_call(
        params, xcat, bat=bat, B=B, n_clusters=n_clusters, n_iters=n_iters)
    out1, out2 = out_pad[:B, :d1], out_pad[B:, :d1]
    u1, u2 = u_pad[:B, :n_clusters], u_pad[B:, :n_clusters]
    km_label = labels[:, 0]
    km_centers = centers_pad[:, :d1]
    return out1, out2, km_label, km_centers, u1, u2


# ---------------------------------------------------------------------------
# Model: parameters + forward, mirroring the PyTorch my_model
# ---------------------------------------------------------------------------
def _linear_init(key, fan_in, fan_out):
    # mimic nn.Linear default U(-1/sqrt(fan_in), 1/sqrt(fan_in)); W stored (in,out)
    kw, kb = jax.random.split(key)
    bound = 1.0 / jnp.sqrt(jnp.float32(fan_in))
    w = jax.random.uniform(kw, (fan_in, fan_out), jnp.float32, -bound, bound)
    b = jax.random.uniform(kb, (1, fan_out), jnp.float32, -bound, bound)
    return w, b


class MyModelPallas:
    def __init__(self, dims, n_clusters, name, key):
        self.name = name
        self.n_clusters = n_clusters
        self.d1 = dims[1]
        d1p = _round_up(dims[1], 128)    # lane-dense feature dim
        kp = _round_up(n_clusters, 128)  # lane-dense cluster dim
        keys = jax.random.split(key, 5)
        if name == "bat":
            w1, b1 = _linear_init(keys[0], dims[0], 1024)
            w3, b3 = _linear_init(keys[1], 1024, dims[1])
            w2, b2 = _linear_init(keys[2], dims[0], 1024)
            w4, b4 = _linear_init(keys[3], 1024, dims[1])
            # merged layer 1: [w1; w2; b1; b2]  -> (2*d0+2, 1024)
            w1cat = jnp.concatenate([w1, w2, b1, b2], axis=0)
            # merged layer 2: [w3; w4]          -> (2048, d1p), biases as (2, d1p)
            w34cat = jnp.concatenate([_pad_cols(w3, d1p), _pad_cols(w4, d1p)], axis=0)
            b34 = jnp.concatenate([_pad_cols(b3, d1p), _pad_cols(b4, d1p)], axis=0)
            body = (w1cat, w34cat, b34)
        else:
            w1, b1 = _linear_init(keys[0], dims[0], dims[1])
            w2, b2 = _linear_init(keys[2], dims[0], dims[1])
            w1cat = jnp.concatenate(
                [_pad_cols(w1, d1p), _pad_cols(w2, d1p),
                 _pad_cols(b1, d1p), _pad_cols(b2, d1p)], axis=0)   # (2*d0+2, d1p)
            body = (w1cat,)
        wc, bc = _linear_init(keys[4], dims[1], n_clusters)
        wcp = _pad_cols(_pad_rows(wc, d1p), kp)      # zero pad rows & cols
        bcp = _pad_cols(bc, kp, value=_NEG)          # -inf-ish bias => softmax pad -> 0
        self.params = body + (wcp, bcp)

    def forward(self, x, xw, n_clusters):
        return model_forward(self.params, x, xw, name=self.name,
                             n_clusters=n_clusters, d1=self.d1, n_iters=10)


# ---------------------------------------------------------------------------
if __name__ == "__main__":
    key = jax.random.PRNGKey(0)
    k_x, k_xw, k_p1, k_p2 = jax.random.split(key, 4)

    B, dims, n_clusters = 8, [32, 16], 4
    x = jax.random.normal(k_x, (B, dims[0]), jnp.float32)
    xw = jax.random.normal(k_xw, (B, dims[0]), jnp.float32)

    # 'bat' variant (Linear -> Linear -> ReLU per branch)
    model_bat = MyModelPallas(dims, n_clusters, "bat", k_p1)
    outs_bat = model_bat.forward(x, xw, n_clusters)
    jax.block_until_ready(outs_bat)

    # default variant (single Linear per branch)
    model_simple = MyModelPallas(dims, n_clusters, "plain", k_p2)
    outs_simple = model_simple.forward(x, xw, n_clusters)
    jax.block_until_ready(outs_simple)

    # sanity checks: rows unit-norm (or all-zero after relu), softmax rows sum to 1,
    # labels in range, shapes as the PyTorch module implies.
    for outs in (outs_bat, outs_simple):
        out1, out2, km_label, km_centers, u1, u2 = outs
        n1 = jnp.linalg.norm(out1, axis=1)
        n2 = jnp.linalg.norm(out2, axis=1)
        assert bool(jnp.all((jnp.abs(n1 - 1.0) < 5e-3) | (n1 < 1e-6)))
        assert bool(jnp.all((jnp.abs(n2 - 1.0) < 5e-3) | (n2 < 1e-6)))
        assert bool(jnp.all(jnp.abs(u1.sum(axis=1) - 1.0) < 5e-3))
        assert bool(jnp.all(jnp.abs(u2.sum(axis=1) - 1.0) < 5e-3))
        assert km_label.shape == (B,) and km_centers.shape == (n_clusters, dims[1])
        assert u1.shape == (B, n_clusters) and u2.shape == (B, n_clusters)
        assert bool(jnp.all((km_label >= 0) & (km_label < n_clusters)))

    print("KERNEL_OK")
</pallas_src>

<mosaic_0001>
module attributes {stable_mosaic.version = 11 : i64} {
  func.func @kernel(%arg0: memref<16x66xf32, #tpu.memory_space<vmem>>, %arg1: memref<66x1024xf32, #tpu.memory_space<vmem>>, %arg2: memref<2048x128xf32, #tpu.memory_space<vmem>>, %arg3: memref<2x128xf32, #tpu.memory_space<vmem>>, %arg4: memref<128x128xf32, #tpu.memory_space<vmem>>, %arg5: memref<1x128xf32, #tpu.memory_space<vmem>>, %arg6: memref<16x128xf32, #tpu.memory_space<vmem>>, %arg7: memref<16x128xf32, #tpu.memory_space<vmem>>, %arg8: memref<8x1xi32, #tpu.memory_space<vmem>>, %arg9: memref<4x128xf32, #tpu.memory_space<vmem>>) attributes {dimension_semantics = [], scalar_prefetch = 0 : i64, scratch_operands = 0 : i64, tpu.core_type = #tpu.core_type<tc>} {
    %c0 = arith.constant 0 : index
    %c0_0 = arith.constant 0 : index
    %0 = vector.load %arg0[%c0, %c0_0] : memref<16x66xf32, #tpu.memory_space<vmem>>, vector<16x66xf32>
    %c0_1 = arith.constant 0 : index
    %c0_2 = arith.constant 0 : index
    %1 = vector.load %arg1[%c0_1, %c0_2] : memref<66x1024xf32, #tpu.memory_space<vmem>>, vector<66x1024xf32>
    %cst = arith.constant dense<0.000000e+00> : vector<16x1024xf32>
    %2 = tpu.matmul %0, %1, %cst {dimension_numbers = #tpu.dot_dimension_numbers<[1], [0], [0], [1], [0, 0, 1, 1], [], []>} : vector<16x66xf32>, vector<66x1024xf32>, vector<16x1024xf32> -> vector<16x1024xf32>
    %3 = tpu.iota {dimensions = array<i32: 0>} : vector<16x1xi32>
    %c8_i32 = arith.constant 8 : i32
    %4 = vector.broadcast %c8_i32 : i32 to vector<16x1xi32>
    %5 = arith.cmpi slt, %3, %4 : vector<16x1xi32>
    %6 = arith.extui %5 : vector<16x1xi1> to vector<16x1xi32>
    %7 = arith.sitofp %6 : vector<16x1xi32> to vector<16x1xf32>
    %8 = vector.broadcast %7 : vector<16x1xf32> to vector<16x1024xf32>
    %9 = arith.mulf %2, %8 : vector<16x1024xf32>
    %cst_3 = arith.constant 1.000000e+00 : f32
    %10 = vector.broadcast %cst_3 : f32 to vector<16x1xf32>
    %11 = arith.subf %10, %7 : vector<16x1xf32>
    %12 = vector.broadcast %11 : vector<16x1xf32> to vector<16x1024xf32>
    %13 = arith.mulf %2, %12 : vector<16x1024xf32>
    %14 = tpu.concatenate %9, %13 in 1 : vector<16x1024xf32>, vector<16x1024xf32> -> vector<16x2048xf32>
    %c8_i32_4 = arith.constant 8 : i32
    %15 = vector.broadcast %c8_i32_4 : i32 to vector<16x1xi32>
    %16 = arith.cmpi slt, %3, %15 : vector<16x1xi32>
    %c0_5 = arith.constant 0 : index
    %c0_6 = arith.constant 0 : index
    %17 = vector.load %arg3[%c0_5, %c0_6] : memref<2x128xf32, #tpu.memory_space<vmem>>, vector<1x128xf32>
    %c1 = arith.constant 1 : index
    %c0_7 = arith.constant 0 : index
    %18 = vector.load %arg3[%c1, %c0_7] : memref<2x128xf32, #tpu.memory_space<vmem>>, vector<1x128xf32>
    %19 = vector.shape_cast %16 : vector<16x1xi1> to vector<16x1xi1>
    %20 = vector.broadcast %19 : vector<16x1xi1> to vector<16x128xi1>
    %21 = vector.shape_cast %17 : vector<1x128xf32> to vector<1x128xf32>
    %22 = vector.broadcast %21 : vector<1x128xf32> to vector<16x128xf32>
    %23 = vector.shape_cast %18 : vector<1x128xf32> to vector<1x128xf32>
    %24 = vector.broadcast %23 : vector<1x128xf32> to vector<16x128xf32>
    %25 = arith.select %20, %22, %24 : vector<16x128xi1>, vector<16x128xf32>
    %c0_8 = arith.constant 0 : index
    %c0_9 = arith.constant 0 : index
    %26 = vector.load %arg2[%c0_8, %c0_9] : memref<2048x128xf32, #tpu.memory_space<vmem>>, vector<2048x128xf32>
    %cst_10 = arith.constant dense<0.000000e+00> : vector<16x128xf32>
    %27 = tpu.matmul %14, %26, %cst_10 {dimension_numbers = #tpu.dot_dimension_numbers<[1], [0], [0], [1], [0, 0, 1, 1], [], []>} : vector<16x2048xf32>, vector<2048x128xf32>, vector<16x128xf32> -> vector<16x128xf32>
    %28 = arith.addf %27, %25 : vector<16x128xf32>
    %cst_11 = arith.constant 0.000000e+00 : f32
    %29 = vector.broadcast %cst_11 : f32 to vector<16x128xf32>
    %30 = arith.maximumf %28, %29 : vector<16x128xf32>
    %c0_12 = arith.constant 0 : index
    %c0_13 = arith.constant 0 : index
    %31 = vector.load %arg4[%c0_12, %c0_13] : memref<128x128xf32, #tpu.memory_space<vmem>>, vector<128x128xf32>
    %c0_14 = arith.constant 0 : index
    %c0_15 = arith.constant 0 : index
    %32 = vector.load %arg5[%c0_14, %c0_15] : memref<1x128xf32, #tpu.memory_space<vmem>>, vector<1x128xf32>
    %33 = arith.mulf %30, %30 : vector<16x128xf32>
    %cst_16 = arith.constant dense<0.000000e+00> : vector<16xf32>
    %34 = vector.multi_reduction <add>, %33, %cst_16 [1] : vector<16x128xf32> to vector<16xf32>
    %35 = vector.shape_cast %34 : vector<16xf32> to vector<16x1xf32>
    %cst_17 = arith.constant 1.000000e-24 : f32
    %36 = vector.broadcast %cst_17 : f32 to vector<16x1xf32>
    %37 = arith.maximumf %35, %36 : vector<16x1xf32>
    %38 = math.rsqrt %37 : vector<16x1xf32>
    %39 = vector.broadcast %38 : vector<16x1xf32> to vector<16x128xf32>
    %40 = arith.mulf %30, %39 : vector<16x128xf32>
    %41 = vector.extract_strided_slice %40 {offsets = [8, 0], sizes = [8, 128], strides = [1, 1]} : vector<16x128xf32> to vector<8x128xf32>
    %cst_18 = arith.constant 1.000000e+00 : f32
    %42 = vector.broadcast %cst_18 : f32 to vector<8x1xf32>
    %43 = tpu.concatenate %41, %42 in 1 : vector<8x128xf32>, vector<8x1xf32> -> vector<8x129xf32>
    %44 = tpu.iota {dimensions = array<i32: 1>} : vector<8x4xi32>
    %45 = vector.extract_strided_slice %41 {offsets = [0, 0], sizes = [4, 128], strides = [1, 1]} : vector<8x128xf32> to vector<4x128xf32>
    %c0_i32 = arith.constant 0 : i32
    %46 = arith.mulf %45, %45 : vector<4x128xf32>
    %cst_19 = arith.constant dense<0.000000e+00> : vector<4xf32>
    %47 = vector.multi_reduction <add>, %46, %cst_19 [1] : vector<4x128xf32> to vector<4xf32>
    %48 = vector.shape_cast %47 : vector<4xf32> to vector<4x1xf32>
    %cst_20 = arith.constant -2.000000e+00 : f32
    %49 = vector.broadcast %cst_20 : f32 to vector<4x128xf32>
    %50 = arith.mulf %49, %45 : vector<4x128xf32>
    %51 = tpu.concatenate %50, %48 in 1 : vector<4x128xf32>, vector<4x1xf32> -> vector<4x129xf32>
    %cst_21 = arith.constant dense<0.000000e+00> : vector<8x4xf32>
    %52 = tpu.matmul %43, %51, %cst_21 {dimension_numbers = #tpu.dot_dimension_numbers<[1], [1], [0], [0], [0, 0, 1, 0], [], []>} : vector<8x129xf32>, vector<4x129xf32>, vector<8x4xf32> -> vector<8x4xf32>
    %53 = vector.extract_strided_slice %52 {offsets = [0, 0], sizes = [8, 1], strides = [1, 1]} : vector<8x4xf32> to vector<8x1xf32>
    %c0_i32_22 = arith.constant 0 : i32
    %54 = vector.broadcast %c0_i32_22 : i32 to vector<8x1xi32>
    %55 = vector.extract_strided_slice %52 {offsets = [0, 1], sizes = [8, 1], strides = [1, 1]} : vector<8x4xf32> to vector<8x1xf32>
    %56 = arith.cmpf olt, %55, %53 : vector<8x1xf32>
    %57 = arith.select %56, %55, %53 : vector<8x1xi1>, vector<8x1xf32>
    %c1_i32 = arith.constant 1 : i32
    %58 = vector.broadcast %c1_i32 : i32 to vector<8x1xi32>
    %59 = arith.select %56, %58, %54 : vector<8x1xi1>, vector<8x1xi32>
    %60 = vector.extract_strided_slice %52 {offsets = [0, 2], sizes = [8, 1], strides = [1, 1]} : vector<8x4xf32> to vector<8x1xf32>
    %61 = arith.cmpf olt, %60, %57 : vector<8x1xf32>
    %62 = arith.select %61, %60, %57 : vector<8x1xi1>, vector<8x1xf32>
    %c2_i32 = arith.constant 2 : i32
    %63 = vector.broadcast %c2_i32 : i32 to vector<8x1xi32>
    %64 = arith.select %61, %63, %59 : vector<8x1xi1>, vector<8x1xi32>
    %65 = vector.extract_strided_slice %52 {offsets = [0, 3], sizes = [8, 1], strides = [1, 1]} : vector<8x4xf32> to vector<8x1xf32>
    %66 = arith.cmpf olt, %65, %62 : vector<8x1xf32>
    %c3_i32 = arith.constant 3 : i32
    %67 = vector.broadcast %c3_i32 : i32 to vector<8x1xi32>
    %68 = arith.select %66, %67, %64 : vector<8x1xi1>, vector<8x1xi32>
    %69 = vector.broadcast %68 : vector<8x1xi32> to vector<8x4xi32>
    %70 = arith.cmpi eq, %69, %44 : vector<8x4xi32>
    %71 = arith.extui %70 : vector<8x4xi1> to vector<8x4xi32>
    %72 = arith.sitofp %71 : vector<8x4xi32> to vector<8x4xf32>
    %cst_23 = arith.constant dense<0.000000e+00> : vector<4x129xf32>
    %73 = tpu.matmul %72, %43, %cst_23 {dimension_numbers = #tpu.dot_dimension_numbers<[0], [0], [1], [1], [0, 1, 1, 1], [], []>} : vector<8x4xf32>, vector<8x129xf32>, vector<4x129xf32> -> vector<4x129xf32>
    %74 = vector.extract_strided_slice %73 {offsets = [0, 0], sizes = [4, 128], strides = [1, 1]} : vector<4x129xf32> to vector<4x128xf32>
    %75 = vector.extract_strided_slice %73 {offsets = [0, 128], sizes = [4, 1], strides = [1, 1]} : vector<4x129xf32> to vector<4x1xf32>
    %cst_24 = arith.constant 1.000000e+00 : f32
    %76 = vector.broadcast %cst_24 : f32 to vector<4x1xf32>
    %77 = arith.maximumf %75, %76 : vector<4x1xf32>
    %78 = vector.broadcast %77 : vector<4x1xf32> to vector<4x128xf32>
    %79 = arith.divf %74, %78 : vector<4x128xf32>
    %cst_25 = arith.constant 0.000000e+00 : f32
    %80 = vector.broadcast %cst_25 : f32 to vector<4x1xf32>
    %81 = arith.cmpf ogt, %75, %80 : vector<4x1xf32>
    %82 = vector.shape_cast %81 : vector<4x1xi1> to vector<4x1xi1>
    %83 = vector.broadcast %82 : vector<4x1xi1> to vector<4x128xi1>
    %84 = arith.select %83, %79, %45 : vector<4x128xi1>, vector<4x128xf32>
    %c1_i32_26 = arith.constant 1 : i32
    %85 = arith.mulf %84, %84 : vector<4x128xf32>
    %cst_27 = arith.constant dense<0.000000e+00> : vector<4xf32>
    %86 = vector.multi_reduction <add>, %85, %cst_27 [1] : vector<4x128xf32> to vector<4xf32>
    %87 = vector.shape_cast %86 : vector<4xf32> to vector<4x1xf32>
    %cst_28 = arith.constant -2.000000e+00 : f32
    %88 = vector.broadcast %cst_28 : f32 to vector<4x128xf32>
    %89 = arith.mulf %88, %84 : vector<4x128xf32>
    %90 = tpu.concatenate %89, %87 in 1 : vector<4x128xf32>, vector<4x1xf32> -> vector<4x129xf32>
    %cst_29 = arith.constant dense<0.000000e+00> : vector<8x4xf32>
    %91 = tpu.matmul %43, %90, %cst_29 {dimension_numbers = #tpu.dot_dimension_numbers<[1], [1], [0], [0], [0, 0, 1, 0], [], []>} : vector<8x129xf32>, vector<4x129xf32>, vector<8x4xf32> -> vector<8x4xf32>
    %92 = vector.extract_strided_slice %91 {offsets = [0, 0], sizes = [8, 1], strides = [1, 1]} : vector<8x4xf32> to vector<8x1xf32>
    %c0_i32_30 = arith.constant 0 : i32
    %93 = vector.broadcast %c0_i32_30 : i32 to vector<8x1xi32>
    %94 = vector.extract_strided_slice %91 {offsets = [0, 1], sizes = [8, 1], strides = [1, 1]} : vector<8x4xf32> to vector<8x1xf32>
    %95 = arith.cmpf olt, %94, %92 : vector<8x1xf32>
    %96 = arith.select %95, %94, %92 : vector<8x1xi1>, vector<8x1xf32>
    %c1_i32_31 = arith.constant 1 : i32
    %97 = vector.broadcast %c1_i32_31 : i32 to vector<8x1xi32>
    %98 = arith.select %95, %97, %93 : vector<8x1xi1>, vector<8x1xi32>
    %99 = vector.extract_strided_slice %91 {offsets = [0, 2], sizes = [8, 1], strides = [1, 1]} : vector<8x4xf32> to vector<8x1xf32>
    %100 = arith.cmpf olt, %99, %96 : vector<8x1xf32>
    %101 = arith.select %100, %99, %96 : vector<8x1xi1>, vector<8x1xf32>
    %c2_i32_32 = arith.constant 2 : i32
    %102 = vector.broadcast %c2_i32_32 : i32 to vector<8x1xi32>
    %103 = arith.select %100, %102, %98 : vector<8x1xi1>, vector<8x1xi32>
    %104 = vector.extract_strided_slice %91 {offsets = [0, 3], sizes = [8, 1], strides = [1, 1]} : vector<8x4xf32> to vector<8x1xf32>
    %105 = arith.cmpf olt, %104, %101 : vector<8x1xf32>
    %c3_i32_33 = arith.constant 3 : i32
    %106 = vector.broadcast %c3_i32_33 : i32 to vector<8x1xi32>
    %107 = arith.select %105, %106, %103 : vector<8x1xi1>, vector<8x1xi32>
    %108 = vector.broadcast %107 : vector<8x1xi32> to vector<8x4xi32>
    %109 = arith.cmpi eq, %108, %44 : vector<8x4xi32>
    %110 = arith.extui %109 : vector<8x4xi1> to vector<8x4xi32>
    %111 = arith.sitofp %110 : vector<8x4xi32> to vector<8x4xf32>
    %cst_34 = arith.constant dense<0.000000e+00> : vector<4x129xf32>
    %112 = tpu.matmul %111, %43, %cst_34 {dimension_numbers = #tpu.dot_dimension_numbers<[0], [0], [1], [1], [0, 1, 1, 1], [], []>} : vector<8x4xf32>, vector<8x129xf32>, vector<4x129xf32> -> vector<4x129xf32>
    %113 = vector.extract_strided_slice %112 {offsets = [0, 0], sizes = [4, 128], strides = [1, 1]} : vector<4x129xf32> to vector<4x128xf32>
    %114 = vector.extract_strided_slice %112 {offsets = [0, 128], sizes = [4, 1], strides = [1, 1]} : vector<4x129xf32> to vector<4x1xf32>
    %cst_35 = arith.constant 1.000000e+00 : f32
    %115 = vector.broadcast %cst_35 : f32 to vector<4x1xf32>
    %116 = arith.maximumf %114, %115 : vector<4x1xf32>
    %117 = vector.broadcast %116 : vector<4x1xf32> to vector<4x128xf32>
    %118 = arith.divf %113, %117 : vector<4x128xf32>
    %cst_36 = arith.constant 0.000000e+00 : f32
    %119 = vector.broadcast %cst_36 : f32 to vector<4x1xf32>
    %120 = arith.cmpf ogt, %114, %119 : vector<4x1xf32>
    %121 = vector.shape_cast %120 : vector<4x1xi1> to vector<4x1xi1>
    %122 = vector.broadcast %121 : vector<4x1xi1> to vector<4x128xi1>
    %123 = arith.select %122, %118, %84 : vector<4x128xi1>, vector<4x128xf32>
    %c2_i32_37 = arith.constant 2 : i32
    %124 = arith.mulf %123, %123 : vector<4x128xf32>
    %cst_38 = arith.constant dense<0.000000e+00> : vector<4xf32>
    %125 = vector.multi_reduction <add>, %124, %cst_38 [1] : vector<4x128xf32> to vector<4xf32>
    %126 = vector.shape_cast %125 : vector<4xf32> to vector<4x1xf32>
    %cst_39 = arith.constant -2.000000e+00 : f32
    %127 = vector.broadcast %cst_39 : f32 to vector<4x128xf32>
    %128 = arith.mulf %127, %123 : vector<4x128xf32>
    %129 = tpu.concatenate %128, %126 in 1 : vector<4x128xf32>, vector<4x1xf32> -> vector<4x129xf32>
    %cst_40 = arith.constant dense<0.000000e+00> : vector<8x4xf32>
    %130 = tpu.matmul %43, %129, %cst_40 {dimension_numbers = #tpu.dot_dimension_numbers<[1], [1], [0], [0], [0, 0, 1, 0], [], []>} : vector<8x129xf32>, vector<4x129xf32>, vector<8x4xf32> -> vector<8x4xf32>
    %131 = vector.extract_strided_slice %130 {offsets = [0, 0], sizes = [8, 1], strides = [1, 1]} : vector<8x4xf32> to vector<8x1xf32>
    %c0_i32_41 = arith.constant 0 : i32
    %132 = vector.broadcast %c0_i32_41 : i32 to vector<8x1xi32>
    %133 = vector.extract_strided_slice %130 {offsets = [0, 1], sizes = [8, 1], strides = [1, 1]} : vector<8x4xf32> to vector<8x1xf32>
    %134 = arith.cmpf olt, %133, %131 : vector<8x1xf32>
    %135 = arith.select %134, %133, %131 : vector<8x1xi1>, vector<8x1xf32>
    %c1_i32_42 = arith.constant 1 : i32
    %136 = vector.broadcast %c1_i32_42 : i32 to vector<8x1xi32>
    %137 = arith.select %134, %136, %132 : vector<8x1xi1>, vector<8x1xi32>
    %138 = vector.extract_strided_slice %130 {offsets = [0, 2], sizes = [8, 1], strides = [1, 1]} : vector<8x4xf32> to vector<8x1xf32>
    %139 = arith.cmpf olt, %138, %135 : vector<8x1xf32>
    %140 = arith.select %139, %138, %135 : vector<8x1xi1>, vector<8x1xf32>
    %c2_i32_43 = arith.constant 2 : i32
    %141 = vector.broadcast %c2_i32_43 : i32 to vector<8x1xi32>
    %142 = arith.select %139, %141, %137 : vector<8x1xi1>, vector<8x1xi32>
    %143 = vector.extract_strided_slice %130 {offsets = [0, 3], sizes = [8, 1], strides = [1, 1]} : vector<8x4xf32> to vector<8x1xf32>
    %144 = arith.cmpf olt, %143, %140 : vector<8x1xf32>
    %c3_i32_44 = arith.constant 3 : i32
    %145 = vector.broadcast %c3_i32_44 : i32 to vector<8x1xi32>
    %146 = arith.select %144, %145, %142 : vector<8x1xi1>, vector<8x1xi32>
    %147 = vector.broadcast %146 : vector<8x1xi32> to vector<8x4xi32>
    %148 = arith.cmpi eq, %147, %44 : vector<8x4xi32>
    %149 = arith.extui %148 : vector<8x4xi1> to vector<8x4xi32>
    %150 = arith.sitofp %149 : vector<8x4xi32> to vector<8x4xf32>
    %cst_45 = arith.constant dense<0.000000e+00> : vector<4x129xf32>
    %151 = tpu.matmul %150, %43, %cst_45 {dimension_numbers = #tpu.dot_dimension_numbers<[0], [0], [1], [1], [0, 1, 1, 1], [], []>} : vector<8x4xf32>, vector<8x129xf32>, vector<4x129xf32> -> vector<4x129xf32>
    %152 = vector.extract_strided_slice %151 {offsets = [0, 0], sizes = [4, 128], strides = [1, 1]} : vector<4x129xf32> to vector<4x128xf32>
    %153 = vector.extract_strided_slice %151 {offsets = [0, 128], sizes = [4, 1], strides = [1, 1]} : vector<4x129xf32> to vector<4x1xf32>
    %cst_46 = arith.constant 1.000000e+00 : f32
    %154 = vector.broadcast %cst_46 : f32 to vector<4x1xf32>
    %155 = arith.maximumf %153, %154 : vector<4x1xf32>
    %156 = vector.broadcast %155 : vector<4x1xf32> to vector<4x128xf32>
    %157 = arith.divf %152, %156 : vector<4x128xf32>
    %cst_47 = arith.constant 0.000000e+00 : f32
    %158 = vector.broadcast %cst_47 : f32 to vector<4x1xf32>
    %159 = arith.cmpf ogt, %153, %158 : vector<4x1xf32>
    %160 = vector.shape_cast %159 : vector<4x1xi1> to vector<4x1xi1>
    %161 = vector.broadcast %160 : vector<4x1xi1> to vector<4x128xi1>
    %162 = arith.select %161, %157, %123 : vector<4x128xi1>, vector<4x128xf32>
    %c3_i32_48 = arith.constant 3 : i32
    %163 = arith.mulf %162, %162 : vector<4x128xf32>
    %cst_49 = arith.constant dense<0.000000e+00> : vector<4xf32>
    %164 = vector.multi_reduction <add>, %163, %cst_49 [1] : vector<4x128xf32> to vector<4xf32>
    %165 = vector.shape_cast %164 : vector<4xf32> to vector<4x1xf32>
    %cst_50 = arith.constant -2.000000e+00 : f32
    %166 = vector.broadcast %cst_50 : f32 to vector<4x128xf32>
    %167 = arith.mulf %166, %162 : vector<4x128xf32>
    %168 = tpu.concatenate %167, %165 in 1 : vector<4x128xf32>, vector<4x1xf32> -> vector<4x129xf32>
    %cst_51 = arith.constant dense<0.000000e+00> : vector<8x4xf32>
    %169 = tpu.matmul %43, %168, %cst_51 {dimension_numbers = #tpu.dot_dimension_numbers<[1], [1], [0], [0], [0, 0, 1, 0], [], []>} : vector<8x129xf32>, vector<4x129xf32>, vector<8x4xf32> -> vector<8x4xf32>
    %170 = vector.extract_strided_slice %169 {offsets = [0, 0], sizes = [8, 1], strides = [1, 1]} : vector<8x4xf32> to vector<8x1xf32>
    %c0_i32_52 = arith.constant 0 : i32
    %171 = vector.broadcast %c0_i32_52 : i32 to vector<8x1xi32>
    %172 = vector.extract_strided_slice %169 {offsets = [0, 1], sizes = [8, 1], strides = [1, 1]} : vector<8x4xf32> to vector<8x1xf32>
    %173 = arith.cmpf olt, %172, %170 : vector<8x1xf32>
    %174 = arith.select %173, %172, %170 : vector<8x1xi1>, vector<8x1xf32>
    %c1_i32_53 = arith.constant 1 : i32
    %175 = vector.broadcast %c1_i32_53 : i32 to vector<8x1xi32>
    %176 = arith.select %173, %175, %171 : vector<8x1xi1>, vector<8x1xi32>
    %177 = vector.extract_strided_slice %169 {offsets = [0, 2], sizes = [8, 1], strides = [1, 1]} : vector<8x4xf32> to vector<8x1xf32>
    %178 = arith.cmpf olt, %177, %174 : vector<8x1xf32>
    %179 = arith.select %178, %177, %174 : vector<8x1xi1>, vector<8x1xf32>
    %c2_i32_54 = arith.constant 2 : i32
    %180 = vector.broadcast %c2_i32_54 : i32 to vector<8x1xi32>
    %181 = arith.select %178, %180, %176 : vector<8x1xi1>, vector<8x1xi32>
    %182 = vector.extract_strided_slice %169 {offsets = [0, 3], sizes = [8, 1], strides = [1, 1]} : vector<8x4xf32> to vector<8x1xf32>
    %183 = arith.cmpf olt, %182, %179 : vector<8x1xf32>
    %c3_i32_55 = arith.constant 3 : i32
    %184 = vector.broadcast %c3_i32_55 : i32 to vector<8x1xi32>
    %185 = arith.select %183, %184, %181 : vector<8x1xi1>, vector<8x1xi32>
    %186 = vector.broadcast %185 : vector<8x1xi32> to vector<8x4xi32>
    %187 = arith.cmpi eq, %186, %44 : vector<8x4xi32>
    %188 = arith.extui %187 : vector<8x4xi1> to vector<8x4xi32>
    %189 = arith.sitofp %188 : vector<8x4xi32> to vector<8x4xf32>
    %cst_56 = arith.constant dense<0.000000e+00> : vector<4x129xf32>
    %190 = tpu.matmul %189, %43, %cst_56 {dimension_numbers = #tpu.dot_dimension_numbers<[0], [0], [1], [1], [0, 1, 1, 1], [], []>} : vector<8x4xf32>, vector<8x129xf32>, vector<4x129xf32> -> vector<4x129xf32>
    %191 = vector.extract_strided_slice %190 {offsets = [0, 0], sizes = [4, 128], strides = [1, 1]} : vector<4x129xf32> to vector<4x128xf32>
    %192 = vector.extract_strided_slice %190 {offsets = [0, 128], sizes = [4, 1], strides = [1, 1]} : vector<4x129xf32> to vector<4x1xf32>
    %cst_57 = arith.constant 1.000000e+00 : f32
    %193 = vector.broadcast %cst_57 : f32 to vector<4x1xf32>
    %194 = arith.maximumf %192, %193 : vector<4x1xf32>
    %195 = vector.broadcast %194 : vector<4x1xf32> to vector<4x128xf32>
    %196 = arith.divf %191, %195 : vector<4x128xf32>
    %cst_58 = arith.constant 0.000000e+00 : f32
    %197 = vector.broadcast %cst_58 : f32 to vector<4x1xf32>
    %198 = arith.cmpf ogt, %192, %197 : vector<4x1xf32>
    %199 = vector.shape_cast %198 : vector<4x1xi1> to vector<4x1xi1>
    %200 = vector.broadcast %199 : vector<4x1xi1> to vector<4x128xi1>
    %201 = arith.select %200, %196, %162 : vector<4x128xi1>, vector<4x128xf32>
    %c4_i32 = arith.constant 4 : i32
    %202 = arith.mulf %201, %201 : vector<4x128xf32>
    %cst_59 = arith.constant dense<0.000000e+00> : vector<4xf32>
    %203 = vector.multi_reduction <add>, %202, %cst_59 [1] : vector<4x128xf32> to vector<4xf32>
    %204 = vector.shape_cast %203 : vector<4xf32> to vector<4x1xf32>
    %cst_60 = arith.constant -2.000000e+00 : f32
    %205 = vector.broadcast %cst_60 : f32 to vector<4x128xf32>
    %206 = arith.mulf %205, %201 : vector<4x128xf32>
    %207 = tpu.concatenate %206, %204 in 1 : vector<4x128xf32>, vector<4x1xf32> -> vector<4x129xf32>
    %cst_61 = arith.constant dense<0.000000e+00> : vector<8x4xf32>
    %208 = tpu.matmul %43, %207, %cst_61 {dimension_numbers = #tpu.dot_dimension_numbers<[1], [1], [0], [0], [0, 0, 1, 0], [], []>} : vector<8x129xf32>, vector<4x129xf32>, vector<8x4xf32> -> vector<8x4xf32>
    %209 = vector.extract_strided_slice %208 {offsets = [0, 0], sizes = [8, 1], strides = [1, 1]} : vector<8x4xf32> to vector<8x1xf32>
    %c0_i32_62 = arith.constant 0 : i32
    %210 = vector.broadcast %c0_i32_62 : i32 to vector<8x1xi32>
    %211 = vector.extract_strided_slice %208 {offsets = [0, 1], sizes = [8, 1], strides = [1, 1]} : vector<8x4xf32> to vector<8x1xf32>
    %212 = arith.cmpf olt, %211, %209 : vector<8x1xf32>
    %213 = arith.select %212, %211, %209 : vector<8x1xi1>, vector<8x1xf32>
    %c1_i32_63 = arith.constant 1 : i32
    %214 = vector.broadcast %c1_i32_63 : i32 to vector<8x1xi32>
    %215 = arith.select %212, %214, %210 : vector<8x1xi1>, vector<8x1xi32>
    %216 = vector.extract_strided_slice %208 {offsets = [0, 2], sizes = [8, 1], strides = [1, 1]} : vector<8x4xf32> to vector<8x1xf32>
    %217 = arith.cmpf olt, %216, %213 : vector<8x1xf32>
    %218 = arith.select %217, %216, %213 : vector<8x1xi1>, vector<8x1xf32>
    %c2_i32_64 = arith.constant 2 : i32
    %219 = vector.broadcast %c2_i32_64 : i32 to vector<8x1xi32>
    %220 = arith.select %217, %219, %215 : vector<8x1xi1>, vector<8x1xi32>
    %221 = vector.extract_strided_slice %208 {offsets = [0, 3], sizes = [8, 1], strides = [1, 1]} : vector<8x4xf32> to vector<8x1xf32>
    %222 = arith.cmpf olt, %221, %218 : vector<8x1xf32>
    %c3_i32_65 = arith.constant 3 : i32
    %223 = vector.broadcast %c3_i32_65 : i32 to vector<8x1xi32>
    %224 = arith.select %222, %223, %220 : vector<8x1xi1>, vector<8x1xi32>
    %225 = vector.broadcast %224 : vector<8x1xi32> to vector<8x4xi32>
    %226 = arith.cmpi eq, %225, %44 : vector<8x4xi32>
    %227 = arith.extui %226 : vector<8x4xi1> to vector<8x4xi32>
    %228 = arith.sitofp %227 : vector<8x4xi32> to vector<8x4xf32>
    %cst_66 = arith.constant dense<0.000000e+00> : vector<4x129xf32>
    %229 = tpu.matmul %228, %43, %cst_66 {dimension_numbers = #tpu.dot_dimension_numbers<[0], [0], [1], [1], [0, 1, 1, 1], [], []>} : vector<8x4xf32>, vector<8x129xf32>, vector<4x129xf32> -> vector<4x129xf32>
    %230 = vector.extract_strided_slice %229 {offsets = [0, 0], sizes = [4, 128], strides = [1, 1]} : vector<4x129xf32> to vector<4x128xf32>
    %231 = vector.extract_strided_slice %229 {offsets = [0, 128], sizes = [4, 1], strides = [1, 1]} : vector<4x129xf32> to vector<4x1xf32>
    %cst_67 = arith.constant 1.000000e+00 : f32
    %232 = vector.broadcast %cst_67 : f32 to vector<4x1xf32>
    %233 = arith.maximumf %231, %232 : vector<4x1xf32>
    %234 = vector.broadcast %233 : vector<4x1xf32> to vector<4x128xf32>
    %235 = arith.divf %230, %234 : vector<4x128xf32>
    %cst_68 = arith.constant 0.000000e+00 : f32
    %236 = vector.broadcast %cst_68 : f32 to vector<4x1xf32>
    %237 = arith.cmpf ogt, %231, %236 : vector<4x1xf32>
    %238 = vector.shape_cast %237 : vector<4x1xi1> to vector<4x1xi1>
    %239 = vector.broadcast %238 : vector<4x1xi1> to vector<4x128xi1>
    %240 = arith.select %239, %235, %201 : vector<4x128xi1>, vector<4x128xf32>
    %c5_i32 = arith.constant 5 : i32
    %241 = arith.mulf %240, %240 : vector<4x128xf32>
    %cst_69 = arith.constant dense<0.000000e+00> : vector<4xf32>
    %242 = vector.multi_reduction <add>, %241, %cst_69 [1] : vector<4x128xf32> to vector<4xf32>
    %243 = vector.shape_cast %242 : vector<4xf32> to vector<4x1xf32>
    %cst_70 = arith.constant -2.000000e+00 : f32
    %244 = vector.broadcast %cst_70 : f32 to vector<4x128xf32>
    %245 = arith.mulf %244, %240 : vector<4x128xf32>
    %246 = tpu.concatenate %245, %243 in 1 : vector<4x128xf32>, vector<4x1xf32> -> vector<4x129xf32>
    %cst_71 = arith.constant dense<0.000000e+00> : vector<8x4xf32>
    %247 = tpu.matmul %43, %246, %cst_71 {dimension_numbers = #tpu.dot_dimension_numbers<[1], [1], [0], [0], [0, 0, 1, 0], [], []>} : vector<8x129xf32>, vector<4x129xf32>, vector<8x4xf32> -> vector<8x4xf32>
    %248 = vector.extract_strided_slice %247 {offsets = [0, 0], sizes = [8, 1], strides = [1, 1]} : vector<8x4xf32> to vector<8x1xf32>
    %c0_i32_72 = arith.constant 0 : i32
    %249 = vector.broadcast %c0_i32_72 : i32 to vector<8x1xi32>
    %250 = vector.extract_strided_slice %247 {offsets = [0, 1], sizes = [8, 1], strides = [1, 1]} : vector<8x4xf32> to vector<8x1xf32>
    %251 = arith.cmpf olt, %250, %248 : vector<8x1xf32>
    %252 = arith.select %251, %250, %248 : vector<8x1xi1>, vector<8x1xf32>
    %c1_i32_73 = arith.constant 1 : i32
    %253 = vector.broadcast %c1_i32_73 : i32 to vector<8x1xi32>
    %254 = arith.select %251, %253, %249 : vector<8x1xi1>, vector<8x1xi32>
    %255 = vector.extract_strided_slice %247 {offsets = [0, 2], sizes = [8, 1], strides = [1, 1]} : vector<8x4xf32> to vector<8x1xf32>
    %256 = arith.cmpf olt, %255, %252 : vector<8x1xf32>
    %257 = arith.select %256, %255, %252 : vector<8x1xi1>, vector<8x1xf32>
    %c2_i32_74 = arith.constant 2 : i32
    %258 = vector.broadcast %c2_i32_74 : i32 to vector<8x1xi32>
    %259 = arith.select %256, %258, %254 : vector<8x1xi1>, vector<8x1xi32>
    %260 = vector.extract_strided_slice %247 {offsets = [0, 3], sizes = [8, 1], strides = [1, 1]} : vector<8x4xf32> to vector<8x1xf32>
    %261 = arith.cmpf olt, %260, %257 : vector<8x1xf32>
    %c3_i32_75 = arith.constant 3 : i32
    %262 = vector.broadcast %c3_i32_75 : i32 to vector<8x1xi32>
    %263 = arith.select %261, %262, %259 : vector<8x1xi1>, vector<8x1xi32>
    %264 = vector.broadcast %263 : vector<8x1xi32> to vector<8x4xi32>
    %265 = arith.cmpi eq, %264, %44 : vector<8x4xi32>
    %266 = arith.extui %265 : vector<8x4xi1> to vector<8x4xi32>
    %267 = arith.sitofp %266 : vector<8x4xi32> to vector<8x4xf32>
    %cst_76 = arith.constant dense<0.000000e+00> : vector<4x129xf32>
    %268 = tpu.matmul %267, %43, %cst_76 {dimension_numbers = #tpu.dot_dimension_numbers<[0], [0], [1], [1], [0, 1, 1, 1], [], []>} : vector<8x4xf32>, vector<8x129xf32>, vector<4x129xf32> -> vector<4x129xf32>
    %269 = vector.extract_strided_slice %268 {offsets = [0, 0], sizes = [4, 128], strides = [1, 1]} : vector<4x129xf32> to vector<4x128xf32>
    %270 = vector.extract_strided_slice %268 {offsets = [0, 128], sizes = [4, 1], strides = [1, 1]} : vector<4x129xf32> to vector<4x1xf32>
    %cst_77 = arith.constant 1.000000e+00 : f32
    %271 = vector.broadcast %cst_77 : f32 to vector<4x1xf32>
    %272 = arith.maximumf %270, %271 : vector<4x1xf32>
    %273 = vector.broadcast %272 : vector<4x1xf32> to vector<4x128xf32>
    %274 = arith.divf %269, %273 : vector<4x128xf32>
    %cst_78 = arith.constant 0.000000e+00 : f32
    %275 = vector.broadcast %cst_78 : f32 to vector<4x1xf32>
    %276 = arith.cmpf ogt, %270, %275 : vector<4x1xf32>
    %277 = vector.shape_cast %276 : vector<4x1xi1> to vector<4x1xi1>
    %278 = vector.broadcast %277 : vector<4x1xi1> to vector<4x128xi1>
    %279 = arith.select %278, %274, %240 : vector<4x128xi1>, vector<4x128xf32>
    %c6_i32 = arith.constant 6 : i32
    %280 = arith.mulf %279, %279 : vector<4x128xf32>
    %cst_79 = arith.constant dense<0.000000e+00> : vector<4xf32>
    %281 = vector.multi_reduction <add>, %280, %cst_79 [1] : vector<4x128xf32> to vector<4xf32>
    %282 = vector.shape_cast %281 : vector<4xf32> to vector<4x1xf32>
    %cst_80 = arith.constant -2.000000e+00 : f32
    %283 = vector.broadcast %cst_80 : f32 to vector<4x128xf32>
    %284 = arith.mulf %283, %279 : vector<4x128xf32>
    %285 = tpu.concatenate %284, %282 in 1 : vector<4x128xf32>, vector<4x1xf32> -> vector<4x129xf32>
    %cst_81 = arith.constant dense<0.000000e+00> : vector<8x4xf32>
    %286 = tpu.matmul %43, %285, %cst_81 {dimension_numbers = #tpu.dot_dimension_numbers<[1], [1], [0], [0], [0, 0, 1, 0], [], []>} : vector<8x129xf32>, vector<4x129xf32>, vector<8x4xf32> -> vector<8x4xf32>
    %287 = vector.extract_strided_slice %286 {offsets = [0, 0], sizes = [8, 1], strides = [1, 1]} : vector<8x4xf32> to vector<8x1xf32>
    %c0_i32_82 = arith.constant 0 : i32
    %288 = vector.broadcast %c0_i32_82 : i32 to vector<8x1xi32>
    %289 = vector.extract_strided_slice %286 {offsets = [0, 1], sizes = [8, 1], strides = [1, 1]} : vector<8x4xf32> to vector<8x1xf32>
    %290 = arith.cmpf olt, %289, %287 : vector<8x1xf32>
    %291 = arith.select %290, %289, %287 : vector<8x1xi1>, vector<8x1xf32>
    %c1_i32_83 = arith.constant 1 : i32
    %292 = vector.broadcast %c1_i32_83 : i32 to vector<8x1xi32>
    %293 = arith.select %290, %292, %288 : vector<8x1xi1>, vector<8x1xi32>
    %294 = vector.extract_strided_slice %286 {offsets = [0, 2], sizes = [8, 1], strides = [1, 1]} : vector<8x4xf32> to vector<8x1xf32>
    %295 = arith.cmpf olt, %294, %291 : vector<8x1xf32>
    %296 = arith.select %295, %294, %291 : vector<8x1xi1>, vector<8x1xf32>
    %c2_i32_84 = arith.constant 2 : i32
    %297 = vector.broadcast %c2_i32_84 : i32 to vector<8x1xi32>
    %298 = arith.select %295, %297, %293 : vector<8x1xi1>, vector<8x1xi32>
    %299 = vector.extract_strided_slice %286 {offsets = [0, 3], sizes = [8, 1], strides = [1, 1]} : vector<8x4xf32> to vector<8x1xf32>
    %300 = arith.cmpf olt, %299, %296 : vector<8x1xf32>
    %c3_i32_85 = arith.constant 3 : i32
    %301 = vector.broadcast %c3_i32_85 : i32 to vector<8x1xi32>
    %302 = arith.select %300, %301, %298 : vector<8x1xi1>, vector<8x1xi32>
    %303 = vector.broadcast %302 : vector<8x1xi32> to vector<8x4xi32>
    %304 = arith.cmpi eq, %303, %44 : vector<8x4xi32>
    %305 = arith.extui %304 : vector<8x4xi1> to vector<8x4xi32>
    %306 = arith.sitofp %305 : vector<8x4xi32> to vector<8x4xf32>
    %cst_86 = arith.constant dense<0.000000e+00> : vector<4x129xf32>
    %307 = tpu.matmul %306, %43, %cst_86 {dimension_numbers = #tpu.dot_dimension_numbers<[0], [0], [1], [1], [0, 1, 1, 1], [], []>} : vector<8x4xf32>, vector<8x129xf32>, vector<4x129xf32> -> vector<4x129xf32>
    %308 = vector.extract_strided_slice %307 {offsets = [0, 0], sizes = [4, 128], strides = [1, 1]} : vector<4x129xf32> to vector<4x128xf32>
    %309 = vector.extract_strided_slice %307 {offsets = [0, 128], sizes = [4, 1], strides = [1, 1]} : vector<4x129xf32> to vector<4x1xf32>
    %cst_87 = arith.constant 1.000000e+00 : f32
    %310 = vector.broadcast %cst_87 : f32 to vector<4x1xf32>
    %311 = arith.maximumf %309, %310 : vector<4x1xf32>
    %312 = vector.broadcast %311 : vector<4x1xf32> to vector<4x128xf32>
    %313 = arith.divf %308, %312 : vector<4x128xf32>
    %cst_88 = arith.constant 0.000000e+00 : f32
    %314 = vector.broadcast %cst_88 : f32 to vector<4x1xf32>
    %315 = arith.cmpf ogt, %309, %314 : vector<4x1xf32>
    %316 = vector.shape_cast %315 : vector<4x1xi1> to vector<4x1xi1>
    %317 = vector.broadcast %316 : vector<4x1xi1> to vector<4x128xi1>
    %318 = arith.select %317, %313, %279 : vector<4x128xi1>, vector<4x128xf32>
    %c7_i32 = arith.constant 7 : i32
    %319 = arith.mulf %318, %318 : vector<4x128xf32>
    %cst_89 = arith.constant dense<0.000000e+00> : vector<4xf32>
    %320 = vector.multi_reduction <add>, %319, %cst_89 [1] : vector<4x128xf32> to vector<4xf32>
    %321 = vector.shape_cast %320 : vector<4xf32> to vector<4x1xf32>
    %cst_90 = arith.constant -2.000000e+00 : f32
    %322 = vector.broadcast %cst_90 : f32 to vector<4x128xf32>
    %323 = arith.mulf %322, %318 : vector<4x128xf32>
    %324 = tpu.concatenate %323, %321 in 1 : vector<4x128xf32>, vector<4x1xf32> -> vector<4x129xf32>
    %cst_91 = arith.constant dense<0.000000e+00> : vector<8x4xf32>
    %325 = tpu.matmul %43, %324, %cst_91 {dimension_numbers = #tpu.dot_dimension_numbers<[1], [1], [0], [0], [0, 0, 1, 0], [], []>} : vector<8x129xf32>, vector<4x129xf32>, vector<8x4xf32> -> vector<8x4xf32>
    %326 = vector.extract_strided_slice %325 {offsets = [0, 0], sizes = [8, 1], strides = [1, 1]} : vector<8x4xf32> to vector<8x1xf32>
    %c0_i32_92 = arith.constant 0 : i32
    %327 = vector.broadcast %c0_i32_92 : i32 to vector<8x1xi32>
    %328 = vector.extract_strided_slice %325 {offsets = [0, 1], sizes = [8, 1], strides = [1, 1]} : vector<8x4xf32> to vector<8x1xf32>
    %329 = arith.cmpf olt, %328, %326 : vector<8x1xf32>
    %330 = arith.select %329, %328, %326 : vector<8x1xi1>, vector<8x1xf32>
    %c1_i32_93 = arith.constant 1 : i32
    %331 = vector.broadcast %c1_i32_93 : i32 to vector<8x1xi32>
    %332 = arith.select %329, %331, %327 : vector<8x1xi1>, vector<8x1xi32>
    %333 = vector.extract_strided_slice %325 {offsets = [0, 2], sizes = [8, 1], strides = [1, 1]} : vector<8x4xf32> to vector<8x1xf32>
    %334 = arith.cmpf olt, %333, %330 : vector<8x1xf32>
    %335 = arith.select %334, %333, %330 : vector<8x1xi1>, vector<8x1xf32>
    %c2_i32_94 = arith.constant 2 : i32
    %336 = vector.broadcast %c2_i32_94 : i32 to vector<8x1xi32>
    %337 = arith.select %334, %336, %332 : vector<8x1xi1>, vector<8x1xi32>
    %338 = vector.extract_strided_slice %325 {offsets = [0, 3], sizes = [8, 1], strides = [1, 1]} : vector<8x4xf32> to vector<8x1xf32>
    %339 = arith.cmpf olt, %338, %335 : vector<8x1xf32>
    %c3_i32_95 = arith.constant 3 : i32
    %340 = vector.broadcast %c3_i32_95 : i32 to vector<8x1xi32>
    %341 = arith.select %339, %340, %337 : vector<8x1xi1>, vector<8x1xi32>
    %342 = vector.broadcast %341 : vector<8x1xi32> to vector<8x4xi32>
    %343 = arith.cmpi eq, %342, %44 : vector<8x4xi32>
    %344 = arith.extui %343 : vector<8x4xi1> to vector<8x4xi32>
    %345 = arith.sitofp %344 : vector<8x4xi32> to vector<8x4xf32>
    %cst_96 = arith.constant dense<0.000000e+00> : vector<4x129xf32>
    %346 = tpu.matmul %345, %43, %cst_96 {dimension_numbers = #tpu.dot_dimension_numbers<[0], [0], [1], [1], [0, 1, 1, 1], [], []>} : vector<8x4xf32>, vector<8x129xf32>, vector<4x129xf32> -> vector<4x129xf32>
    %347 = vector.extract_strided_slice %346 {offsets = [0, 0], sizes = [4, 128], strides = [1, 1]} : vector<4x129xf32> to vector<4x128xf32>
    %348 = vector.extract_strided_slice %346 {offsets = [0, 128], sizes = [4, 1], strides = [1, 1]} : vector<4x129xf32> to vector<4x1xf32>
    %cst_97 = arith.constant 1.000000e+00 : f32
    %349 = vector.broadcast %cst_97 : f32 to vector<4x1xf32>
    %350 = arith.maximumf %348, %349 : vector<4x1xf32>
    %351 = vector.broadcast %350 : vector<4x1xf32> to vector<4x128xf32>
    %352 = arith.divf %347, %351 : vector<4x128xf32>
    %cst_98 = arith.constant 0.000000e+00 : f32
    %353 = vector.broadcast %cst_98 : f32 to vector<4x1xf32>
    %354 = arith.cmpf ogt, %348, %353 : vector<4x1xf32>
    %355 = vector.shape_cast %354 : vector<4x1xi1> to vector<4x1xi1>
    %356 = vector.broadcast %355 : vector<4x1xi1> to vector<4x128xi1>
    %357 = arith.select %356, %352, %318 : vector<4x128xi1>, vector<4x128xf32>
    %c8_i32_99 = arith.constant 8 : i32
    %358 = arith.mulf %357, %357 : vector<4x128xf32>
    %cst_100 = arith.constant dense<0.000000e+00> : vector<4xf32>
    %359 = vector.multi_reduction <add>, %358, %cst_100 [1] : vector<4x128xf32> to vector<4xf32>
    %360 = vector.shape_cast %359 : vector<4xf32> to vector<4x1xf32>
    %cst_101 = arith.constant -2.000000e+00 : f32
    %361 = vector.broadcast %cst_101 : f32 to vector<4x128xf32>
    %362 = arith.mulf %361, %357 : vector<4x128xf32>
    %363 = tpu.concatenate %362, %360 in 1 : vector<4x128xf32>, vector<4x1xf32> -> vector<4x129xf32>
    %cst_102 = arith.constant dense<0.000000e+00> : vector<8x4xf32>
    %364 = tpu.matmul %43, %363, %cst_102 {dimension_numbers = #tpu.dot_dimension_numbers<[1], [1], [0], [0], [0, 0, 1, 0], [], []>} : vector<8x129xf32>, vector<4x129xf32>, vector<8x4xf32> -> vector<8x4xf32>
    %365 = vector.extract_strided_slice %364 {offsets = [0, 0], sizes = [8, 1], strides = [1, 1]} : vector<8x4xf32> to vector<8x1xf32>
    %c0_i32_103 = arith.constant 0 : i32
    %366 = vector.broadcast %c0_i32_103 : i32 to vector<8x1xi32>
    %367 = vector.extract_strided_slice %364 {offsets = [0, 1], sizes = [8, 1], strides = [1, 1]} : vector<8x4xf32> to vector<8x1xf32>
    %368 = arith.cmpf olt, %367, %365 : vector<8x1xf32>
    %369 = arith.select %368, %367, %365 : vector<8x1xi1>, vector<8x1xf32>
    %c1_i32_104 = arith.constant 1 : i32
    %370 = vector.broadcast %c1_i32_104 : i32 to vector<8x1xi32>
    %371 = arith.select %368, %370, %366 : vector<8x1xi1>, vector<8x1xi32>
    %372 = vector.extract_strided_slice %364 {offsets = [0, 2], sizes = [8, 1], strides = [1, 1]} : vector<8x4xf32> to vector<8x1xf32>
    %373 = arith.cmpf olt, %372, %369 : vector<8x1xf32>
    %374 = arith.select %373, %372, %369 : vector<8x1xi1>, vector<8x1xf32>
    %c2_i32_105 = arith.constant 2 : i32
    %375 = vector.broadcast %c2_i32_105 : i32 to vector<8x1xi32>
    %376 = arith.select %373, %375, %371 : vector<8x1xi1>, vector<8x1xi32>
    %377 = vector.extract_strided_slice %364 {offsets = [0, 3], sizes = [8, 1], strides = [1, 1]} : vector<8x4xf32> to vector<8x1xf32>
    %378 = arith.cmpf olt, %377, %374 : vector<8x1xf32>
    %c3_i32_106 = arith.constant 3 : i32
    %379 = vector.broadcast %c3_i32_106 : i32 to vector<8x1xi32>
    %380 = arith.select %378, %379, %376 : vector<8x1xi1>, vector<8x1xi32>
    %381 = vector.broadcast %380 : vector<8x1xi32> to vector<8x4xi32>
    %382 = arith.cmpi eq, %381, %44 : vector<8x4xi32>
    %383 = arith.extui %382 : vector<8x4xi1> to vector<8x4xi32>
    %384 = arith.sitofp %383 : vector<8x4xi32> to vector<8x4xf32>
    %cst_107 = arith.constant dense<0.000000e+00> : vector<4x129xf32>
    %385 = tpu.matmul %384, %43, %cst_107 {dimension_numbers = #tpu.dot_dimension_numbers<[0], [0], [1], [1], [0, 1, 1, 1], [], []>} : vector<8x4xf32>, vector<8x129xf32>, vector<4x129xf32> -> vector<4x129xf32>
    %386 = vector.extract_strided_slice %385 {offsets = [0, 0], sizes = [4, 128], strides = [1, 1]} : vector<4x129xf32> to vector<4x128xf32>
    %387 = vector.extract_strided_slice %385 {offsets = [0, 128], sizes = [4, 1], strides = [1, 1]} : vector<4x129xf32> to vector<4x1xf32>
    %cst_108 = arith.constant 1.000000e+00 : f32
    %388 = vector.broadcast %cst_108 : f32 to vector<4x1xf32>
    %389 = arith.maximumf %387, %388 : vector<4x1xf32>
    %390 = vector.broadcast %389 : vector<4x1xf32> to vector<4x128xf32>
    %391 = arith.divf %386, %390 : vector<4x128xf32>
    %cst_109 = arith.constant 0.000000e+00 : f32
    %392 = vector.broadcast %cst_109 : f32 to vector<4x1xf32>
    %393 = arith.cmpf ogt, %387, %392 : vector<4x1xf32>
    %394 = vector.shape_cast %393 : vector<4x1xi1> to vector<4x1xi1>
    %395 = vector.broadcast %394 : vector<4x1xi1> to vector<4x128xi1>
    %396 = arith.select %395, %391, %357 : vector<4x128xi1>, vector<4x128xf32>
    %c9_i32 = arith.constant 9 : i32
    %397 = arith.mulf %396, %396 : vector<4x128xf32>
    %cst_110 = arith.constant dense<0.000000e+00> : vector<4xf32>
    %398 = vector.multi_reduction <add>, %397, %cst_110 [1] : vector<4x128xf32> to vector<4xf32>
    %399 = vector.shape_cast %398 : vector<4xf32> to vector<4x1xf32>
    %cst_111 = arith.constant -2.000000e+00 : f32
    %400 = vector.broadcast %cst_111 : f32 to vector<4x128xf32>
    %401 = arith.mulf %400, %396 : vector<4x128xf32>
    %402 = tpu.concatenate %401, %399 in 1 : vector<4x128xf32>, vector<4x1xf32> -> vector<4x129xf32>
    %cst_112 = arith.constant dense<0.000000e+00> : vector<8x4xf32>
    %403 = tpu.matmul %43, %402, %cst_112 {dimension_numbers = #tpu.dot_dimension_numbers<[1], [1], [0], [0], [0, 0, 1, 0], [], []>} : vector<8x129xf32>, vector<4x129xf32>, vector<8x4xf32> -> vector<8x4xf32>
    %404 = vector.extract_strided_slice %403 {offsets = [0, 0], sizes = [8, 1], strides = [1, 1]} : vector<8x4xf32> to vector<8x1xf32>
    %c0_i32_113 = arith.constant 0 : i32
    %405 = vector.broadcast %c0_i32_113 : i32 to vector<8x1xi32>
    %406 = vector.extract_strided_slice %403 {offsets = [0, 1], sizes = [8, 1], strides = [1, 1]} : vector<8x4xf32> to vector<8x1xf32>
    %407 = arith.cmpf olt, %406, %404 : vector<8x1xf32>
    %408 = arith.select %407, %406, %404 : vector<8x1xi1>, vector<8x1xf32>
    %c1_i32_114 = arith.constant 1 : i32
    %409 = vector.broadcast %c1_i32_114 : i32 to vector<8x1xi32>
    %410 = arith.select %407, %409, %405 : vector<8x1xi1>, vector<8x1xi32>
    %411 = vector.extract_strided_slice %403 {offsets = [0, 2], sizes = [8, 1], strides = [1, 1]} : vector<8x4xf32> to vector<8x1xf32>
    %412 = arith.cmpf olt, %411, %408 : vector<8x1xf32>
    %413 = arith.select %412, %411, %408 : vector<8x1xi1>, vector<8x1xf32>
    %c2_i32_115 = arith.constant 2 : i32
    %414 = vector.broadcast %c2_i32_115 : i32 to vector<8x1xi32>
    %415 = arith.select %412, %414, %410 : vector<8x1xi1>, vector<8x1xi32>
    %416 = vector.extract_strided_slice %403 {offsets = [0, 3], sizes = [8, 1], strides = [1, 1]} : vector<8x4xf32> to vector<8x1xf32>
    %417 = arith.cmpf olt, %416, %413 : vector<8x1xf32>
    %c3_i32_116 = arith.constant 3 : i32
    %418 = vector.broadcast %c3_i32_116 : i32 to vector<8x1xi32>
    %419 = arith.select %417, %418, %415 : vector<8x1xi1>, vector<8x1xi32>
    %420 = vector.broadcast %419 : vector<8x1xi32> to vector<8x4xi32>
    %421 = arith.cmpi eq, %420, %44 : vector<8x4xi32>
    %422 = arith.extui %421 : vector<8x4xi1> to vector<8x4xi32>
    %423 = arith.sitofp %422 : vector<8x4xi32> to vector<8x4xf32>
    %cst_117 = arith.constant dense<0.000000e+00> : vector<4x129xf32>
    %424 = tpu.matmul %423, %43, %cst_117 {dimension_numbers = #tpu.dot_dimension_numbers<[0], [0], [1], [1], [0, 1, 1, 1], [], []>} : vector<8x4xf32>, vector<8x129xf32>, vector<4x129xf32> -> vector<4x129xf32>
    %425 = vector.extract_strided_slice %424 {offsets = [0, 0], sizes = [4, 128], strides = [1, 1]} : vector<4x129xf32> to vector<4x128xf32>
    %426 = vector.extract_strided_slice %424 {offsets = [0, 128], sizes = [4, 1], strides = [1, 1]} : vector<4x129xf32> to vector<4x1xf32>
    %cst_118 = arith.constant 1.000000e+00 : f32
    %427 = vector.broadcast %cst_118 : f32 to vector<4x1xf32>
    %428 = arith.maximumf %426, %427 : vector<4x1xf32>
    %429 = vector.broadcast %428 : vector<4x1xf32> to vector<4x128xf32>
    %430 = arith.divf %425, %429 : vector<4x128xf32>
    %cst_119 = arith.constant 0.000000e+00 : f32
    %431 = vector.broadcast %cst_119 : f32 to vector<4x1xf32>
    %432 = arith.cmpf ogt, %426, %431 : vector<4x1xf32>
    %433 = vector.shape_cast %432 : vector<4x1xi1> to vector<4x1xi1>
    %434 = vector.broadcast %433 : vector<4x1xi1> to vector<4x128xi1>
    %435 = arith.select %434, %430, %396 : vector<4x128xi1>, vector<4x128xf32>
    %436 = arith.mulf %435, %435 : vector<4x128xf32>
    %cst_120 = arith.constant dense<0.000000e+00> : vector<4xf32>
    %437 = vector.multi_reduction <add>, %436, %cst_120 [1] : vector<4x128xf32> to vector<4xf32>
    %438 = vector.shape_cast %437 : vector<4xf32> to vector<4x1xf32>
    %cst_121 = arith.constant -2.000000e+00 : f32
    %439 = vector.broadcast %cst_121 : f32 to vector<4x128xf32>
    %440 = arith.mulf %439, %435 : vector<4x128xf32>
    %441 = tpu.concatenate %440, %438 in 1 : vector<4x128xf32>, vector<4x1xf32> -> vector<4x129xf32>
    %cst_122 = arith.constant dense<0.000000e+00> : vector<8x4xf32>
    %442 = tpu.matmul %43, %441, %cst_122 {dimension_numbers = #tpu.dot_dimension_numbers<[1], [1], [0], [0], [0, 0, 1, 0], [], []>} : vector<8x129xf32>, vector<4x129xf32>, vector<8x4xf32> -> vector<8x4xf32>
    %443 = vector.extract_strided_slice %442 {offsets = [0, 0], sizes = [8, 1], strides = [1, 1]} : vector<8x4xf32> to vector<8x1xf32>
    %c0_i32_123 = arith.constant 0 : i32
    %444 = vector.broadcast %c0_i32_123 : i32 to vector<8x1xi32>
    %445 = vector.extract_strided_slice %442 {offsets = [0, 1], sizes = [8, 1], strides = [1, 1]} : vector<8x4xf32> to vector<8x1xf32>
    %446 = arith.cmpf olt, %445, %443 : vector<8x1xf32>
    %447 = arith.select %446, %445, %443 : vector<8x1xi1>, vector<8x1xf32>
    %c1_i32_124 = arith.constant 1 : i32
    %448 = vector.broadcast %c1_i32_124 : i32 to vector<8x1xi32>
    %449 = arith.select %446, %448, %444 : vector<8x1xi1>, vector<8x1xi32>
    %450 = vector.extract_strided_slice %442 {offsets = [0, 2], sizes = [8, 1], strides = [1, 1]} : vector<8x4xf32> to vector<8x1xf32>
    %451 = arith.cmpf olt, %450, %447 : vector<8x1xf32>
    %452 = arith.select %451, %450, %447 : vector<8x1xi1>, vector<8x1xf32>
    %c2_i32_125 = arith.constant 2 : i32
    %453 = vector.broadcast %c2_i32_125 : i32 to vector<8x1xi32>
    %454 = arith.select %451, %453, %449 : vector<8x1xi1>, vector<8x1xi32>
    %455 = vector.extract_strided_slice %442 {offsets = [0, 3], sizes = [8, 1], strides = [1, 1]} : vector<8x4xf32> to vector<8x1xf32>
    %456 = arith.cmpf olt, %455, %452 : vector<8x1xf32>
    %c3_i32_126 = arith.constant 3 : i32
    %457 = vector.broadcast %c3_i32_126 : i32 to vector<8x1xi32>
    %458 = arith.select %456, %457, %454 : vector<8x1xi1>, vector<8x1xi32>
    %cst_127 = arith.constant dense<0.000000e+00> : vector<16x128xf32>
    %459 = tpu.matmul %40, %31, %cst_127 {dimension_numbers = #tpu.dot_dimension_numbers<[1], [0], [0], [1], [0, 0, 1, 1], [], []>} : vector<16x128xf32>, vector<128x128xf32>, vector<16x128xf32> -> vector<16x128xf32>
    %460 = vector.broadcast %32 : vector<1x128xf32> to vector<16x128xf32>
    %461 = arith.addf %459, %460 : vector<16x128xf32>
    %cst_128 = arith.constant dense<0xFF800000> : vector<16xf32>
    %462 = vector.multi_reduction <maximumf>, %461, %cst_128 [1] : vector<16x128xf32> to vector<16xf32>
    %463 = vector.shape_cast %462 : vector<16xf32> to vector<16x1xf32>
    %464 = vector.broadcast %463 : vector<16x1xf32> to vector<16x128xf32>
    %465 = arith.subf %461, %464 : vector<16x128xf32>
    %466 = math.exp %465 : vector<16x128xf32>
    %cst_129 = arith.constant dense<0.000000e+00> : vector<16xf32>
    %467 = vector.multi_reduction <add>, %466, %cst_129 [1] : vector<16x128xf32> to vector<16xf32>
    %468 = vector.shape_cast %467 : vector<16xf32> to vector<16x1xf32>
    %469 = tpu.reciprocal %468 {approx = true} : vector<16x1xf32> -> vector<16x1xf32>
    %470 = vector.broadcast %469 : vector<16x1xf32> to vector<16x128xf32>
    %471 = arith.mulf %466, %470 : vector<16x128xf32>
    %c0_130 = arith.constant 0 : index
    %c0_131 = arith.constant 0 : index
    %472 = vector.load %arg6[%c0_130, %c0_131] : memref<16x128xf32, #tpu.memory_space<vmem>>, vector<16x128xf32>
    tpu.vector_store %arg6[%c0_130, %c0_131], %40 {strides = array<i32>} : memref<16x128xf32, #tpu.memory_space<vmem>>, vector<16x128xf32>,
    %c0_132 = arith.constant 0 : index
    %c0_133 = arith.constant 0 : index
    %473 = vector.load %arg7[%c0_132, %c0_133] : memref<16x128xf32, #tpu.memory_space<vmem>>, vector<16x128xf32>
    tpu.vector_store %arg7[%c0_132, %c0_133], %471 {strides = array<i32>} : memref<16x128xf32, #tpu.memory_space<vmem>>, vector<16x128xf32>,
    %c0_134 = arith.constant 0 : index
    %c0_135 = arith.constant 0 : index
    %474 = vector.load %arg8[%c0_134, %c0_135] : memref<8x1xi32, #tpu.memory_space<vmem>>, vector<8x1xi32>
    tpu.vector_store %arg8[%c0_134, %c0_135], %458 {strides = array<i32>} : memref<8x1xi32, #tpu.memory_space<vmem>>, vector<8x1xi32>,
    %c0_136 = arith.constant 0 : index
    %c0_137 = arith.constant 0 : index
    %475 = vector.load %arg9[%c0_136, %c0_137] : memref<4x128xf32, #tpu.memory_space<vmem>>, vector<4x128xf32>
    tpu.vector_store %arg9[%c0_136, %c0_137], %435 {strides = array<i32>} : memref<4x128xf32, #tpu.memory_space<vmem>>, vector<4x128xf32>,
    return
  }
}

</mosaic_0001>

<llo_original>
// kernel: model_forward.1
$region0: #{model_forward.1}
  #allocation0 [shape = 'u32[]', space=smem, size = 0x4, offset = 0x4, fixed_abs, tag = 'smem constant byte address 0x4 - core index']
  #allocation1 [shape = 'u32[72,128]{1,0:T(1,128)}', space=vmem, size = 0x9000, scoped, tag = 'internal scratch']
  %s0 = inlined_call_operand.vmem [shape: f32[16,66], index: 0, kind: input, shape index: {}]
  %s1 = inlined_call_operand.hbm [shape: f32[66,1024], index: 1, kind: input, shape index: {}]
  %s2 = inlined_call_operand.hbm [shape: f32[2048,128], index: 2, kind: input, shape index: {}]
  %s3 = inlined_call_operand.vmem [shape: f32[2,128], index: 3, kind: input, shape index: {}]
  %s4 = inlined_call_operand.hbm [shape: f32[128,128], index: 4, kind: input, shape index: {}]
  %s5 = inlined_call_operand.vmem [shape: f32[1,128], index: 5, kind: input, shape index: {}]
  %s6 = inlined_call_operand.vmem [shape: f32[16,128], index: 6, kind: output, shape index: {0}]
  %s7 = inlined_call_operand.vmem [shape: f32[16,128], index: 7, kind: output, shape index: {1}]
  %s8 = inlined_call_operand.vmem [shape: s32[8,1], index: 8, kind: output, shape index: {2}]
  %s9 = inlined_call_operand.hbm [shape: f32[4,128], index: 9, kind: output, shape index: {3}]
  %10 = xla_tuple %s6, %s7, %s8, %s9
  %s11 = sld [smem:[#allocation0]]
  $region70: #{model_forward.1} parent=0
    _
  %s13 = ssub.s32 1, %s11
  %s14 = scalar_select 0, %s13, %s11
  $region1: #{model_forward.1} parent=0
    #allocation2 [shape = 'u8[294912]{0}', space=vmem, size = 0x48000, scoped, tag = 'input window, operand 1, single buffered']
    #allocation3 [shape = 's32[1]{0}', space=sflag, size = 0x4, scoped, tag = 'scoped memory for model_forward.1']
    #allocation4 [shape = 's32[1]{0}', space=sflag, size = 0x4, scoped, tag = 'scoped memory for model_forward.1']
    #allocation5 [shape = 'u8[1048576]{0}', space=vmem, size = 0x100000, scoped, tag = 'input window, operand 2, single buffered']
    #allocation6 [shape = 's32[1]{0}', space=sflag, size = 0x4, scoped, tag = 'scoped memory for model_forward.1']
    #allocation7 [shape = 'u8[65536]{0}', space=vmem, size = 0x10000, scoped, tag = 'input window, operand 4, single buffered']
    #allocation8 [shape = 'u8[2048]{0}', space=vmem, size = 0x800, scoped, tag = 'output window, operand 3, single buffered']
    %15 = vsyncpa [#allocation3], 0
    %16 = vsyncpa [#allocation6], 0
    %17 = vsyncpa [#allocation4], 0
    // Predicated region
    $region2: #{model_forward.1} parent=1 // pred_check
      _
    $region3: #{model_forward.1} parent=1 // pred_check_branch
      %19 = sbr.rel (0) target = $region5
    $region4: #{model_forward.1} parent=1 // pred_region
      _
    $region5: #{model_forward.1} parent=1 // pred_fallthru
      _
    // Predicated region
    $region6: #{model_forward.1} parent=1 // pred_check
      _
    $region7: #{model_forward.1} parent=1 // pred_check_branch
      %21 = sbr.rel (0) target = $region9
    $region8: #{model_forward.1} parent=1 // pred_region
      %23 = vsyncadd [#allocation3], 0
      %s24 = sshll.u32 %s1, 4
      %s25 = int_to_ptr.hbm [resolvable:$true] %s24
      %s26 = sshll.u32 [#allocation2], 4
      %s27 = int_to_ptr.vmem [resolvable:$true] %s26
      %32 = dma.hbm_to_vmem [thread:$0]  %s25, 9216, %s27, [#allocation3], 1024, 1024, 64
    $region9: #{model_forward.1} parent=1 // pred_fallthru
      _
    // Predicated region
    $region10: #{model_forward.1} parent=1 // pred_check
      _
    $region11: #{model_forward.1} parent=1 // pred_check_branch
      %34 = sbr.rel (0) target = $region13
    $region12: #{model_forward.1} parent=1 // pred_region
      %36 = vsyncadd [#allocation6], 0
      %s37 = sshll.u32 %s2, 4
      %s38 = int_to_ptr.hbm [resolvable:$true] %s37
      %s39 = sshll.u32 [#allocation5], 4
      %s40 = int_to_ptr.vmem [resolvable:$true] %s39
      %45 = dma.hbm_to_vmem [thread:$0]  %s38, 32768, %s40, [#allocation6], 128, 128, 8
    $region13: #{model_forward.1} parent=1 // pred_fallthru
      _
    // Predicated region
    $region14: #{model_forward.1} parent=1 // pred_check
      _
    $region15: #{model_forward.1} parent=1 // pred_check_branch
      %47 = sbr.rel (0) target = $region17
    $region16: #{model_forward.1} parent=1 // pred_region
      _
    $region17: #{model_forward.1} parent=1 // pred_fallthru
      _
    // Predicated region
    $region18: #{model_forward.1} parent=1 // pred_check
      _
    $region19: #{model_forward.1} parent=1 // pred_check_branch
      %49 = sbr.rel (0) target = $region21
    $region20: #{model_forward.1} parent=1 // pred_region
      %51 = vsyncadd [#allocation6], 0
      %s52 = sshll.u32 %s4, 4
      %s53 = int_to_ptr.hbm [resolvable:$true] %s52
      %s54 = sshll.u32 [#allocation7], 4
      %s55 = int_to_ptr.vmem [resolvable:$true] %s54
      %60 = dma.hbm_to_vmem [thread:$0]  %s53, 2048, %s55, [#allocation6], 128, 128, 8
    $region21: #{model_forward.1} parent=1 // pred_fallthru
      _
    // Predicated region
    $region22: #{model_forward.1} parent=1 // pred_check
      _
    $region23: #{model_forward.1} parent=1 // pred_check_branch
      %62 = sbr.rel (0) target = $region25
    $region24: #{model_forward.1} parent=1 // pred_region
      _
    $region25: #{model_forward.1} parent=1 // pred_fallthru
      _
    // Predicated region
    $region26: #{model_forward.1} parent=1 // pred_check
      _
    $region27: #{model_forward.1} parent=1 // pred_check_branch
      %64 = sbr.rel (0) target = $region29
    $region28: #{model_forward.1} parent=1 // pred_region
      %66 = dma.done [#allocation3], 9216
    $region29: #{model_forward.1} parent=1 // pred_fallthru
      _
    // Predicated region
    $region30: #{model_forward.1} parent=1 // pred_check
      _
    $region31: #{model_forward.1} parent=1 // pred_check_branch
      %68 = sbr.rel (0) target = $region33
    $region32: #{model_forward.1} parent=1 // pred_region
      %70 = dma.done [#allocation6], 32768
    $region33: #{model_forward.1} parent=1 // pred_fallthru
      _
    // Predicated region
    $region34: #{model_forward.1} parent=1 // pred_check
      _
    $region35: #{model_forward.1} parent=1 // pred_check_branch
      %72 = sbr.rel (0) target = $region37
    $region36: #{model_forward.1} parent=1 // pred_region
      %74 = dma.done [#allocation6], 2048
    $region37: #{model_forward.1} parent=1 // pred_fallthru
      _
    %v75 = vld [vmem:[%s0] sm:$0xff]
    %v76 = vld [vmem:[%s0 + $0x8] sm:$0xff]
    %v77 = vld [vmem:[#allocation2] sm:$0xff]
    %v78 = vld [vmem:[#allocation2 + $0x8] sm:$0xff]
    %v79 = vld [vmem:[#allocation2 + $0x10] sm:$0xff]
    %v80 = vld [vmem:[#allocation2 + $0x18] sm:$0xff]
    %v81 = vld [vmem:[#allocation2 + $0x20] sm:$0xff]
    %v82 = vld [vmem:[#allocation2 + $0x28] sm:$0xff]
    %v83 = vld [vmem:[#allocation2 + $0x30] sm:$0xff]
    %v84 = vld [vmem:[#allocation2 + $0x38] sm:$0xff]
    %v85 = vld [vmem:[#allocation2 + $0x40] sm:$0xff]
    %v86 = vld [vmem:[#allocation2 + $0x48] sm:$0xff]
    %v87 = vld [vmem:[#allocation2 + $0x50] sm:$0xff]
    %v88 = vld [vmem:[#allocation2 + $0x58] sm:$0xff]
    %v89 = vld [vmem:[#allocation2 + $0x60] sm:$0xff]
    %v90 = vld [vmem:[#allocation2 + $0x68] sm:$0xff]
    %v91 = vld [vmem:[#allocation2 + $0x70] sm:$0xff]
    %v92 = vld [vmem:[#allocation2 + $0x78] sm:$0xff]
    %v93 = vld [vmem:[#allocation2 + $0x80] sm:$0xff]
    %v94 = vld [vmem:[#allocation2 + $0x88] sm:$0xff]
    %v95 = vld [vmem:[#allocation2 + $0x90] sm:$0xff]
    %v96 = vld [vmem:[#allocation2 + $0x98] sm:$0xff]
    %v97 = vld [vmem:[#allocation2 + $0xa0] sm:$0xff]
    %v98 = vld [vmem:[#allocation2 + $0xa8] sm:$0xff]
    %v99 = vld [vmem:[#allocation2 + $0xb0] sm:$0xff]
    %v100 = vld [vmem:[#allocation2 + $0xb8] sm:$0xff]
    %v101 = vld [vmem:[#allocation2 + $0xc0] sm:$0xff]
    %v102 = vld [vmem:[#allocation2 + $0xc8] sm:$0xff]
    %v103 = vld [vmem:[#allocation2 + $0xd0] sm:$0xff]
    %v104 = vld [vmem:[#allocation2 + $0xd8] sm:$0xff]
    %v105 = vld [vmem:[#allocation2 + $0xe0] sm:$0xff]
    %v106 = vld [vmem:[#allocation2 + $0xe8] sm:$0xff]
    %v107 = vld [vmem:[#allocation2 + $0xf0] sm:$0xff]
    %v108 = vld [vmem:[#allocation2 + $0xf8] sm:$0xff]
    %v109 = vld [vmem:[#allocation2 + $0x100] sm:$0xff]
    %v110 = vld [vmem:[#allocation2 + $0x108] sm:$0xff]
    %v111 = vld [vmem:[#allocation2 + $0x110] sm:$0xff]
    %v112 = vld [vmem:[#allocation2 + $0x118] sm:$0xff]
    %v113 = vld [vmem:[#allocation2 + $0x120] sm:$0xff]
    %v114 = vld [vmem:[#allocation2 + $0x128] sm:$0xff]
    %v115 = vld [vmem:[#allocation2 + $0x130] sm:$0xff]
    %v116 = vld [vmem:[#allocation2 + $0x138] sm:$0xff]
    %v117 = vld [vmem:[#allocation2 + $0x140] sm:$0xff]
    %v118 = vld [vmem:[#allocation2 + $0x148] sm:$0xff]
    %v119 = vld [vmem:[#allocation2 + $0x150] sm:$0xff]
    %v120 = vld [vmem:[#allocation2 + $0x158] sm:$0xff]
    %v121 = vld [vmem:[#allocation2 + $0x160] sm:$0xff]
    %v122 = vld [vmem:[#allocation2 + $0x168] sm:$0xff]
    %v123 = vld [vmem:[#allocation2 + $0x170] sm:$0xff]
    %v124 = vld [vmem:[#allocation2 + $0x178] sm:$0xff]
    %v125 = vld [vmem:[#allocation2 + $0x180] sm:$0xff]
    %v126 = vld [vmem:[#allocation2 + $0x188] sm:$0xff]
    %v127 = vld [vmem:[#allocation2 + $0x190] sm:$0xff]
    %v128 = vld [vmem:[#allocation2 + $0x198] sm:$0xff]
    %v129 = vld [vmem:[#allocation2 + $0x1a0] sm:$0xff]
    %v130 = vld [vmem:[#allocation2 + $0x1a8] sm:$0xff]
    %v131 = vld [vmem:[#allocation2 + $0x1b0] sm:$0xff]
    %v132 = vld [vmem:[#allocation2 + $0x1b8] sm:$0xff]
    %v133 = vld [vmem:[#allocation2 + $0x1c0] sm:$0xff]
    %v134 = vld [vmem:[#allocation2 + $0x1c8] sm:$0xff]
    %v135 = vld [vmem:[#allocation2 + $0x1d0] sm:$0xff]
    %v136 = vld [vmem:[#allocation2 + $0x1d8] sm:$0xff]
    %v137 = vld [vmem:[#allocation2 + $0x1e0] sm:$0xff]
    %v138 = vld [vmem:[#allocation2 + $0x1e8] sm:$0xff]
    %v139 = vld [vmem:[#allocation2 + $0x1f0] sm:$0xff]
    %v140 = vld [vmem:[#allocation2 + $0x1f8] sm:$0xff]
    %v141 = vld [vmem:[#allocation2 + $0x200] sm:$0x3]
    %v142 = vld [vmem:[#allocation2 + $0x208] sm:$0x3]
    %v143 = vld [vmem:[#allocation2 + $0x210] sm:$0x3]
    %v144 = vld [vmem:[#allocation2 + $0x218] sm:$0x3]
    %v145 = vld [vmem:[#allocation2 + $0x220] sm:$0x3]
    %v146 = vld [vmem:[#allocation2 + $0x228] sm:$0x3]
    %v147 = vld [vmem:[#allocation2 + $0x230] sm:$0x3]
    %v148 = vld [vmem:[#allocation2 + $0x238] sm:$0x3]
    %vm149 = vcmask 539648
    %v151 = vsel %vm149, %v75, 0
    %v154 = vsel %vm149, %v76, 0
    %vm156 = vcmask 1041408
    %v158 = vsel %vm156, %v141, 0
    %v161 = vsel %vm156, %v142, 0
    %v164 = vsel %vm156, %v143, 0
    %v167 = vsel %vm156, %v144, 0
    %v170 = vsel %vm156, %v145, 0
    %v173 = vsel %vm156, %v146, 0
    %v176 = vsel %vm156, %v147, 0
    %v179 = vsel %vm156, %v148, 0
    %181 = vmatpush.msra.mxu0 0.0
    %182 = vmatpush.msra.mxu0 0.0
    %183 = vmatpush.msra.mxu0 0.0
    %184 = vmatpush.msra.mxu0 0.0
    %185 = vmatpush.msra.mxu0 0.0
    %186 = vmatpush.msra.mxu0 0.0
    %187 = vmatpush.msra.mxu0 0.0
    %188 = vmatpush.msra.mxu0 %v158
    %189 = vmatpush.msra.mxu0 %v133
    %190 = vmatpush.msra.mxu0 %v125
    %191 = vmatpush.msra.mxu0 %v117
    %192 = vmatpush.msra.mxu0 %v109
    %193 = vmatpush.msra.mxu0 %v101
    %194 = vmatpush.msra.mxu0 %v93
    %195 = vmatpush.msra.mxu0 %v85
    %196 = vmatpush.msra.mxu0 %v77
    %197 = vmatmul.f32.gmra.mxu0 %v151
    %v198 = vpop.f32.mrf.mxu0
    %v199 = vadd.f32 0.0, %v198
    %200 = vmatmul.f32.gmra.mxu0 %v154
    %v201 = vpop.f32.mrf.mxu0
    %v202 = vadd.f32 0.0, %v201
    %203 = vdwg.mxu0
    %204 = vmatpush.msra.mxu0 0.0
    %205 = vmatpush.msra.mxu0 0.0
    %206 = vmatpush.msra.mxu0 0.0
    %207 = vmatpush.msra.mxu0 0.0
    %208 = vmatpush.msra.mxu0 0.0
    %209 = vmatpush.msra.mxu0 0.0
    %210 = vmatpush.msra.mxu0 0.0
    %211 = vmatpush.msra.mxu0 %v161
    %212 = vmatpush.msra.mxu0 %v134
    %213 = vmatpush.msra.mxu0 %v126
    %214 = vmatpush.msra.mxu0 %v118
    %215 = vmatpush.msra.mxu0 %v110
    %216 = vmatpush.msra.mxu0 %v102
    %217 = vmatpush.msra.mxu0 %v94
    %218 = vmatpush.msra.mxu0 %v86
    %219 = vmatpush.msra.mxu0 %v78
    %220 = vmatmul.f32.gmra.mxu0 %v151
    %v221 = vpop.f32.mrf.mxu0
    %v222 = vadd.f32 0.0, %v221
    %223 = vmatmul.f32.gmra.mxu0 %v154
    %v224 = vpop.f32.mrf.mxu0
    %v225 = vadd.f32 0.0, %v224
    %226 = vdwg.mxu0
    %227 = vmatpush.msra.mxu0 0.0
    %228 = vmatpush.msra.mxu0 0.0
    %229 = vmatpush.msra.mxu0 0.0
    %230 = vmatpush.msra.mxu0 0.0
    %231 = vmatpush.msra.mxu0 0.0
    %232 = vmatpush.msra.mxu0 0.0
    %233 = vmatpush.msra.mxu0 0.0
    %234 = vmatpush.msra.mxu0 %v164
    %235 = vmatpush.msra.mxu0 %v135
    %236 = vmatpush.msra.mxu0 %v127
    %237 = vmatpush.msra.mxu0 %v119
    %238 = vmatpush.msra.mxu0 %v111
    %239 = vmatpush.msra.mxu0 %v103
    %240 = vmatpush.msra.mxu0 %v95
    %241 = vmatpush.msra.mxu0 %v87
    %242 = vmatpush.msra.mxu0 %v79
    %243 = vmatmul.f32.gmra.mxu0 %v151
    %v244 = vpop.f32.mrf.mxu0
    %v245 = vadd.f32 0.0, %v244
    %246 = vmatmul.f32.gmra.mxu0 %v154
    %v247 = vpop.f32.mrf.mxu0
    %v248 = vadd.f32 0.0, %v247
    %249 = vdwg.mxu0
    %250 = vmatpush.msra.mxu0 0.0
    %251 = vmatpush.msra.mxu0 0.0
    %252 = vmatpush.msra.mxu0 0.0
    %253 = vmatpush.msra.mxu0 0.0
    %254 = vmatpush.msra.mxu0 0.0
    %255 = vmatpush.msra.mxu0 0.0
    %256 = vmatpush.msra.mxu0 0.0
    %257 = vmatpush.msra.mxu0 %v167
    %258 = vmatpush.msra.mxu0 %v136
    %259 = vmatpush.msra.mxu0 %v128
    %260 = vmatpush.msra.mxu0 %v120
    %261 = vmatpush.msra.mxu0 %v112
    %262 = vmatpush.msra.mxu0 %v104
    %263 = vmatpush.msra.mxu0 %v96
    %264 = vmatpush.msra.mxu0 %v88
    %265 = vmatpush.msra.mxu0 %v80
    %266 = vmatmul.f32.gmra.mxu0 %v151
    %v267 = vpop.f32.mrf.mxu0
    %v268 = vadd.f32 0.0, %v267
    %269 = vmatmul.f32.gmra.mxu0 %v154
    %v270 = vpop.f32.mrf.mxu0
    %v271 = vadd.f32 0.0, %v270
    %272 = vdwg.mxu0
    %273 = vmatpush.msra.mxu0 0.0
    %274 = vmatpush.msra.mxu0 0.0
    %275 = vmatpush.msra.mxu0 0.0
    %276 = vmatpush.msra.mxu0 0.0
    %277 = vmatpush.msra.mxu0 0.0
    %278 = vmatpush.msra.mxu0 0.0
    %279 = vmatpush.msra.mxu0 0.0
    %280 = vmatpush.msra.mxu0 %v170
    %281 = vmatpush.msra.mxu0 %v137
    %282 = vmatpush.msra.mxu0 %v129
    %283 = vmatpush.msra.mxu0 %v121
    %284 = vmatpush.msra.mxu0 %v113
    %285 = vmatpush.msra.mxu0 %v105
    %286 = vmatpush.msra.mxu0 %v97
    %287 = vmatpush.msra.mxu0 %v89
    %288 = vmatpush.msra.mxu0 %v81
    %289 = vmatmul.f32.gmra.mxu0 %v151
    %v290 = vpop.f32.mrf.mxu0
    %v291 = vadd.f32 0.0, %v290
    %292 = vmatmul.f32.gmra.mxu0 %v154
    %v293 = vpop.f32.mrf.mxu0
    %v294 = vadd.f32 0.0, %v293
    %295 = vdwg.mxu0
    %296 = vmatpush.msra.mxu0 0.0
    %297 = vmatpush.msra.mxu0 0.0
    %298 = vmatpush.msra.mxu0 0.0
    %299 = vmatpush.msra.mxu0 0.0
    %300 = vmatpush.msra.mxu0 0.0
    %301 = vmatpush.msra.mxu0 0.0
    %302 = vmatpush.msra.mxu0 0.0
    %303 = vmatpush.msra.mxu0 %v173
    %304 = vmatpush.msra.mxu0 %v138
    %305 = vmatpush.msra.mxu0 %v130
    %306 = vmatpush.msra.mxu0 %v122
    %307 = vmatpush.msra.mxu0 %v114
    %308 = vmatpush.msra.mxu0 %v106
    %309 = vmatpush.msra.mxu0 %v98
    %310 = vmatpush.msra.mxu0 %v90
    %311 = vmatpush.msra.mxu0 %v82
    %312 = vmatmul.f32.gmra.mxu0 %v151
    %v313 = vpop.f32.mrf.mxu0
    %v314 = vadd.f32 0.0, %v313
    %315 = vmatmul.f32.gmra.mxu0 %v154
    %v316 = vpop.f32.mrf.mxu0
    %v317 = vadd.f32 0.0, %v316
    %318 = vdwg.mxu0
    %319 = vmatpush.msra.mxu0 0.0
    %320 = vmatpush.msra.mxu0 0.0
    %321 = vmatpush.msra.mxu0 0.0
    %322 = vmatpush.msra.mxu0 0.0
    %323 = vmatpush.msra.mxu0 0.0
    %324 = vmatpush.msra.mxu0 0.0
    %325 = vmatpush.msra.mxu0 0.0
    %326 = vmatpush.msra.mxu0 %v176
    %327 = vmatpush.msra.mxu0 %v139
    %328 = vmatpush.msra.mxu0 %v131
    %329 = vmatpush.msra.mxu0 %v123
    %330 = vmatpush.msra.mxu0 %v115
    %331 = vmatpush.msra.mxu0 %v107
    %332 = vmatpush.msra.mxu0 %v99
    %333 = vmatpush.msra.mxu0 %v91
    %334 = vmatpush.msra.mxu0 %v83
    %335 = vmatmul.f32.gmra.mxu0 %v151
    %v336 = vpop.f32.mrf.mxu0
    %v337 = vadd.f32 0.0, %v336
    %338 = vmatmul.f32.gmra.mxu0 %v154
    %v339 = vpop.f32.mrf.mxu0
    %v340 = vadd.f32 0.0, %v339
    %341 = vdwg.mxu0
    %342 = vmatpush.msra.mxu0 0.0
    %343 = vmatpush.msra.mxu0 0.0
    %344 = vmatpush.msra.mxu0 0.0
    %345 = vmatpush.msra.mxu0 0.0
    %346 = vmatpush.msra.mxu0 0.0
    %347 = vmatpush.msra.mxu0 0.0
    %348 = vmatpush.msra.mxu0 0.0
    %349 = vmatpush.msra.mxu0 %v179
    %350 = vmatpush.msra.mxu0 %v140
    %351 = vmatpush.msra.mxu0 %v132
    %352 = vmatpush.msra.mxu0 %v124
    %353 = vmatpush.msra.mxu0 %v116
    %354 = vmatpush.msra.mxu0 %v108
    %355 = vmatpush.msra.mxu0 %v100
    %356 = vmatpush.msra.mxu0 %v92
    %357 = vmatpush.msra.mxu0 %v84
    %358 = vmatmul.f32.gmra.mxu0 %v151
    %v359 = vpop.f32.mrf.mxu0
    %v360 = vadd.f32 0.0, %v359
    %361 = vmatmul.f32.gmra.mxu0 %v154
    %v362 = vpop.f32.mrf.mxu0
    %v363 = vadd.f32 0.0, %v362
    %364 = vdwg.mxu0
    %v365 = vlaneseq
    %v366 = vshrl.u32 %v365, 7
    %v367 = vadd.s32 %v366, 8
    %vm368 = vcmp.lt.s32.totalorder %v366, 8
    %vm369 = vcmp.lt.s32.totalorder %v367, 8
    %v370 = vsel %vm368, 1, 0
    %v371 = vsel %vm369, 1, 0
    %v372 = vcvt.s32.f32 %v370
    %v373 = vcvt.s32.f32 %v371
    %v374 = vmul.f32 %v199, %v372
    %v375 = vmul.f32 %v222, %v372
    %v376 = vmul.f32 %v245, %v372
    %v377 = vmul.f32 %v268, %v372
    %v378 = vmul.f32 %v291, %v372
    %v379 = vmul.f32 %v314, %v372
    %v380 = vmul.f32 %v337, %v372
    %v381 = vmul.f32 %v360, %v372
    %v382 = vmul.f32 %v202, %v373
    %v383 = vmul.f32 %v225, %v373
    %v384 = vmul.f32 %v248, %v373
    %v385 = vmul.f32 %v271, %v373
    %v386 = vmul.f32 %v294, %v373
    %v387 = vmul.f32 %v317, %v373
    %v388 = vmul.f32 %v340, %v373
    %v389 = vmul.f32 %v363, %v373
    %v390 = vsub.f32 1.0, %v372
    %v391 = vsub.f32 1.0, %v373
    %v392 = vmul.f32 %v199, %v390
    %v393 = vmul.f32 %v222, %v390
    %v394 = vmul.f32 %v245, %v390
    %v395 = vmul.f32 %v268, %v390
    %v396 = vmul.f32 %v291, %v390
    %v397 = vmul.f32 %v314, %v390
    %v398 = vmul.f32 %v337, %v390
    %v399 = vmul.f32 %v360, %v390
    %v400 = vmul.f32 %v202, %v391
    %v401 = vmul.f32 %v225, %v391
    %v402 = vmul.f32 %v248, %v391
    %v403 = vmul.f32 %v271, %v391
    %v404 = vmul.f32 %v294, %v391
    %v405 = vmul.f32 %v317, %v391
    %v406 = vmul.f32 %v340, %v391
    %v407 = vmul.f32 %v363, %v391
    %v408 = vld [vmem:[%s3] sm:$0x1]
    %v409 = vld [vmem:[%s3 + $0x1] sm:$0x1]
    %vm410 = vcmp.eq.s32.totalorder %v370, 1
    %vm411 = vcmp.eq.s32.totalorder %v371, 1
    %v412 = vperm.slane %v408, 0
    %v413 = vperm.slane %v409, 0
    %v414 = vsel %vm410, %v412, %v413
    %v415 = vsel %vm411, %v412, %v413
    %v416 = vld [vmem:[#allocation5] sm:$0xff]
    %v417 = vld [vmem:[#allocation5 + $0x8] sm:$0xff]
    %v418 = vld [vmem:[#allocation5 + $0x10] sm:$0xff]
    %v419 = vld [vmem:[#allocation5 + $0x18] sm:$0xff]
    %v420 = vld [vmem:[#allocation5 + $0x20] sm:$0xff]
    %v421 = vld [vmem:[#allocation5 + $0x28] sm:$0xff]
    %v422 = vld [vmem:[#allocation5 + $0x30] sm:$0xff]
    %v423 = vld [vmem:[#allocation5 + $0x38] sm:$0xff]
    %v424 = vld [vmem:[#allocation5 + $0x40] sm:$0xff]
    %v425 = vld [vmem:[#allocation5 + $0x48] sm:$0xff]
    %v426 = vld [vmem:[#allocation5 + $0x50] sm:$0xff]
    %v427 = vld [vmem:[#allocation5 + $0x58] sm:$0xff]
    %v428 = vld [vmem:[#allocation5 + $0x60] sm:$0xff]
    %v429 = vld [vmem:[#allocation5 + $0x68] sm:$0xff]
    %v430 = vld [vmem:[#allocation5 + $0x70] sm:$0xff]
    %v431 = vld [vmem:[#allocation5 + $0x78] sm:$0xff]
    %v432 = vld [vmem:[#allocation5 + $0x80] sm:$0xff]
    %v433 = vld [vmem:[#allocation5 + $0x88] sm:$0xff]
    %v434 = vld [vmem:[#allocation5 + $0x90] sm:$0xff]
    %v435 = vld [vmem:[#allocation5 + $0x98] sm:$0xff]
    %v436 = vld [vmem:[#allocation5 + $0xa0] sm:$0xff]
    %v437 = vld [vmem:[#allocation5 + $0xa8] sm:$0xff]
    %v438 = vld [vmem:[#allocation5 + $0xb0] sm:$0xff]
    %v439 = vld [vmem:[#allocation5 + $0xb8] sm:$0xff]
    %v440 = vld [vmem:[#allocation5 + $0xc0] sm:$0xff]
    %v441 = vld [vmem:[#allocation5 + $0xc8] sm:$0xff]
    %v442 = vld [vmem:[#allocation5 + $0xd0] sm:$0xff]
    %v443 = vld [vmem:[#allocation5 + $0xd8] sm:$0xff]
    %v444 = vld [vmem:[#allocation5 + $0xe0] sm:$0xff]
    %v445 = vld [vmem:[#allocation5 + $0xe8] sm:$0xff]
    %v446 = vld [vmem:[#allocation5 + $0xf0] sm:$0xff]
    %v447 = vld [vmem:[#allocation5 + $0xf8] sm:$0xff]
    %v448 = vld [vmem:[#allocation5 + $0x100] sm:$0xff]
    %v449 = vld [vmem:[#allocation5 + $0x108] sm:$0xff]
    %v450 = vld [vmem:[#allocation5 + $0x110] sm:$0xff]
    %v451 = vld [vmem:[#allocation5 + $0x118] sm:$0xff]
    %v452 = vld [vmem:[#allocation5 + $0x120] sm:$0xff]
    %v453 = vld [vmem:[#allocation5 + $0x128] sm:$0xff]
    %v454 = vld [vmem:[#allocation5 + $0x130] sm:$0xff]
    %v455 = vld [vmem:[#allocation5 + $0x138] sm:$0xff]
    %v456 = vld [vmem:[#allocation5 + $0x140] sm:$0xff]
    %v457 = vld [vmem:[#allocation5 + $0x148] sm:$0xff]
    %v458 = vld [vmem:[#allocation5 + $0x150] sm:$0xff]
    %v459 = vld [vmem:[#allocation5 + $0x158] sm:$0xff]
    %v460 = vld [vmem:[#allocation5 + $0x160] sm:$0xff]
    %v461 = vld [vmem:[#allocation5 + $0x168] sm:$0xff]
    %v462 = vld [vmem:[#allocation5 + $0x170] sm:$0xff]
    %v463 = vld [vmem:[#allocation5 + $0x178] sm:$0xff]
    %v464 = vld [vmem:[#allocation5 + $0x180] sm:$0xff]
    %v465 = vld [vmem:[#allocation5 + $0x188] sm:$0xff]
    %v466 = vld [vmem:[#allocation5 + $0x190] sm:$0xff]
    %v467 = vld [vmem:[#allocation5 + $0x198] sm:$0xff]
    %v468 = vld [vmem:[#allocation5 + $0x1a0] sm:$0xff]
    %v469 = vld [vmem:[#allocation5 + $0x1a8] sm:$0xff]
    %v470 = vld [vmem:[#allocation5 + $0x1b0] sm:$0xff]
    %v471 = vld [vmem:[#allocation5 + $0x1b8] sm:$0xff]
    %v472 = vld [vmem:[#allocation5 + $0x1c0] sm:$0xff]
    %v473 = vld [vmem:[#allocation5 + $0x1c8] sm:$0xff]
    %v474 = vld [vmem:[#allocation5 + $0x1d0] sm:$0xff]
    %v475 = vld [vmem:[#allocation5 + $0x1d8] sm:$0xff]
    %v476 = vld [vmem:[#allocation5 + $0x1e0] sm:$0xff]
    %v477 = vld [vmem:[#allocation5 + $0x1e8] sm:$0xff]
    %v478 = vld [vmem:[#allocation5 + $0x1f0] sm:$0xff]
    %v479 = vld [vmem:[#allocation5 + $0x1f8] sm:$0xff]
    %v480 = vld [vmem:[#allocation5 + $0x200] sm:$0xff]
    %v481 = vld [vmem:[#allocation5 + $0x208] sm:$0xff]
    %v482 = vld [vmem:[#allocation5 + $0x210] sm:$0xff]
    %v483 = vld [vmem:[#allocation5 + $0x218] sm:$0xff]
    %v484 = vld [vmem:[#allocation5 + $0x220] sm:$0xff]
    %v485 = vld [vmem:[#allocation5 + $0x228] sm:$0xff]
    %v486 = vld [vmem:[#allocation5 + $0x230] sm:$0xff]
    %v487 = vld [vmem:[#allocation5 + $0x238] sm:$0xff]
    %v488 = vld [vmem:[#allocation5 + $0x240] sm:$0xff]
    %v489 = vld [vmem:[#allocation5 + $0x248] sm:$0xff]
    %v490 = vld [vmem:[#allocation5 + $0x250] sm:$0xff]
    %v491 = vld [vmem:[#allocation5 + $0x258] sm:$0xff]
    %v492 = vld [vmem:[#allocation5 + $0x260] sm:$0xff]
    %v493 = vld [vmem:[#allocation5 + $0x268] sm:$0xff]
    %v494 = vld [vmem:[#allocation5 + $0x270] sm:$0xff]
    %v495 = vld [vmem:[#allocation5 + $0x278] sm:$0xff]
    %v496 = vld [vmem:[#allocation5 + $0x280] sm:$0xff]
    %v497 = vld [vmem:[#allocation5 + $0x288] sm:$0xff]
    %v498 = vld [vmem:[#allocation5 + $0x290] sm:$0xff]
    %v499 = vld [vmem:[#allocation5 + $0x298] sm:$0xff]
    %v500 = vld [vmem:[#allocation5 + $0x2a0] sm:$0xff]
    %v501 = vld [vmem:[#allocation5 + $0x2a8] sm:$0xff]
    %v502 = vld [vmem:[#allocation5 + $0x2b0] sm:$0xff]
    %v503 = vld [vmem:[#allocation5 + $0x2b8] sm:$0xff]
    %v504 = vld [vmem:[#allocation5 + $0x2c0] sm:$0xff]
    %v505 = vld [vmem:[#allocation5 + $0x2c8] sm:$0xff]
    %v506 = vld [vmem:[#allocation5 + $0x2d0] sm:$0xff]
    %v507 = vld [vmem:[#allocation5 + $0x2d8] sm:$0xff]
    %v508 = vld [vmem:[#allocation5 + $0x2e0] sm:$0xff]
    %v509 = vld [vmem:[#allocation5 + $0x2e8] sm:$0xff]
    %v510 = vld [vmem:[#allocation5 + $0x2f0] sm:$0xff]
    %v511 = vld [vmem:[#allocation5 + $0x2f8] sm:$0xff]
    %v512 = vld [vmem:[#allocation5 + $0x300] sm:$0xff]
    %v513 = vld [vmem:[#allocation5 + $0x308] sm:$0xff]
    %v514 = vld [vmem:[#allocation5 + $0x310] sm:$0xff]
    %v515 = vld [vmem:[#allocation5 + $0x318] sm:$0xff]
    %v516 = vld [vmem:[#allocation5 + $0x320] sm:$0xff]
    %v517 = vld [vmem:[#allocation5 + $0x328] sm:$0xff]
    %v518 = vld [vmem:[#allocation5 + $0x330] sm:$0xff]
    %v519 = vld [vmem:[#allocation5 + $0x338] sm:$0xff]
    %v520 = vld [vmem:[#allocation5 + $0x340] sm:$0xff]
    %v521 = vld [vmem:[#allocation5 + $0x348] sm:$0xff]
    %v522 = vld [vmem:[#allocation5 + $0x350] sm:$0xff]
    %v523 = vld [vmem:[#allocation5 + $0x358] sm:$0xff]
    %v524 = vld [vmem:[#allocation5 + $0x360] sm:$0xff]
    %v525 = vld [vmem:[#allocation5 + $0x368] sm:$0xff]
    %v526 = vld [vmem:[#allocation5 + $0x370] sm:$0xff]
    %v527 = vld [vmem:[#allocation5 + $0x378] sm:$0xff]
    %v528 = vld [vmem:[#allocation5 + $0x380] sm:$0xff]
    %v529 = vld [vmem:[#allocation5 + $0x388] sm:$0xff]
    %v530 = vld [vmem:[#allocation5 + $0x390] sm:$0xff]
    %v531 = vld [vmem:[#allocation5 + $0x398] sm:$0xff]
    %v532 = vld [vmem:[#allocation5 + $0x3a0] sm:$0xff]
    %v533 = vld [vmem:[#allocation5 + $0x3a8] sm:$0xff]
    %v534 = vld [vmem:[#allocation5 + $0x3b0] sm:$0xff]
    %v535 = vld [vmem:[#allocation5 + $0x3b8] sm:$0xff]
    %v536 = vld [vmem:[#allocation5 + $0x3c0] sm:$0xff]
    %v537 = vld [vmem:[#allocation5 + $0x3c8] sm:$0xff]
    %v538 = vld [vmem:[#allocation5 + $0x3d0] sm:$0xff]
    %v539 = vld [vmem:[#allocation5 + $0x3d8] sm:$0xff]
    %v540 = vld [vmem:[#allocation5 + $0x3e0] sm:$0xff]
    %v541 = vld [vmem:[#allocation5 + $0x3e8] sm:$0xff]
    %v542 = vld [vmem:[#allocation5 + $0x3f0] sm:$0xff]
    %v543 = vld [vmem:[#allocation5 + $0x3f8] sm:$0xff]
    %v544 = vld [vmem:[#allocation5 + $0x400] sm:$0xff]
    %v545 = vld [vmem:[#allocation5 + $0x408] sm:$0xff]
    %v546 = vld [vmem:[#allocation5 + $0x410] sm:$0xff]
    %v547 = vld [vmem:[#allocation5 + $0x418] sm:$0xff]
    %v548 = vld [vmem:[#allocation5 + $0x420] sm:$0xff]
    %v549 = vld [vmem:[#allocation5 + $0x428] sm:$0xff]
    %v550 = vld [vmem:[#allocation5 + $0x430] sm:$0xff]
    %v551 = vld [vmem:[#allocation5 + $0x438] sm:$0xff]
    %v552 = vld [vmem:[#allocation5 + $0x440] sm:$0xff]
    %v553 = vld [vmem:[#allocation5 + $0x448] sm:$0xff]
    %v554 = vld [vmem:[#allocation5 + $0x450] sm:$0xff]
    %v555 = vld [vmem:[#allocation5 + $0x458] sm:$0xff]
    %v556 = vld [vmem:[#allocation5 + $0x460] sm:$0xff]
    %v557 = vld [vmem:[#allocation5 + $0x468] sm:$0xff]
    %v558 = vld [vmem:[#allocation5 + $0x470] sm:$0xff]
    %v559 = vld [vmem:[#allocation5 + $0x478] sm:$0xff]
    %v560 = vld [vmem:[#allocation5 + $0x480] sm:$0xff]
    %v561 = vld [vmem:[#allocation5 + $0x488] sm:$0xff]
    %v562 = vld [vmem:[#allocation5 + $0x490] sm:$0xff]
    %v563 = vld [vmem:[#allocation5 + $0x498] sm:$0xff]
    %v564 = vld [vmem:[#allocation5 + $0x4a0] sm:$0xff]
    %v565 = vld [vmem:[#allocation5 + $0x4a8] sm:$0xff]
    %v566 = vld [vmem:[#allocation5 + $0x4b0] sm:$0xff]
    %v567 = vld [vmem:[#allocation5 + $0x4b8] sm:$0xff]
    %v568 = vld [vmem:[#allocation5 + $0x4c0] sm:$0xff]
    %v569 = vld [vmem:[#allocation5 + $0x4c8] sm:$0xff]
    %v570 = vld [vmem:[#allocation5 + $0x4d0] sm:$0xff]
    %v571 = vld [vmem:[#allocation5 + $0x4d8] sm:$0xff]
    %v572 = vld [vmem:[#allocation5 + $0x4e0] sm:$0xff]
    %v573 = vld [vmem:[#allocation5 + $0x4e8] sm:$0xff]
    %v574 = vld [vmem:[#allocation5 + $0x4f0] sm:$0xff]
    %v575 = vld [vmem:[#allocation5 + $0x4f8] sm:$0xff]
    %v576 = vld [vmem:[#allocation5 + $0x500] sm:$0xff]
    %v577 = vld [vmem:[#allocation5 + $0x508] sm:$0xff]
    %v578 = vld [vmem:[#allocation5 + $0x510] sm:$0xff]
    %v579 = vld [vmem:[#allocation5 + $0x518] sm:$0xff]
    %v580 = vld [vmem:[#allocation5 + $0x520] sm:$0xff]
    %v581 = vld [vmem:[#allocation5 + $0x528] sm:$0xff]
    %v582 = vld [vmem:[#allocation5 + $0x530] sm:$0xff]
    %v583 = vld [vmem:[#allocation5 + $0x538] sm:$0xff]
    %v584 = vld [vmem:[#allocation5 + $0x540] sm:$0xff]
    %v585 = vld [vmem:[#allocation5 + $0x548] sm:$0xff]
    %v586 = vld [vmem:[#allocation5 + $0x550] sm:$0xff]
    %v587 = vld [vmem:[#allocation5 + $0x558] sm:$0xff]
    %v588 = vld [vmem:[#allocation5 + $0x560] sm:$0xff]
    %v589 = vld [vmem:[#allocation5 + $0x568] sm:$0xff]
    %v590 = vld [vmem:[#allocation5 + $0x570] sm:$0xff]
    %v591 = vld [vmem:[#allocation5 + $0x578] sm:$0xff]
    %v592 = vld [vmem:[#allocation5 + $0x580] sm:$0xff]
    %v593 = vld [vmem:[#allocation5 + $0x588] sm:$0xff]
    %v594 = vld [vmem:[#allocation5 + $0x590] sm:$0xff]
    %v595 = vld [vmem:[#allocation5 + $0x598] sm:$0xff]
    %v596 = vld [vmem:[#allocation5 + $0x5a0] sm:$0xff]
    %v597 = vld [vmem:[#allocation5 + $0x5a8] sm:$0xff]
    %v598 = vld [vmem:[#allocation5 + $0x5b0] sm:$0xff]
    %v599 = vld [vmem:[#allocation5 + $0x5b8] sm:$0xff]
    %v600 = vld [vmem:[#allocation5 + $0x5c0] sm:$0xff]
    %v601 = vld [vmem:[#allocation5 + $0x5c8] sm:$0xff]
    %v602 = vld [vmem:[#allocation5 + $0x5d0] sm:$0xff]
    %v603 = vld [vmem:[#allocation5 + $0x5d8] sm:$0xff]
    %v604 = vld [vmem:[#allocation5 + $0x5e0] sm:$0xff]
    %v605 = vld [vmem:[#allocation5 + $0x5e8] sm:$0xff]
    %v606 = vld [vmem:[#allocation5 + $0x5f0] sm:$0xff]
    %v607 = vld [vmem:[#allocation5 + $0x5f8] sm:$0xff]
    %v608 = vld [vmem:[#allocation5 + $0x600] sm:$0xff]
    %v609 = vld [vmem:[#allocation5 + $0x608] sm:$0xff]
    %v610 = vld [vmem:[#allocation5 + $0x610] sm:$0xff]
    %v611 = vld [vmem:[#allocation5 + $0x618] sm:$0xff]
    %v612 = vld [vmem:[#allocation5 + $0x620] sm:$0xff]
    %v613 = vld [vmem:[#allocation5 + $0x628] sm:$0xff]
    %v614 = vld [vmem:[#allocation5 + $0x630] sm:$0xff]
    %v615 = vld [vmem:[#allocation5 + $0x638] sm:$0xff]
    %v616 = vld [vmem:[#allocation5 + $0x640] sm:$0xff]
    %v617 = vld [vmem:[#allocation5 + $0x648] sm:$0xff]
    %v618 = vld [vmem:[#allocation5 + $0x650] sm:$0xff]
    %v619 = vld [vmem:[#allocation5 + $0x658] sm:$0xff]
    %v620 = vld [vmem:[#allocation5 + $0x660] sm:$0xff]
    %v621 = vld [vmem:[#allocation5 + $0x668] sm:$0xff]
    %v622 = vld [vmem:[#allocation5 + $0x670] sm:$0xff]
    %v623 = vld [vmem:[#allocation5 + $0x678] sm:$0xff]
    %v624 = vld [vmem:[#allocation5 + $0x680] sm:$0xff]
    %v625 = vld [vmem:[#allocation5 + $0x688] sm:$0xff]
    %v626 = vld [vmem:[#allocation5 + $0x690] sm:$0xff]
    %v627 = vld [vmem:[#allocation5 + $0x698] sm:$0xff]
    %v628 = vld [vmem:[#allocation5 + $0x6a0] sm:$0xff]
    %v629 = vld [vmem:[#allocation5 + $0x6a8] sm:$0xff]
    %v630 = vld [vmem:[#allocation5 + $0x6b0] sm:$0xff]
    %v631 = vld [vmem:[#allocation5 + $0x6b8] sm:$0xff]
    %v632 = vld [vmem:[#allocation5 + $0x6c0] sm:$0xff]
    %v633 = vld [vmem:[#allocation5 + $0x6c8] sm:$0xff]
    %v634 = vld [vmem:[#allocation5 + $0x6d0] sm:$0xff]
    %v635 = vld [vmem:[#allocation5 + $0x6d8] sm:$0xff]
    %v636 = vld [vmem:[#allocation5 + $0x6e0] sm:$0xff]
    %v637 = vld [vmem:[#allocation5 + $0x6e8] sm:$0xff]
    %v638 = vld [vmem:[#allocation5 + $0x6f0] sm:$0xff]
    %v639 = vld [vmem:[#allocation5 + $0x6f8] sm:$0xff]
    %v640 = vld [vmem:[#allocation5 + $0x700] sm:$0xff]
    %v641 = vld [vmem:[#allocation5 + $0x708] sm:$0xff]
    %v642 = vld [vmem:[#allocation5 + $0x710] sm:$0xff]
    %v643 = vld [vmem:[#allocation5 + $0x718] sm:$0xff]
    %v644 = vld [vmem:[#allocation5 + $0x720] sm:$0xff]
    %v645 = vld [vmem:[#allocation5 + $0x728] sm:$0xff]
    %v646 = vld [vmem:[#allocation5 + $0x730] sm:$0xff]
    %v647 = vld [vmem:[#allocation5 + $0x738] sm:$0xff]
    %v648 = vld [vmem:[#allocation5 + $0x740] sm:$0xff]
    %v649 = vld [vmem:[#allocation5 + $0x748] sm:$0xff]
    %v650 = vld [vmem:[#allocation5 + $0x750] sm:$0xff]
    %v651 = vld [vmem:[#allocation5 + $0x758] sm:$0xff]
    %v652 = vld [vmem:[#allocation5 + $0x760] sm:$0xff]
    %v653 = vld [vmem:[#allocation5 + $0x768] sm:$0xff]
    %v654 = vld [vmem:[#allocation5 + $0x770] sm:$0xff]
    %v655 = vld [vmem:[#allocation5 + $0x778] sm:$0xff]
    %v656 = vld [vmem:[#allocation5 + $0x780] sm:$0xff]
    %v657 = vld [vmem:[#allocation5 + $0x788] sm:$0xff]
    %v658 = vld [vmem:[#allocation5 + $0x790] sm:$0xff]
    %v659 = vld [vmem:[#allocation5 + $0x798] sm:$0xff]
    %v660 = vld [vmem:[#allocation5 + $0x7a0] sm:$0xff]
    %v661 = vld [vmem:[#allocation5 + $0x7a8] sm:$0xff]
    %v662 = vld [vmem:[#allocation5 + $0x7b0] sm:$0xff]
    %v663 = vld [vmem:[#allocation5 + $0x7b8] sm:$0xff]
    %v664 = vld [vmem:[#allocation5 + $0x7c0] sm:$0xff]
    %v665 = vld [vmem:[#allocation5 + $0x7c8] sm:$0xff]
    %v666 = vld [vmem:[#allocation5 + $0x7d0] sm:$0xff]
    %v667 = vld [vmem:[#allocation5 + $0x7d8] sm:$0xff]
    %v668 = vld [vmem:[#allocation5 + $0x7e0] sm:$0xff]
    %v669 = vld [vmem:[#allocation5 + $0x7e8] sm:$0xff]
    %v670 = vld [vmem:[#allocation5 + $0x7f0] sm:$0xff]
    %v671 = vld [vmem:[#allocation5 + $0x7f8] sm:$0xff]
    %672 = vmatpush.msra.mxu0 %v431
    %673 = vmatpush.msra.mxu0 %v430
    %674 = vmatpush.msra.mxu0 %v429
    %675 = vmatpush.msra.mxu0 %v428
    %676 = vmatpush.msra.mxu0 %v427
    %677 = vmatpush.msra.mxu0 %v426
    %678 = vmatpush.msra.mxu0 %v425
    %679 = vmatpush.msra.mxu0 %v424
    %680 = vmatpush.msra.mxu0 %v423
    %681 = vmatpush.msra.mxu0 %v422
    %682 = vmatpush.msra.mxu0 %v421
    %683 = vmatpush.msra.mxu0 %v420
    %684 = vmatpush.msra.mxu0 %v419
    %685 = vmatpush.msra.mxu0 %v418
    %686 = vmatpush.msra.mxu0 %v417
    %687 = vmatpush.msra.mxu0 %v416
    %688 = vmatmul.f32.gmra.mxu0 %v374
    %v689 = vpop.f32.mrf.mxu0
    %v690 = vadd.f32 %v414, %v689
    %691 = vmatmul.f32.gmra.mxu0 %v382
    %v692 = vpop.f32.mrf.mxu0
    %v693 = vadd.f32 %v415, %v692
    %694 = vdwg.mxu0
    %695 = vmatpush.msra.mxu0 %v447
    %696 = vmatpush.msra.mxu0 %v446
    %697 = vmatpush.msra.mxu0 %v445
    %698 = vmatpush.msra.mxu0 %v444
    %699 = vmatpush.msra.mxu0 %v443
    %700 = vmatpush.msra.mxu0 %v442
    %701 = vmatpush.msra.mxu0 %v441
    %702 = vmatpush.msra.mxu0 %v440
    %703 = vmatpush.msra.mxu0 %v439
    %704 = vmatpush.msra.mxu0 %v438
    %705 = vmatpush.msra.mxu0 %v437
    %706 = vmatpush.msra.mxu0 %v436
    %707 = vmatpush.msra.mxu0 %v435
    %708 = vmatpush.msra.mxu0 %v434
    %709 = vmatpush.msra.mxu0 %v433
    %710 = vmatpush.msra.mxu0 %v432
    %711 = vmatmul.f32.gmra.mxu0 %v375
    %v712 = vpop.f32.mrf.mxu0
    %v713 = vadd.f32 %v690, %v712
    %714 = vmatmul.f32.gmra.mxu0 %v383
    %v715 = vpop.f32.mrf.mxu0
    %v716 = vadd.f32 %v693, %v715
    %717 = vdwg.mxu0
    %718 = vmatpush.msra.mxu0 %v463
    %719 = vmatpush.msra.mxu0 %v462
    %720 = vmatpush.msra.mxu0 %v461
    %721 = vmatpush.msra.mxu0 %v460
    %722 = vmatpush.msra.mxu0 %v459
    %723 = vmatpush.msra.mxu0 %v458
    %724 = vmatpush.msra.mxu0 %v457
    %725 = vmatpush.msra.mxu0 %v456
    %726 = vmatpush.msra.mxu0 %v455
    %727 = vmatpush.msra.mxu0 %v454
    %728 = vmatpush.msra.mxu0 %v453
    %729 = vmatpush.msra.mxu0 %v452
    %730 = vmatpush.msra.mxu0 %v451
    %731 = vmatpush.msra.mxu0 %v450
    %732 = vmatpush.msra.mxu0 %v449
    %733 = vmatpush.msra.mxu0 %v448
    %734 = vmatmul.f32.gmra.mxu0 %v376
    %v735 = vpop.f32.mrf.mxu0
    %v736 = vadd.f32 %v713, %v735
    %737 = vmatmul.f32.gmra.mxu0 %v384
    %v738 = vpop.f32.mrf.mxu0
    %v739 = vadd.f32 %v716, %v738
    %740 = vdwg.mxu0
    %741 = vmatpush.msra.mxu0 %v479
    %742 = vmatpush.msra.mxu0 %v478
    %743 = vmatpush.msra.mxu0 %v477
    %744 = vmatpush.msra.mxu0 %v476
    %745 = vmatpush.msra.mxu0 %v475
    %746 = vmatpush.msra.mxu0 %v474
    %747 = vmatpush.msra.mxu0 %v473
    %748 = vmatpush.msra.mxu0 %v472
    %749 = vmatpush.msra.mxu0 %v471
    %750 = vmatpush.msra.mxu0 %v470
    %751 = vmatpush.msra.mxu0 %v469
    %752 = vmatpush.msra.mxu0 %v468
    %753 = vmatpush.msra.mxu0 %v467
    %754 = vmatpush.msra.mxu0 %v466
    %755 = vmatpush.msra.mxu0 %v465
    %756 = vmatpush.msra.mxu0 %v464
    %757 = vmatmul.f32.gmra.mxu0 %v377
    %v758 = vpop.f32.mrf.mxu0
    %v759 = vadd.f32 %v736, %v758
    %760 = vmatmul.f32.gmra.mxu0 %v385
    %v761 = vpop.f32.mrf.mxu0
    %v762 = vadd.f32 %v739, %v761
    %763 = vdwg.mxu0
    %764 = vmatpush.msra.mxu0 %v495
    %765 = vmatpush.msra.mxu0 %v494
    %766 = vmatpush.msra.mxu0 %v493
    %767 = vmatpush.msra.mxu0 %v492
    %768 = vmatpush.msra.mxu0 %v491
    %769 = vmatpush.msra.mxu0 %v490
    %770 = vmatpush.msra.mxu0 %v489
    %771 = vmatpush.msra.mxu0 %v488
    %772 = vmatpush.msra.mxu0 %v487
    %773 = vmatpush.msra.mxu0 %v486
    %774 = vmatpush.msra.mxu0 %v485
    %775 = vmatpush.msra.mxu0 %v484
    %776 = vmatpush.msra.mxu0 %v483
    %777 = vmatpush.msra.mxu0 %v482
    %778 = vmatpush.msra.mxu0 %v481
    %779 = vmatpush.msra.mxu0 %v480
    %780 = vmatmul.f32.gmra.mxu0 %v378
    %v781 = vpop.f32.mrf.mxu0
    %v782 = vadd.f32 %v759, %v781
    %783 = vmatmul.f32.gmra.mxu0 %v386
    %v784 = vpop.f32.mrf.mxu0
    %v785 = vadd.f32 %v762, %v784
    %786 = vdwg.mxu0
    %787 = vmatpush.msra.mxu0 %v511
    %788 = vmatpush.msra.mxu0 %v510
    %789 = vmatpush.msra.mxu0 %v509
    %790 = vmatpush.msra.mxu0 %v508
    %791 = vmatpush.msra.mxu0 %v507
    %792 = vmatpush.msra.mxu0 %v506
    %793 = vmatpush.msra.mxu0 %v505
    %794 = vmatpush.msra.mxu0 %v504
    %795 = vmatpush.msra.mxu0 %v503
    %796 = vmatpush.msra.mxu0 %v502
    %797 = vmatpush.msra.mxu0 %v501
    %798 = vmatpush.msra.mxu0 %v500
    %799 = vmatpush.msra.mxu0 %v499
    %800 = vmatpush.msra.mxu0 %v498
    %801 = vmatpush.msra.mxu0 %v497
    %802 = vmatpush.msra.mxu0 %v496
    %803 = vmatmul.f32.gmra.mxu0 %v379
    %v804 = vpop.f32.mrf.mxu0
    %v805 = vadd.f32 %v782, %v804
    %806 = vmatmul.f32.gmra.mxu0 %v387
    %v807 = vpop.f32.mrf.mxu0
    %v808 = vadd.f32 %v785, %v807
    %809 = vdwg.mxu0
    %810 = vmatpush.msra.mxu0 %v527
    %811 = vmatpush.msra.mxu0 %v526
    %812 = vmatpush.msra.mxu0 %v525
    %813 = vmatpush.msra.mxu0 %v524
    %814 = vmatpush.msra.mxu0 %v523
    %815 = vmatpush.msra.mxu0 %v522
    %816 = vmatpush.msra.mxu0 %v521
    %817 = vmatpush.msra.mxu0 %v520
    %818 = vmatpush.msra.mxu0 %v519
    %819 = vmatpush.msra.mxu0 %v518
    %820 = vmatpush.msra.mxu0 %v517
    %821 = vmatpush.msra.mxu0 %v516
    %822 = vmatpush.msra.mxu0 %v515
    %823 = vmatpush.msra.mxu0 %v514
    %824 = vmatpush.msra.mxu0 %v513
    %825 = vmatpush.msra.mxu0 %v512
    %826 = vmatmul.f32.gmra.mxu0 %v380
    %v827 = vpop.f32.mrf.mxu0
    %v828 = vadd.f32 %v805, %v827
    %829 = vmatmul.f32.gmra.mxu0 %v388
    %v830 = vpop.f32.mrf.mxu0
    %v831 = vadd.f32 %v808, %v830
    %832 = vdwg.mxu0
    %833 = vmatpush.msra.mxu0 %v543
    %834 = vmatpush.msra.mxu0 %v542
    %835 = vmatpush.msra.mxu0 %v541
    %836 = vmatpush.msra.mxu0 %v540
    %837 = vmatpush.msra.mxu0 %v539
    %838 = vmatpush.msra.mxu0 %v538
    %839 = vmatpush.msra.mxu0 %v537
    %840 = vmatpush.msra.mxu0 %v536
    %841 = vmatpush.msra.mxu0 %v535
    %842 = vmatpush.msra.mxu0 %v534
    %843 = vmatpush.msra.mxu0 %v533
    %844 = vmatpush.msra.mxu0 %v532
    %845 = vmatpush.msra.mxu0 %v531
    %846 = vmatpush.msra.mxu0 %v530
    %847 = vmatpush.msra.mxu0 %v529
    %848 = vmatpush.msra.mxu0 %v528
    %849 = vmatmul.f32.gmra.mxu0 %v381
    %v850 = vpop.f32.mrf.mxu0
    %v851 = vadd.f32 %v828, %v850
    %852 = vmatmul.f32.gmra.mxu0 %v389
    %v853 = vpop.f32.mrf.mxu0
    %v854 = vadd.f32 %v831, %v853
    %855 = vdwg.mxu0
    %856 = vmatpush.msra.mxu0 %v559
    %857 = vmatpush.msra.mxu0 %v558
    %858 = vmatpush.msra.mxu0 %v557
    %859 = vmatpush.msra.mxu0 %v556
    %860 = vmatpush.msra.mxu0 %v555
    %861 = vmatpush.msra.mxu0 %v554
    %862 = vmatpush.msra.mxu0 %v553
    %863 = vmatpush.msra.mxu0 %v552
    %864 = vmatpush.msra.mxu0 %v551
    %865 = vmatpush.msra.mxu0 %v550
    %866 = vmatpush.msra.mxu0 %v549
    %867 = vmatpush.msra.mxu0 %v548
    %868 = vmatpush.msra.mxu0 %v547
    %869 = vmatpush.msra.mxu0 %v546
    %870 = vmatpush.msra.mxu0 %v545
    %871 = vmatpush.msra.mxu0 %v544
    %872 = vmatmul.f32.gmra.mxu0 %v392
    %v873 = vpop.f32.mrf.mxu0
    %v874 = vadd.f32 %v851, %v873
    %875 = vmatmul.f32.gmra.mxu0 %v400
    %v876 = vpop.f32.mrf.mxu0
    %v877 = vadd.f32 %v854, %v876
    %878 = vdwg.mxu0
    %879 = vmatpush.msra.mxu0 %v575
    %880 = vmatpush.msra.mxu0 %v574
    %881 = vmatpush.msra.mxu0 %v573
    %882 = vmatpush.msra.mxu0 %v572
    %883 = vmatpush.msra.mxu0 %v571
    %884 = vmatpush.msra.mxu0 %v570
    %885 = vmatpush.msra.mxu0 %v569
    %886 = vmatpush.msra.mxu0 %v568
    %887 = vmatpush.msra.mxu0 %v567
    %888 = vmatpush.msra.mxu0 %v566
    %889 = vmatpush.msra.mxu0 %v565
    %890 = vmatpush.msra.mxu0 %v564
    %891 = vmatpush.msra.mxu0 %v563
    %892 = vmatpush.msra.mxu0 %v562
    %893 = vmatpush.msra.mxu0 %v561
    %894 = vmatpush.msra.mxu0 %v560
    %895 = vmatmul.f32.gmra.mxu0 %v393
    %v896 = vpop.f32.mrf.mxu0
    %v897 = vadd.f32 %v874, %v896
    %898 = vmatmul.f32.gmra.mxu0 %v401
    %v899 = vpop.f32.mrf.mxu0
    %v900 = vadd.f32 %v877, %v899
    %901 = vdwg.mxu0
    %902 = vmatpush.msra.mxu0 %v591
    %903 = vmatpush.msra.mxu0 %v590
    %904 = vmatpush.msra.mxu0 %v589
    %905 = vmatpush.msra.mxu0 %v588
    %906 = vmatpush.msra.mxu0 %v587
    %907 = vmatpush.msra.mxu0 %v586
    %908 = vmatpush.msra.mxu0 %v585
    %909 = vmatpush.msra.mxu0 %v584
    %910 = vmatpush.msra.mxu0 %v583
    %911 = vmatpush.msra.mxu0 %v582
    %912 = vmatpush.msra.mxu0 %v581
    %913 = vmatpush.msra.mxu0 %v580
    %914 = vmatpush.msra.mxu0 %v579
    %915 = vmatpush.msra.mxu0 %v578
    %916 = vmatpush.msra.mxu0 %v577
    %917 = vmatpush.msra.mxu0 %v576
    %918 = vmatmul.f32.gmra.mxu0 %v394
    %v919 = vpop.f32.mrf.mxu0
    %v920 = vadd.f32 %v897, %v919
    %921 = vmatmul.f32.gmra.mxu0 %v402
    %v922 = vpop.f32.mrf.mxu0
    %v923 = vadd.f32 %v900, %v922
    %924 = vdwg.mxu0
    %925 = vmatpush.msra.mxu0 %v607
    %926 = vmatpush.msra.mxu0 %v606
    %927 = vmatpush.msra.mxu0 %v605
    %928 = vmatpush.msra.mxu0 %v604
    %929 = vmatpush.msra.mxu0 %v603
    %930 = vmatpush.msra.mxu0 %v602
    %931 = vmatpush.msra.mxu0 %v601
    %932 = vmatpush.msra.mxu0 %v600
    %933 = vmatpush.msra.mxu0 %v599
    %934 = vmatpush.msra.mxu0 %v598
    %935 = vmatpush.msra.mxu0 %v597
    %936 = vmatpush.msra.mxu0 %v596
    %937 = vmatpush.msra.mxu0 %v595
    %938 = vmatpush.msra.mxu0 %v594
    %939 = vmatpush.msra.mxu0 %v593
    %940 = vmatpush.msra.mxu0 %v592
    %941 = vmatmul.f32.gmra.mxu0 %v395
    %v942 = vpop.f32.mrf.mxu0
    %v943 = vadd.f32 %v920, %v942
    %944 = vmatmul.f32.gmra.mxu0 %v403
    %v945 = vpop.f32.mrf.mxu0
    %v946 = vadd.f32 %v923, %v945
    %947 = vdwg.mxu0
    %948 = vmatpush.msra.mxu0 %v623
    %949 = vmatpush.msra.mxu0 %v622
    %950 = vmatpush.msra.mxu0 %v621
    %951 = vmatpush.msra.mxu0 %v620
    %952 = vmatpush.msra.mxu0 %v619
    %953 = vmatpush.msra.mxu0 %v618
    %954 = vmatpush.msra.mxu0 %v617
    %955 = vmatpush.msra.mxu0 %v616
    %956 = vmatpush.msra.mxu0 %v615
    %957 = vmatpush.msra.mxu0 %v614
    %958 = vmatpush.msra.mxu0 %v613
    %959 = vmatpush.msra.mxu0 %v612
    %960 = vmatpush.msra.mxu0 %v611
    %961 = vmatpush.msra.mxu0 %v610
    %962 = vmatpush.msra.mxu0 %v609
    %963 = vmatpush.msra.mxu0 %v608
    %964 = vmatmul.f32.gmra.mxu0 %v396
    %v965 = vpop.f32.mrf.mxu0
    %v966 = vadd.f32 %v943, %v965
    %967 = vmatmul.f32.gmra.mxu0 %v404
    %v968 = vpop.f32.mrf.mxu0
    %v969 = vadd.f32 %v946, %v968
    %970 = vdwg.mxu0
    %971 = vmatpush.msra.mxu0 %v639
    %972 = vmatpush.msra.mxu0 %v638
    %973 = vmatpush.msra.mxu0 %v637
    %974 = vmatpush.msra.mxu0 %v636
    %975 = vmatpush.msra.mxu0 %v635
    %976 = vmatpush.msra.mxu0 %v634
    %977 = vmatpush.msra.mxu0 %v633
    %978 = vmatpush.msra.mxu0 %v632
    %979 = vmatpush.msra.mxu0 %v631
    %980 = vmatpush.msra.mxu0 %v630
    %981 = vmatpush.msra.mxu0 %v629
    %982 = vmatpush.msra.mxu0 %v628
    %983 = vmatpush.msra.mxu0 %v627
    %984 = vmatpush.msra.mxu0 %v626
    %985 = vmatpush.msra.mxu0 %v625
    %986 = vmatpush.msra.mxu0 %v624
    %987 = vmatmul.f32.gmra.mxu0 %v397
    %v988 = vpop.f32.mrf.mxu0
    %v989 = vadd.f32 %v966, %v988
    %990 = vmatmul.f32.gmra.mxu0 %v405
    %v991 = vpop.f32.mrf.mxu0
    %v992 = vadd.f32 %v969, %v991
    %993 = vdwg.mxu0
    %994 = vmatpush.msra.mxu0 %v655
    %995 = vmatpush.msra.mxu0 %v654
    %996 = vmatpush.msra.mxu0 %v653
    %997 = vmatpush.msra.mxu0 %v652
    %998 = vmatpush.msra.mxu0 %v651
    %999 = vmatpush.msra.mxu0 %v650
    %1000 = vmatpush.msra.mxu0 %v649
    %1001 = vmatpush.msra.mxu0 %v648
    %1002 = vmatpush.msra.mxu0 %v647
    %1003 = vmatpush.msra.mxu0 %v646
    %1004 = vmatpush.msra.mxu0 %v645
    %1005 = vmatpush.msra.mxu0 %v644
    %1006 = vmatpush.msra.mxu0 %v643
    %1007 = vmatpush.msra.mxu0 %v642
    %1008 = vmatpush.msra.mxu0 %v641
    %1009 = vmatpush.msra.mxu0 %v640
    %1010 = vmatmul.f32.gmra.mxu0 %v398
    %v1011 = vpop.f32.mrf.mxu0
    %v1012 = vadd.f32 %v989, %v1011
    %1013 = vmatmul.f32.gmra.mxu0 %v406
    %v1014 = vpop.f32.mrf.mxu0
    %v1015 = vadd.f32 %v992, %v1014
    %1016 = vdwg.mxu0
    %1017 = vmatpush.msra.mxu0 %v671
    %1018 = vmatpush.msra.mxu0 %v670
    %1019 = vmatpush.msra.mxu0 %v669
    %1020 = vmatpush.msra.mxu0 %v668
    %1021 = vmatpush.msra.mxu0 %v667
    %1022 = vmatpush.msra.mxu0 %v666
    %1023 = vmatpush.msra.mxu0 %v665
    %1024 = vmatpush.msra.mxu0 %v664
    %1025 = vmatpush.msra.mxu0 %v663
    %1026 = vmatpush.msra.mxu0 %v662
    %1027 = vmatpush.msra.mxu0 %v661
    %1028 = vmatpush.msra.mxu0 %v660
    %1029 = vmatpush.msra.mxu0 %v659
    %1030 = vmatpush.msra.mxu0 %v658
    %1031 = vmatpush.msra.mxu0 %v657
    %1032 = vmatpush.msra.mxu0 %v656
    %1033 = vmatmul.f32.gmra.mxu0 %v399
    %v1034 = vpop.f32.mrf.mxu0
    %v1035 = vadd.f32 %v1012, %v1034
    %1036 = vmatmul.f32.gmra.mxu0 %v407
    %v1037 = vpop.f32.mrf.mxu0
    %v1038 = vadd.f32 %v1015, %v1037
    %1039 = vdwg.mxu0
    %v1040 = vmax.f32 %v1035, 0.0
    %v1041 = vmax.f32 %v1038, 0.0
    %v1042 = vld [vmem:[#allocation7] sm:$0xff]
    %v1043 = vld [vmem:[#allocation7 + $0x8] sm:$0xff]
    %v1044 = vld [vmem:[#allocation7 + $0x10] sm:$0xff]
    %v1045 = vld [vmem:[#allocation7 + $0x18] sm:$0xff]
    %v1046 = vld [vmem:[#allocation7 + $0x20] sm:$0xff]
    %v1047 = vld [vmem:[#allocation7 + $0x28] sm:$0xff]
    %v1048 = vld [vmem:[#allocation7 + $0x30] sm:$0xff]
    %v1049 = vld [vmem:[#allocation7 + $0x38] sm:$0xff]
    %v1050 = vld [vmem:[#allocation7 + $0x40] sm:$0xff]
    %v1051 = vld [vmem:[#allocation7 + $0x48] sm:$0xff]
    %v1052 = vld [vmem:[#allocation7 + $0x50] sm:$0xff]
    %v1053 = vld [vmem:[#allocation7 + $0x58] sm:$0xff]
    %v1054 = vld [vmem:[#allocation7 + $0x60] sm:$0xff]
    %v1055 = vld [vmem:[#allocation7 + $0x68] sm:$0xff]
    %v1056 = vld [vmem:[#allocation7 + $0x70] sm:$0xff]
    %v1057 = vld [vmem:[#allocation7 + $0x78] sm:$0xff]
    %v1058 = vld [vmem:[%s5] sm:$0x1]
    %v1059 = vmul.f32 %v1040, %v1040
    %v1060 = vmul.f32 %v1041, %v1041
    %1061 = vadd.xlane.f32.xlu0 %v1059
    %v1062 = vpop.xlane.xlu0 %1061
    %1063 = vadd.xlane.f32.xlu0 %v1060
    %v1064 = vpop.xlane.xlu0 %1063
    %v1065 = vmax.f32 %v1062, 1e-24
    %v1066 = vmax.f32 %v1064, 1e-24
    %v1067 = vrsqrt.pop %v1065
    %v1068 = vmul.f32 %v1067, %v1065
    %v1069 = vmul.f32 %v1068, %v1067
    %v1070 = vmul.f32 0.5, %v1069
    %v1071 = vsub.f32 1.5, %v1070
    %v1072 = vmul.f32 %v1067, %v1071
    %vm1073 = vweird.f32 %v1065
    %vm1074 = vweird.f32 %v1067
    %vm1075 = vmor %vm1073, %vm1074
    %v1076 = vsel %vm1075, %v1067, %v1072
    %v1077 = vrsqrt.pop %v1066
    %v1078 = vmul.f32 %v1077, %v1066
    %v1079 = vmul.f32 %v1078, %v1077
    %v1080 = vmul.f32 0.5, %v1079
    %v1081 = vsub.f32 1.5, %v1080
    %v1082 = vmul.f32 %v1077, %v1081
    %vm1083 = vweird.f32 %v1066
    %vm1084 = vweird.f32 %v1077
    %vm1085 = vmor %vm1083, %vm1084
    %v1086 = vsel %vm1085, %v1077, %v1082
    %v1087 = vmul.f32 %v1040, %v1076
    %v1088 = vmul.f32 %v1041, %v1086
    %v1089 = vlaneseq
    %v1090 = vand.u32 %v1089, 127
    %v1091 = vmul.f32 %v1088, %v1088
    %vm1092 = vcmask 1043456
    %v1093 = vsel %vm1092, %v1091, 0.0
    %1094 = vadd.xlane.f32.xlu0 %v1093
    %v1095 = vpop.xlane.xlu0 %1094
    %v1096 = vmul.f32 %v1088, -2.0
    %vm1097 = vcmask 7168
    %v1099 = vsel %vm1097, 1.0, 0
    %v1102 = vsel %vm1097, %v1095, 0
    %1104 = vmatpush.xpose.msra.mxu0 0.0
    %1105 = vmatpush.xpose.msra.mxu0 0.0
    %1106 = vmatpush.xpose.msra.mxu0 0.0
    %1107 = vmatpush.xpose.msra.mxu0 0.0
    %1108 = vmatpush.xpose.msra.mxu0 0.0
    %1109 = vmatpush.xpose.msra.mxu0 0.0
    %1110 = vmatpush.xpose.msra.mxu0 0.0
    %1111 = vmatpush.xpose.msra.mxu0 0.0
    %1112 = vmatpush.xpose.msra.mxu0 0.0
    %1113 = vmatpush.xpose.msra.mxu0 0.0
    %1114 = vmatpush.xpose.msra.mxu0 0.0
    %1115 = vmatpush.xpose.msra.mxu0 0.0
    %1116 = vmatpush.xpose.msra.mxu0 0.0
    %1117 = vmatpush.xpose.msra.mxu0 0.0
    %1118 = vmatpush.xpose.msra.mxu0 0.0
    %1119 = vmatpush.xpose.msra.mxu0 %v1096
    %1120 = vmatmul.f32.gmra.mxu0 %v1088
    %v1121 = vpop.f32.mrf.mxu0
    %v1122 = vadd.f32 0.0, %v1121
    %1123 = vdwg.mxu0
    %1124 = vmatpush.xpose.msra.mxu0 0.0
    %1125 = vmatpush.xpose.msra.mxu0 0.0
    %1126 = vmatpush.xpose.msra.mxu0 0.0
    %1127 = vmatpush.xpose.msra.mxu0 0.0
    %1128 = vmatpush.xpose.msra.mxu0 0.0
    %1129 = vmatpush.xpose.msra.mxu0 0.0
    %1130 = vmatpush.xpose.msra.mxu0 0.0
    %1131 = vmatpush.xpose.msra.mxu0 0.0
    %1132 = vmatpush.xpose.msra.mxu0 0.0
    %1133 = vmatpush.xpose.msra.mxu0 0.0
    %1134 = vmatpush.xpose.msra.mxu0 0.0
    %1135 = vmatpush.xpose.msra.mxu0 0.0
    %1136 = vmatpush.xpose.msra.mxu0 0.0
    %1137 = vmatpush.xpose.msra.mxu0 0.0
    %1138 = vmatpush.xpose.msra.mxu0 0.0
    %1139 = vmatpush.xpose.msra.mxu0 %v1102
    %1140 = vmatmul.f32.gmra.mxu0 %v1099
    %v1141 = vpop.f32.mrf.mxu0
    %v1142 = vadd.f32 %v1122, %v1141
    %1143 = vdwg.mxu0
    %1145 = vrot.lane.b32.xlu0 %v1142, 1
    %v1146 = vpop.permute.xlu0 %1145
    %vm1148 = vcmp.lt.f32.partialorder %v1142, %v1146
    %v1149 = vsel %vm1148, %v1142, %v1146
    %v1150 = vsel %vm1148, 1, 0
    %1152 = vrot.lane.b32.xlu0 %v1149, 1
    %v1153 = vpop.permute.xlu0 %1152
    %vm1155 = vcmp.lt.f32.partialorder %v1142, %v1153
    %v1156 = vsel %vm1155, %v1142, %v1153
    %1157 = vrot.lane.b32.xlu0 %v1150, 1
    %v1158 = vpop.permute.xlu0 %1157
    %v1159 = vsel %vm1155, 2, %v1158
    %1161 = vrot.lane.b32.xlu0 %v1156, 1
    %v1162 = vpop.permute.xlu0 %1161
    %vm1164 = vcmp.lt.f32.partialorder %v1142, %v1162
    %1165 = vrot.lane.b32.xlu0 %v1159, 1
    %v1166 = vpop.permute.xlu0 %1165
    %v1167 = vsel %vm1164, 3, %v1166
    %1168 = vset.pattern.permute.xlu0 3
    %1169 = vperm.xlu0 %1168, %v1167
    %v1170 = vpop.permute.xlu0 %1169
    %vm1171 = vcmp.eq.s32.totalorder %v1170, %v1090
    %v1172 = vsel %vm1171, 1, 0
    %v1173 = vcvt.s32.f32 %v1172
    %1174 = vxpose.xlu0.b32.start [1/16] %v1173, 128
    %1175 = vxpose.xlu0.b32.cont [2/16] 0.0, 128
    %1176 = vxpose.xlu0.b32.cont [3/16] 0.0, 128
    %1177 = vxpose.xlu0.b32.cont [4/16] 0.0, 128
    %1178 = vxpose.xlu0.b32.cont [5/16] 0.0, 128
    %1179 = vxpose.xlu0.b32.cont [6/16] 0.0, 128
    %1180 = vxpose.xlu0.b32.cont [7/16] 0.0, 128
    %1181 = vxpose.xlu0.b32.cont [8/16] 0.0, 128
    %1182 = vxpose.xlu0.b32.cont [9/16] 0.0, 128
    %1183 = vxpose.xlu0.b32.cont [10/16] 0.0, 128
    %1184 = vxpose.xlu0.b32.cont [11/16] 0.0, 128
    %1185 = vxpose.xlu0.b32.cont [12/16] 0.0, 128
    %1186 = vxpose.xlu0.b32.cont [13/16] 0.0, 128
    %1187 = vxpose.xlu0.b32.cont [14/16] 0.0, 128
    %1188 = vxpose.xlu0.b32.cont [15/16] 0.0, 128
    %1189 = vxpose.xlu0.b32.end [16/16] 0.0, 128
    %v1190 = vpop.trf.xlu0
    %v1191 = vpop.trf.xlu0
    %v1192 = vpop.trf.xlu0
    %v1193 = vpop.trf.xlu0
    %v1194 = vpop.trf.xlu0
    %v1195 = vpop.trf.xlu0
    %v1196 = vpop.trf.xlu0
    %v1197 = vpop.trf.xlu0
    %v1198 = vpop.trf.xlu0
    %v1199 = vpop.trf.xlu0
    %v1200 = vpop.trf.xlu0
    %v1201 = vpop.trf.xlu0
    %v1202 = vpop.trf.xlu0
    %v1203 = vpop.trf.xlu0
    %v1204 = vpop.trf.xlu0
    %v1205 = vpop.trf.xlu0
    %vm1206 = vcmask 64512
    %v1208 = vsel %vm1206, %v1190, 0
    %1210 = vmatpush.msra.mxu0 0.0
    %1211 = vmatpush.msra.mxu0 0.0
    %1212 = vmatpush.msra.mxu0 0.0
    %1213 = vmatpush.msra.mxu0 0.0
    %1214 = vmatpush.msra.mxu0 0.0
    %1215 = vmatpush.msra.mxu0 0.0
    %1216 = vmatpush.msra.mxu0 0.0
    %1217 = vmatpush.msra.mxu0 0.0
    %1218 = vmatpush.msra.mxu0 0.0
    %1219 = vmatpush.msra.mxu0 0.0
    %1220 = vmatpush.msra.mxu0 0.0
    %1221 = vmatpush.msra.mxu0 0.0
    %1222 = vmatpush.msra.mxu0 0.0
    %1223 = vmatpush.msra.mxu0 0.0
    %1224 = vmatpush.msra.mxu0 0.0
    %1225 = vmatpush.msra.mxu0 %v1088
    %1226 = vmatmul.f32.gmra.mxu0 %v1208
    %v1227 = vpop.f32.mrf.mxu0
    %v1228 = vadd.f32 0.0, %v1227
    %1229 = vdwg.mxu0
    %1230 = vmatpush.msra.mxu0 0.0
    %1231 = vmatpush.msra.mxu0 0.0
    %1232 = vmatpush.msra.mxu0 0.0
    %1233 = vmatpush.msra.mxu0 0.0
    %1234 = vmatpush.msra.mxu0 0.0
    %1235 = vmatpush.msra.mxu0 0.0
    %1236 = vmatpush.msra.mxu0 0.0
    %1237 = vmatpush.msra.mxu0 0.0
    %1238 = vmatpush.msra.mxu0 0.0
    %1239 = vmatpush.msra.mxu0 0.0
    %1240 = vmatpush.msra.mxu0 0.0
    %1241 = vmatpush.msra.mxu0 0.0
    %1242 = vmatpush.msra.mxu0 0.0
    %1243 = vmatpush.msra.mxu0 0.0
    %1244 = vmatpush.msra.mxu0 0.0
    %1245 = vmatpush.msra.mxu0 1.0
    %1246 = vmatmul.f32.gmra.mxu0 %v1208
    %v1247 = vpop.f32.mrf.mxu0
    %v1248 = vadd.f32 0.0, %v1247
    %1249 = vdwg.mxu0
    %v1250 = vmax.f32 %v1248, 1.0
    %1252 = vset.pattern.permute.xlu0 0
    %1253 = vperm.xlu0 %1252, %v1250
    %v1254 = vpop.permute.xlu0 %1253
    %v1256 = vrcp.pop %v1254
    %v1257 = vmul.f32 %v1254, %v1256
    %v1258 = vsub.f32 1.0, %v1257
    %v1259 = vmul.f32 %v1256, %v1258
    %v1260 = vadd.f32 %v1256, %v1259
    %vm1261 = vweird.f32 %v1254
    %vm1262 = vweird.f32 %v1256
    %vm1263 = vmor %vm1261, %vm1262
    %v1264 = vsel %vm1263, %v1256, %v1260
    %v1265 = vand.u32 2147483647, %v1254
    %vm1266 = vcmp.eq.f32.partialorder %v1265, 8.507059e+37
    %v1267 = vand.u32 %v1254, 2147483648
    %v1268 = vor.u32 1.1754944e-38, %v1267
    %v1269 = vsel %vm1266, %v1268, %v1264
    %v1270 = vmul.f32 %v1228, %v1269
    %vm1271 = vcmp.gt.f32.partialorder %v1248, 0.0
    %v1272 = vsel %vm1271, 1, 0
    %1273 = vset.pattern.permute.xlu0 0
    %1274 = vperm.xlu0 %1273, %v1272
    %v1275 = vpop.permute.xlu0 %1274
    %vm1276 = vcmp.eq.s32.totalorder %v1275, 1
    %v1277 = vsel %vm1276, %v1270, %v1088
    %v1278 = vmul.f32 %v1277, %v1277
    %v1279 = vsel %vm1092, %v1278, 0.0
    %1280 = vadd.xlane.f32.xlu0 %v1279
    %v1281 = vpop.xlane.xlu0 %1280
    %v1282 = vmul.f32 %v1277, -2.0
    %v1284 = vsel %vm1097, %v1281, 0
    %1286 = vmatpush.xpose.msra.mxu0 0.0
    %1287 = vmatpush.xpose.msra.mxu0 0.0
    %1288 = vmatpush.xpose.msra.mxu0 0.0
    %1289 = vmatpush.xpose.msra.mxu0 0.0
    %1290 = vmatpush.xpose.msra.mxu0 0.0
    %1291 = vmatpush.xpose.msra.mxu0 0.0
    %1292 = vmatpush.xpose.msra.mxu0 0.0
    %1293 = vmatpush.xpose.msra.mxu0 0.0
    %1294 = vmatpush.xpose.msra.mxu0 0.0
    %1295 = vmatpush.xpose.msra.mxu0 0.0
    %1296 = vmatpush.xpose.msra.mxu0 0.0
    %1297 = vmatpush.xpose.msra.mxu0 0.0
    %1298 = vmatpush.xpose.msra.mxu0 0.0
    %1299 = vmatpush.xpose.msra.mxu0 0.0
    %1300 = vmatpush.xpose.msra.mxu0 0.0
    %1301 = vmatpush.xpose.msra.mxu0 %v1282
    %1302 = vmatmul.f32.gmra.mxu0 %v1088
    %v1303 = vpop.f32.mrf.mxu0
    %v1304 = vadd.f32 0.0, %v1303
    %1305 = vdwg.mxu0
    %1306 = vmatpush.xpose.msra.mxu0 0.0
    %1307 = vmatpush.xpose.msra.mxu0 0.0
    %1308 = vmatpush.xpose.msra.mxu0 0.0
    %1309 = vmatpush.xpose.msra.mxu0 0.0
    %1310 = vmatpush.xpose.msra.mxu0 0.0
    %1311 = vmatpush.xpose.msra.mxu0 0.0
    %1312 = vmatpush.xpose.msra.mxu0 0.0
    %1313 = vmatpush.xpose.msra.mxu0 0.0
    %1314 = vmatpush.xpose.msra.mxu0 0.0
    %1315 = vmatpush.xpose.msra.mxu0 0.0
    %1316 = vmatpush.xpose.msra.mxu0 0.0
    %1317 = vmatpush.xpose.msra.mxu0 0.0
    %1318 = vmatpush.xpose.msra.mxu0 0.0
    %1319 = vmatpush.xpose.msra.mxu0 0.0
    %1320 = vmatpush.xpose.msra.mxu0 0.0
    %1321 = vmatpush.xpose.msra.mxu0 %v1284
    %1322 = vmatmul.f32.gmra.mxu0 %v1099
    %v1323 = vpop.f32.mrf.mxu0
    %v1324 = vadd.f32 %v1304, %v1323
    %1325 = vdwg.mxu0
    %1327 = vrot.lane.b32.xlu0 %v1324, 1
    %v1328 = vpop.permute.xlu0 %1327
    %vm1330 = vcmp.lt.f32.partialorder %v1324, %v1328
    %v1331 = vsel %vm1330, %v1324, %v1328
    %v1332 = vsel %vm1330, 1, 0
    %1334 = vrot.lane.b32.xlu0 %v1331, 1
    %v1335 = vpop.permute.xlu0 %1334
    %vm1337 = vcmp.lt.f32.partialorder %v1324, %v1335
    %v1338 = vsel %vm1337, %v1324, %v1335
    %1339 = vrot.lane.b32.xlu0 %v1332, 1
    %v1340 = vpop.permute.xlu0 %1339
    %v1341 = vsel %vm1337, 2, %v1340
    %1343 = vrot.lane.b32.xlu0 %v1338, 1
    %v1344 = vpop.permute.xlu0 %1343
    %vm1346 = vcmp.lt.f32.partialorder %v1324, %v1344
    %1347 = vrot.lane.b32.xlu0 %v1341, 1
    %v1348 = vpop.permute.xlu0 %1347
    %v1349 = vsel %vm1346, 3, %v1348
    %1350 = vset.pattern.permute.xlu0 3
    %1351 = vperm.xlu0 %1350, %v1349
    %v1352 = vpop.permute.xlu0 %1351
    %vm1353 = vcmp.eq.s32.totalorder %v1352, %v1090
    %v1354 = vsel %vm1353, 1, 0
    %v1355 = vcvt.s32.f32 %v1354
    %1356 = vxpose.xlu0.b32.start [1/16] %v1355, 128
    %1357 = vxpose.xlu0.b32.cont [2/16] 0.0, 128
    %1358 = vxpose.xlu0.b32.cont [3/16] 0.0, 128
    %1359 = vxpose.xlu0.b32.cont [4/16] 0.0, 128
    %1360 = vxpose.xlu0.b32.cont [5/16] 0.0, 128
    %1361 = vxpose.xlu0.b32.cont [6/16] 0.0, 128
    %1362 = vxpose.xlu0.b32.cont [7/16] 0.0, 128
    %1363 = vxpose.xlu0.b32.cont [8/16] 0.0, 128
    %1364 = vxpose.xlu0.b32.cont [9/16] 0.0, 128
    %1365 = vxpose.xlu0.b32.cont [10/16] 0.0, 128
    %1366 = vxpose.xlu0.b32.cont [11/16] 0.0, 128
    %1367 = vxpose.xlu0.b32.cont [12/16] 0.0, 128
    %1368 = vxpose.xlu0.b32.cont [13/16] 0.0, 128
    %1369 = vxpose.xlu0.b32.cont [14/16] 0.0, 128
    %1370 = vxpose.xlu0.b32.cont [15/16] 0.0, 128
    %1371 = vxpose.xlu0.b32.end [16/16] 0.0, 128
    %v1372 = vpop.trf.xlu0
    %v1373 = vpop.trf.xlu0
    %v1374 = vpop.trf.xlu0
    %v1375 = vpop.trf.xlu0
    %v1376 = vpop.trf.xlu0
    %v1377 = vpop.trf.xlu0
    %v1378 = vpop.trf.xlu0
    %v1379 = vpop.trf.xlu0
    %v1380 = vpop.trf.xlu0
    %v1381 = vpop.trf.xlu0
    %v1382 = vpop.trf.xlu0
    %v1383 = vpop.trf.xlu0
    %v1384 = vpop.trf.xlu0
    %v1385 = vpop.trf.xlu0
    %v1386 = vpop.trf.xlu0
    %v1387 = vpop.trf.xlu0
    %v1389 = vsel %vm1206, %v1372, 0
    %1391 = vmatpush.msra.mxu0 0.0
    %1392 = vmatpush.msra.mxu0 0.0
    %1393 = vmatpush.msra.mxu0 0.0
    %1394 = vmatpush.msra.mxu0 0.0
    %1395 = vmatpush.msra.mxu0 0.0
    %1396 = vmatpush.msra.mxu0 0.0
    %1397 = vmatpush.msra.mxu0 0.0
    %1398 = vmatpush.msra.mxu0 0.0
    %1399 = vmatpush.msra.mxu0 0.0
    %1400 = vmatpush.msra.mxu0 0.0
    %1401 = vmatpush.msra.mxu0 0.0
    %1402 = vmatpush.msra.mxu0 0.0
    %1403 = vmatpush.msra.mxu0 0.0
    %1404 = vmatpush.msra.mxu0 0.0
    %1405 = vmatpush.msra.mxu0 0.0
    %1406 = vmatpush.msra.mxu0 %v1088
    %1407 = vmatmul.f32.gmra.mxu0 %v1389
    %v1408 = vpop.f32.mrf.mxu0
    %v1409 = vadd.f32 0.0, %v1408
    %1410 = vdwg.mxu0
    %1411 = vmatpush.msra.mxu0 0.0
    %1412 = vmatpush.msra.mxu0 0.0
    %1413 = vmatpush.msra.mxu0 0.0
    %1414 = vmatpush.msra.mxu0 0.0
    %1415 = vmatpush.msra.mxu0 0.0
    %1416 = vmatpush.msra.mxu0 0.0
    %1417 = vmatpush.msra.mxu0 0.0
    %1418 = vmatpush.msra.mxu0 0.0
    %1419 = vmatpush.msra.mxu0 0.0
    %1420 = vmatpush.msra.mxu0 0.0
    %1421 = vmatpush.msra.mxu0 0.0
    %1422 = vmatpush.msra.mxu0 0.0
    %1423 = vmatpush.msra.mxu0 0.0
    %1424 = vmatpush.msra.mxu0 0.0
    %1425 = vmatpush.msra.mxu0 0.0
    %1426 = vmatpush.msra.mxu0 1.0
    %1427 = vmatmul.f32.gmra.mxu0 %v1389
    %v1428 = vpop.f32.mrf.mxu0
    %v1429 = vadd.f32 0.0, %v1428
    %1430 = vdwg.mxu0
    %v1431 = vmax.f32 %v1429, 1.0
    %1433 = vset.pattern.permute.xlu0 0
    %1434 = vperm.xlu0 %1433, %v1431
    %v1435 = vpop.permute.xlu0 %1434
    %v1437 = vrcp.pop %v1435
    %v1438 = vmul.f32 %v1435, %v1437
    %v1439 = vsub.f32 1.0, %v1438
    %v1440 = vmul.f32 %v1437, %v1439
    %v1441 = vadd.f32 %v1437, %v1440
    %vm1442 = vweird.f32 %v1435
    %vm1443 = vweird.f32 %v1437
    %vm1444 = vmor %vm1442, %vm1443
    %v1445 = vsel %vm1444, %v1437, %v1441
    %v1446 = vand.u32 2147483647, %v1435
    %vm1447 = vcmp.eq.f32.partialorder %v1446, 8.507059e+37
    %v1448 = vand.u32 %v1435, 2147483648
    %v1449 = vor.u32 1.1754944e-38, %v1448
    %v1450 = vsel %vm1447, %v1449, %v1445
    %v1451 = vmul.f32 %v1409, %v1450
    %vm1452 = vcmp.gt.f32.partialorder %v1429, 0.0
    %v1453 = vsel %vm1452, 1, 0
    %1454 = vset.pattern.permute.xlu0 0
    %1455 = vperm.xlu0 %1454, %v1453
    %v1456 = vpop.permute.xlu0 %1455
    %vm1457 = vcmp.eq.s32.totalorder %v1456, 1
    %v1458 = vsel %vm1457, %v1451, %v1277
    %v1459 = vmul.f32 %v1458, %v1458
    %v1460 = vsel %vm1092, %v1459, 0.0
    %1461 = vadd.xlane.f32.xlu0 %v1460
    %v1462 = vpop.xlane.xlu0 %1461
    %v1463 = vmul.f32 %v1458, -2.0
    %v1465 = vsel %vm1097, %v1462, 0
    %1467 = vmatpush.xpose.msra.mxu0 0.0
    %1468 = vmatpush.xpose.msra.mxu0 0.0
    %1469 = vmatpush.xpose.msra.mxu0 0.0
    %1470 = vmatpush.xpose.msra.mxu0 0.0
    %1471 = vmatpush.xpose.msra.mxu0 0.0
    %1472 = vmatpush.xpose.msra.mxu0 0.0
    %1473 = vmatpush.xpose.msra.mxu0 0.0
    %1474 = vmatpush.xpose.msra.mxu0 0.0
    %1475 = vmatpush.xpose.msra.mxu0 0.0
    %1476 = vmatpush.xpose.msra.mxu0 0.0
    %1477 = vmatpush.xpose.msra.mxu0 0.0
    %1478 = vmatpush.xpose.msra.mxu0 0.0
    %1479 = vmatpush.xpose.msra.mxu0 0.0
    %1480 = vmatpush.xpose.msra.mxu0 0.0
    %1481 = vmatpush.xpose.msra.mxu0 0.0
    %1482 = vmatpush.xpose.msra.mxu0 %v1463
    %1483 = vmatmul.f32.gmra.mxu0 %v1088
    %v1484 = vpop.f32.mrf.mxu0
    %v1485 = vadd.f32 0.0, %v1484
    %1486 = vdwg.mxu0
    %1487 = vmatpush.xpose.msra.mxu0 0.0
    %1488 = vmatpush.xpose.msra.mxu0 0.0
    %1489 = vmatpush.xpose.msra.mxu0 0.0
    %1490 = vmatpush.xpose.msra.mxu0 0.0
    %1491 = vmatpush.xpose.msra.mxu0 0.0
    %1492 = vmatpush.xpose.msra.mxu0 0.0
    %1493 = vmatpush.xpose.msra.mxu0 0.0
    %1494 = vmatpush.xpose.msra.mxu0 0.0
    %1495 = vmatpush.xpose.msra.mxu0 0.0
    %1496 = vmatpush.xpose.msra.mxu0 0.0
    %1497 = vmatpush.xpose.msra.mxu0 0.0
    %1498 = vmatpush.xpose.msra.mxu0 0.0
    %1499 = vmatpush.xpose.msra.mxu0 0.0
    %1500 = vmatpush.xpose.msra.mxu0 0.0
    %1501 = vmatpush.xpose.msra.mxu0 0.0
    %1502 = vmatpush.xpose.msra.mxu0 %v1465
    %1503 = vmatmul.f32.gmra.mxu0 %v1099
    %v1504 = vpop.f32.mrf.mxu0
    %v1505 = vadd.f32 %v1485, %v1504
    %1506 = vdwg.mxu0
    %1508 = vrot.lane.b32.xlu0 %v1505, 1
    %v1509 = vpop.permute.xlu0 %1508
    %vm1511 = vcmp.lt.f32.partialorder %v1505, %v1509
    %v1512 = vsel %vm1511, %v1505, %v1509
    %v1513 = vsel %vm1511, 1, 0
    %1515 = vrot.lane.b32.xlu0 %v1512, 1
    %v1516 = vpop.permute.xlu0 %1515
    %vm1518 = vcmp.lt.f32.partialorder %v1505, %v1516
    %v1519 = vsel %vm1518, %v1505, %v1516
    %1520 = vrot.lane.b32.xlu0 %v1513, 1
    %v1521 = vpop.permute.xlu0 %1520
    %v1522 = vsel %vm1518, 2, %v1521
    %1524 = vrot.lane.b32.xlu0 %v1519, 1
    %v1525 = vpop.permute.xlu0 %1524
    %vm1527 = vcmp.lt.f32.partialorder %v1505, %v1525
    %1528 = vrot.lane.b32.xlu0 %v1522, 1
    %v1529 = vpop.permute.xlu0 %1528
    %v1530 = vsel %vm1527, 3, %v1529
    %1531 = vset.pattern.permute.xlu0 3
    %1532 = vperm.xlu0 %1531, %v1530
    %v1533 = vpop.permute.xlu0 %1532
    %vm1534 = vcmp.eq.s32.totalorder %v1533, %v1090
    %v1535 = vsel %vm1534, 1, 0
    %v1536 = vcvt.s32.f32 %v1535
    %1537 = vxpose.xlu0.b32.start [1/16] %v1536, 128
    %1538 = vxpose.xlu0.b32.cont [2/16] 0.0, 128
    %1539 = vxpose.xlu0.b32.cont [3/16] 0.0, 128
    %1540 = vxpose.xlu0.b32.cont [4/16] 0.0, 128
    %1541 = vxpose.xlu0.b32.cont [5/16] 0.0, 128
    %1542 = vxpose.xlu0.b32.cont [6/16] 0.0, 128
    %1543 = vxpose.xlu0.b32.cont [7/16] 0.0, 128
    %1544 = vxpose.xlu0.b32.cont [8/16] 0.0, 128
    %1545 = vxpose.xlu0.b32.cont [9/16] 0.0, 128
    %1546 = vxpose.xlu0.b32.cont [10/16] 0.0, 128
    %1547 = vxpose.xlu0.b32.cont [11/16] 0.0, 128
    %1548 = vxpose.xlu0.b32.cont [12/16] 0.0, 128
    %1549 = vxpose.xlu0.b32.cont [13/16] 0.0, 128
    %1550 = vxpose.xlu0.b32.cont [14/16] 0.0, 128
    %1551 = vxpose.xlu0.b32.cont [15/16] 0.0, 128
    %1552 = vxpose.xlu0.b32.end [16/16] 0.0, 128
    %v1553 = vpop.trf.xlu0
    %v1554 = vpop.trf.xlu0
    %v1555 = vpop.trf.xlu0
    %v1556 = vpop.trf.xlu0
    %v1557 = vpop.trf.xlu0
    %v1558 = vpop.trf.xlu0
    %v1559 = vpop.trf.xlu0
    %v1560 = vpop.trf.xlu0
    %v1561 = vpop.trf.xlu0
    %v1562 = vpop.trf.xlu0
    %v1563 = vpop.trf.xlu0
    %v1564 = vpop.trf.xlu0
    %v1565 = vpop.trf.xlu0
    %v1566 = vpop.trf.xlu0
    %v1567 = vpop.trf.xlu0
    %v1568 = vpop.trf.xlu0
    %v1570 = vsel %vm1206, %v1553, 0
    %1572 = vmatpush.msra.mxu0 0.0
    %1573 = vmatpush.msra.mxu0 0.0
    %1574 = vmatpush.msra.mxu0 0.0
    %1575 = vmatpush.msra.mxu0 0.0
    %1576 = vmatpush.msra.mxu0 0.0
    %1577 = vmatpush.msra.mxu0 0.0
    %1578 = vmatpush.msra.mxu0 0.0
    %1579 = vmatpush.msra.mxu0 0.0
    %1580 = vmatpush.msra.mxu0 0.0
    %1581 = vmatpush.msra.mxu0 0.0
    %1582 = vmatpush.msra.mxu0 0.0
    %1583 = vmatpush.msra.mxu0 0.0
    %1584 = vmatpush.msra.mxu0 0.0
    %1585 = vmatpush.msra.mxu0 0.0
    %1586 = vmatpush.msra.mxu0 0.0
    %1587 = vmatpush.msra.mxu0 %v1088
    %1588 = vmatmul.f32.gmra.mxu0 %v1570
    %v1589 = vpop.f32.mrf.mxu0
    %v1590 = vadd.f32 0.0, %v1589
    %1591 = vdwg.mxu0
    %1592 = vmatpush.msra.mxu0 0.0
    %1593 = vmatpush.msra.mxu0 0.0
    %1594 = vmatpush.msra.mxu0 0.0
    %1595 = vmatpush.msra.mxu0 0.0
    %1596 = vmatpush.msra.mxu0 0.0
    %1597 = vmatpush.msra.mxu0 0.0
    %1598 = vmatpush.msra.mxu0 0.0
    %1599 = vmatpush.msra.mxu0 0.0
    %1600 = vmatpush.msra.mxu0 0.0
    %1601 = vmatpush.msra.mxu0 0.0
    %1602 = vmatpush.msra.mxu0 0.0
    %1603 = vmatpush.msra.mxu0 0.0
    %1604 = vmatpush.msra.mxu0 0.0
    %1605 = vmatpush.msra.mxu0 0.0
    %1606 = vmatpush.msra.mxu0 0.0
    %1607 = vmatpush.msra.mxu0 1.0
    %1608 = vmatmul.f32.gmra.mxu0 %v1570
    %v1609 = vpop.f32.mrf.mxu0
    %v1610 = vadd.f32 0.0, %v1609
    %1611 = vdwg.mxu0
    %v1612 = vmax.f32 %v1610, 1.0
    %1614 = vset.pattern.permute.xlu0 0
    %1615 = vperm.xlu0 %1614, %v1612
    %v1616 = vpop.permute.xlu0 %1615
    %v1618 = vrcp.pop %v1616
    %v1619 = vmul.f32 %v1616, %v1618
    %v1620 = vsub.f32 1.0, %v1619
    %v1621 = vmul.f32 %v1618, %v1620
    %v1622 = vadd.f32 %v1618, %v1621
    %vm1623 = vweird.f32 %v1616
    %vm1624 = vweird.f32 %v1618
    %vm1625 = vmor %vm1623, %vm1624
    %v1626 = vsel %vm1625, %v1618, %v1622
    %v1627 = vand.u32 2147483647, %v1616
    %vm1628 = vcmp.eq.f32.partialorder %v1627, 8.507059e+37
    %v1629 = vand.u32 %v1616, 2147483648
    %v1630 = vor.u32 1.1754944e-38, %v1629
    %v1631 = vsel %vm1628, %v1630, %v1626
    %v1632 = vmul.f32 %v1590, %v1631
    %vm1633 = vcmp.gt.f32.partialorder %v1610, 0.0
    %v1634 = vsel %vm1633, 1, 0
    %1635 = vset.pattern.permute.xlu0 0
    %1636 = vperm.xlu0 %1635, %v1634
    %v1637 = vpop.permute.xlu0 %1636
    %vm1638 = vcmp.eq.s32.totalorder %v1637, 1
    %v1639 = vsel %vm1638, %v1632, %v1458
    %v1640 = vmul.f32 %v1639, %v1639
    %v1641 = vsel %vm1092, %v1640, 0.0
    %1642 = vadd.xlane.f32.xlu0 %v1641
    %v1643 = vpop.xlane.xlu0 %1642
    %v1644 = vmul.f32 %v1639, -2.0
    %v1646 = vsel %vm1097, %v1643, 0
    %1648 = vmatpush.xpose.msra.mxu0 0.0
    %1649 = vmatpush.xpose.msra.mxu0 0.0
    %1650 = vmatpush.xpose.msra.mxu0 0.0
    %1651 = vmatpush.xpose.msra.mxu0 0.0
    %1652 = vmatpush.xpose.msra.mxu0 0.0
    %1653 = vmatpush.xpose.msra.mxu0 0.0
    %1654 = vmatpush.xpose.msra.mxu0 0.0
    %1655 = vmatpush.xpose.msra.mxu0 0.0
    %1656 = vmatpush.xpose.msra.mxu0 0.0
    %1657 = vmatpush.xpose.msra.mxu0 0.0
    %1658 = vmatpush.xpose.msra.mxu0 0.0
    %1659 = vmatpush.xpose.msra.mxu0 0.0
    %1660 = vmatpush.xpose.msra.mxu0 0.0
    %1661 = vmatpush.xpose.msra.mxu0 0.0
    %1662 = vmatpush.xpose.msra.mxu0 0.0
    %1663 = vmatpush.xpose.msra.mxu0 %v1644
    %1664 = vmatmul.f32.gmra.mxu0 %v1088
    %v1665 = vpop.f32.mrf.mxu0
    %v1666 = vadd.f32 0.0, %v1665
    %1667 = vdwg.mxu0
    %1668 = vmatpush.xpose.msra.mxu0 0.0
    %1669 = vmatpush.xpose.msra.mxu0 0.0
    %1670 = vmatpush.xpose.msra.mxu0 0.0
    %1671 = vmatpush.xpose.msra.mxu0 0.0
    %1672 = vmatpush.xpose.msra.mxu0 0.0
    %1673 = vmatpush.xpose.msra.mxu0 0.0
    %1674 = vmatpush.xpose.msra.mxu0 0.0
    %1675 = vmatpush.xpose.msra.mxu0 0.0
    %1676 = vmatpush.xpose.msra.mxu0 0.0
    %1677 = vmatpush.xpose.msra.mxu0 0.0
    %1678 = vmatpush.xpose.msra.mxu0 0.0
    %1679 = vmatpush.xpose.msra.mxu0 0.0
    %1680 = vmatpush.xpose.msra.mxu0 0.0
    %1681 = vmatpush.xpose.msra.mxu0 0.0
    %1682 = vmatpush.xpose.msra.mxu0 0.0
    %1683 = vmatpush.xpose.msra.mxu0 %v1646
    %1684 = vmatmul.f32.gmra.mxu0 %v1099
    %v1685 = vpop.f32.mrf.mxu0
    %v1686 = vadd.f32 %v1666, %v1685
    %1687 = vdwg.mxu0
    %1689 = vrot.lane.b32.xlu0 %v1686, 1
    %v1690 = vpop.permute.xlu0 %1689
    %vm1692 = vcmp.lt.f32.partialorder %v1686, %v1690
    %v1693 = vsel %vm1692, %v1686, %v1690
    %v1694 = vsel %vm1692, 1, 0
    %1696 = vrot.lane.b32.xlu0 %v1693, 1
    %v1697 = vpop.permute.xlu0 %1696
    %vm1699 = vcmp.lt.f32.partialorder %v1686, %v1697
    %v1700 = vsel %vm1699, %v1686, %v1697
    %1701 = vrot.lane.b32.xlu0 %v1694, 1
    %v1702 = vpop.permute.xlu0 %1701
    %v1703 = vsel %vm1699, 2, %v1702
    %1705 = vrot.lane.b32.xlu0 %v1700, 1
    %v1706 = vpop.permute.xlu0 %1705
    %vm1708 = vcmp.lt.f32.partialorder %v1686, %v1706
    %1709 = vrot.lane.b32.xlu0 %v1703, 1
    %v1710 = vpop.permute.xlu0 %1709
    %v1711 = vsel %vm1708, 3, %v1710
    %1712 = vset.pattern.permute.xlu0 3
    %1713 = vperm.xlu0 %1712, %v1711
    %v1714 = vpop.permute.xlu0 %1713
    %vm1715 = vcmp.eq.s32.totalorder %v1714, %v1090
    %v1716 = vsel %vm1715, 1, 0
    %v1717 = vcvt.s32.f32 %v1716
    %1718 = vxpose.xlu0.b32.start [1/16] %v1717, 128
    %1719 = vxpose.xlu0.b32.cont [2/16] 0.0, 128
    %1720 = vxpose.xlu0.b32.cont [3/16] 0.0, 128
    %1721 = vxpose.xlu0.b32.cont [4/16] 0.0, 128
    %1722 = vxpose.xlu0.b32.cont [5/16] 0.0, 128
    %1723 = vxpose.xlu0.b32.cont [6/16] 0.0, 128
    %1724 = vxpose.xlu0.b32.cont [7/16] 0.0, 128
    %1725 = vxpose.xlu0.b32.cont [8/16] 0.0, 128
    %1726 = vxpose.xlu0.b32.cont [9/16] 0.0, 128
    %1727 = vxpose.xlu0.b32.cont [10/16] 0.0, 128
    %1728 = vxpose.xlu0.b32.cont [11/16] 0.0, 128
    %1729 = vxpose.xlu0.b32.cont [12/16] 0.0, 128
    %1730 = vxpose.xlu0.b32.cont [13/16] 0.0, 128
    %1731 = vxpose.xlu0.b32.cont [14/16] 0.0, 128
    %1732 = vxpose.xlu0.b32.cont [15/16] 0.0, 128
    %1733 = vxpose.xlu0.b32.end [16/16] 0.0, 128
    %v1734 = vpop.trf.xlu0
    %v1735 = vpop.trf.xlu0
    %v1736 = vpop.trf.xlu0
    %v1737 = vpop.trf.xlu0
    %v1738 = vpop.trf.xlu0
    %v1739 = vpop.trf.xlu0
    %v1740 = vpop.trf.xlu0
    %v1741 = vpop.trf.xlu0
    %v1742 = vpop.trf.xlu0
    %v1743 = vpop.trf.xlu0
    %v1744 = vpop.trf.xlu0
    %v1745 = vpop.trf.xlu0
    %v1746 = vpop.trf.xlu0
    %v1747 = vpop.trf.xlu0
    %v1748 = vpop.trf.xlu0
    %v1749 = vpop.trf.xlu0
    %v1751 = vsel %vm1206, %v1734, 0
    %1753 = vmatpush.msra.mxu0 0.0
    %1754 = vmatpush.msra.mxu0 0.0
    %1755 = vmatpush.msra.mxu0 0.0
    %1756 = vmatpush.msra.mxu0 0.0
    %1757 = vmatpush.msra.mxu0 0.0
    %1758 = vmatpush.msra.mxu0 0.0
    %1759 = vmatpush.msra.mxu0 0.0
    %1760 = vmatpush.msra.mxu0 0.0
    %1761 = vmatpush.msra.mxu0 0.0
    %1762 = vmatpush.msra.mxu0 0.0
    %1763 = vmatpush.msra.mxu0 0.0
    %1764 = vmatpush.msra.mxu0 0.0
    %1765 = vmatpush.msra.mxu0 0.0
    %1766 = vmatpush.msra.mxu0 0.0
    %1767 = vmatpush.msra.mxu0 0.0
    %1768 = vmatpush.msra.mxu0 %v1088
    %1769 = vmatmul.f32.gmra.mxu0 %v1751
    %v1770 = vpop.f32.mrf.mxu0
    %v1771 = vadd.f32 0.0, %v1770
    %1772 = vdwg.mxu0
    %1773 = vmatpush.msra.mxu0 0.0
    %1774 = vmatpush.msra.mxu0 0.0
    %1775 = vmatpush.msra.mxu0 0.0
    %1776 = vmatpush.msra.mxu0 0.0
    %1777 = vmatpush.msra.mxu0 0.0
    %1778 = vmatpush.msra.mxu0 0.0
    %1779 = vmatpush.msra.mxu0 0.0
    %1780 = vmatpush.msra.mxu0 0.0
    %1781 = vmatpush.msra.mxu0 0.0
    %1782 = vmatpush.msra.mxu0 0.0
    %1783 = vmatpush.msra.mxu0 0.0
    %1784 = vmatpush.msra.mxu0 0.0
    %1785 = vmatpush.msra.mxu0 0.0
    %1786 = vmatpush.msra.mxu0 0.0
    %1787 = vmatpush.msra.mxu0 0.0
    %1788 = vmatpush.msra.mxu0 1.0
    %1789 = vmatmul.f32.gmra.mxu0 %v1751
    %v1790 = vpop.f32.mrf.mxu0
    %v1791 = vadd.f32 0.0, %v1790
    %1792 = vdwg.mxu0
    %v1793 = vmax.f32 %v1791, 1.0
    %1795 = vset.pattern.permute.xlu0 0
    %1796 = vperm.xlu0 %1795, %v1793
    %v1797 = vpop.permute.xlu0 %1796
    %v1799 = vrcp.pop %v1797
    %v1800 = vmul.f32 %v1797, %v1799
    %v1801 = vsub.f32 1.0, %v1800
    %v1802 = vmul.f32 %v1799, %v1801
    %v1803 = vadd.f32 %v1799, %v1802
    %vm1804 = vweird.f32 %v1797
    %vm1805 = vweird.f32 %v1799
    %vm1806 = vmor %vm1804, %vm1805
    %v1807 = vsel %vm1806, %v1799, %v1803
    %v1808 = vand.u32 2147483647, %v1797
    %vm1809 = vcmp.eq.f32.partialorder %v1808, 8.507059e+37
    %v1810 = vand.u32 %v1797, 2147483648
    %v1811 = vor.u32 1.1754944e-38, %v1810
    %v1812 = vsel %vm1809, %v1811, %v1807
    %v1813 = vmul.f32 %v1771, %v1812
    %vm1814 = vcmp.gt.f32.partialorder %v1791, 0.0
    %v1815 = vsel %vm1814, 1, 0
    %1816 = vset.pattern.permute.xlu0 0
    %1817 = vperm.xlu0 %1816, %v1815
    %v1818 = vpop.permute.xlu0 %1817
    %vm1819 = vcmp.eq.s32.totalorder %v1818, 1
    %v1820 = vsel %vm1819, %v1813, %v1639
    %v1821 = vmul.f32 %v1820, %v1820
    %v1822 = vsel %vm1092, %v1821, 0.0
    %1823 = vadd.xlane.f32.xlu0 %v1822
    %v1824 = vpop.xlane.xlu0 %1823
    %v1825 = vmul.f32 %v1820, -2.0
    %v1827 = vsel %vm1097, %v1824, 0
    %1829 = vmatpush.xpose.msra.mxu0 0.0
    %1830 = vmatpush.xpose.msra.mxu0 0.0
    %1831 = vmatpush.xpose.msra.mxu0 0.0
    %1832 = vmatpush.xpose.msra.mxu0 0.0
    %1833 = vmatpush.xpose.msra.mxu0 0.0
    %1834 = vmatpush.xpose.msra.mxu0 0.0
    %1835 = vmatpush.xpose.msra.mxu0 0.0
    %1836 = vmatpush.xpose.msra.mxu0 0.0
    %1837 = vmatpush.xpose.msra.mxu0 0.0
    %1838 = vmatpush.xpose.msra.mxu0 0.0
    %1839 = vmatpush.xpose.msra.mxu0 0.0
    %1840 = vmatpush.xpose.msra.mxu0 0.0
    %1841 = vmatpush.xpose.msra.mxu0 0.0
    %1842 = vmatpush.xpose.msra.mxu0 0.0
    %1843 = vmatpush.xpose.msra.mxu0 0.0
    %1844 = vmatpush.xpose.msra.mxu0 %v1825
    %1845 = vmatmul.f32.gmra.mxu0 %v1088
    %v1846 = vpop.f32.mrf.mxu0
    %v1847 = vadd.f32 0.0, %v1846
    %1848 = vdwg.mxu0
    %1849 = vmatpush.xpose.msra.mxu0 0.0
    %1850 = vmatpush.xpose.msra.mxu0 0.0
    %1851 = vmatpush.xpose.msra.mxu0 0.0
    %1852 = vmatpush.xpose.msra.mxu0 0.0
    %1853 = vmatpush.xpose.msra.mxu0 0.0
    %1854 = vmatpush.xpose.msra.mxu0 0.0
    %1855 = vmatpush.xpose.msra.mxu0 0.0
    %1856 = vmatpush.xpose.msra.mxu0 0.0
    %1857 = vmatpush.xpose.msra.mxu0 0.0
    %1858 = vmatpush.xpose.msra.mxu0 0.0
    %1859 = vmatpush.xpose.msra.mxu0 0.0
    %1860 = vmatpush.xpose.msra.mxu0 0.0
    %1861 = vmatpush.xpose.msra.mxu0 0.0
    %1862 = vmatpush.xpose.msra.mxu0 0.0
    %1863 = vmatpush.xpose.msra.mxu0 0.0
    %1864 = vmatpush.xpose.msra.mxu0 %v1827
    %1865 = vmatmul.f32.gmra.mxu0 %v1099
    %v1866 = vpop.f32.mrf.mxu0
    %v1867 = vadd.f32 %v1847, %v1866
    %1868 = vdwg.mxu0
    %1870 = vrot.lane.b32.xlu0 %v1867, 1
    %v1871 = vpop.permute.xlu0 %1870
    %vm1873 = vcmp.lt.f32.partialorder %v1867, %v1871
    %v1874 = vsel %vm1873, %v1867, %v1871
    %v1875 = vsel %vm1873, 1, 0
    %1877 = vrot.lane.b32.xlu0 %v1874, 1
    %v1878 = vpop.permute.xlu0 %1877
    %vm1880 = vcmp.lt.f32.partialorder %v1867, %v1878
    %v1881 = vsel %vm1880, %v1867, %v1878
    %1882 = vrot.lane.b32.xlu0 %v1875, 1
    %v1883 = vpop.permute.xlu0 %1882
    %v1884 = vsel %vm1880, 2, %v1883
    %1886 = vrot.lane.b32.xlu0 %v1881, 1
    %v1887 = vpop.permute.xlu0 %1886
    %vm1889 = vcmp.lt.f32.partialorder %v1867, %v1887
    %1890 = vrot.lane.b32.xlu0 %v1884, 1
    %v1891 = vpop.permute.xlu0 %1890
    %v1892 = vsel %vm1889, 3, %v1891
    %1893 = vset.pattern.permute.xlu0 3
    %1894 = vperm.xlu0 %1893, %v1892
    %v1895 = vpop.permute.xlu0 %1894
    %vm1896 = vcmp.eq.s32.totalorder %v1895, %v1090
    %v1897 = vsel %vm1896, 1, 0
    %v1898 = vcvt.s32.f32 %v1897
    %1899 = vxpose.xlu0.b32.start [1/16] %v1898, 128
    %1900 = vxpose.xlu0.b32.cont [2/16] 0.0, 128
    %1901 = vxpose.xlu0.b32.cont [3/16] 0.0, 128
    %1902 = vxpose.xlu0.b32.cont [4/16] 0.0, 128
    %1903 = vxpose.xlu0.b32.cont [5/16] 0.0, 128
    %1904 = vxpose.xlu0.b32.cont [6/16] 0.0, 128
    %1905 = vxpose.xlu0.b32.cont [7/16] 0.0, 128
    %1906 = vxpose.xlu0.b32.cont [8/16] 0.0, 128
    %1907 = vxpose.xlu0.b32.cont [9/16] 0.0, 128
    %1908 = vxpose.xlu0.b32.cont [10/16] 0.0, 128
    %1909 = vxpose.xlu0.b32.cont [11/16] 0.0, 128
    %1910 = vxpose.xlu0.b32.cont [12/16] 0.0, 128
    %1911 = vxpose.xlu0.b32.cont [13/16] 0.0, 128
    %1912 = vxpose.xlu0.b32.cont [14/16] 0.0, 128
    %1913 = vxpose.xlu0.b32.cont [15/16] 0.0, 128
    %1914 = vxpose.xlu0.b32.end [16/16] 0.0, 128
    %v1915 = vpop.trf.xlu0
    %v1916 = vpop.trf.xlu0
    %v1917 = vpop.trf.xlu0
    %v1918 = vpop.trf.xlu0
    %v1919 = vpop.trf.xlu0
    %v1920 = vpop.trf.xlu0
    %v1921 = vpop.trf.xlu0
    %v1922 = vpop.trf.xlu0
    %v1923 = vpop.trf.xlu0
    %v1924 = vpop.trf.xlu0
    %v1925 = vpop.trf.xlu0
    %v1926 = vpop.trf.xlu0
    %v1927 = vpop.trf.xlu0
    %v1928 = vpop.trf.xlu0
    %v1929 = vpop.trf.xlu0
    %v1930 = vpop.trf.xlu0
    %v1932 = vsel %vm1206, %v1915, 0
    %1934 = vmatpush.msra.mxu0 0.0
    %1935 = vmatpush.msra.mxu0 0.0
    %1936 = vmatpush.msra.mxu0 0.0
    %1937 = vmatpush.msra.mxu0 0.0
    %1938 = vmatpush.msra.mxu0 0.0
    %1939 = vmatpush.msra.mxu0 0.0
    %1940 = vmatpush.msra.mxu0 0.0
    %1941 = vmatpush.msra.mxu0 0.0
    %1942 = vmatpush.msra.mxu0 0.0
    %1943 = vmatpush.msra.mxu0 0.0
    %1944 = vmatpush.msra.mxu0 0.0
    %1945 = vmatpush.msra.mxu0 0.0
    %1946 = vmatpush.msra.mxu0 0.0
    %1947 = vmatpush.msra.mxu0 0.0
    %1948 = vmatpush.msra.mxu0 0.0
    %1949 = vmatpush.msra.mxu0 %v1088
    %1950 = vmatmul.f32.gmra.mxu0 %v1932
    %v1951 = vpop.f32.mrf.mxu0
    %v1952 = vadd.f32 0.0, %v1951
    %1953 = vdwg.mxu0
    %1954 = vmatpush.msra.mxu0 0.0
    %1955 = vmatpush.msra.mxu0 0.0
    %1956 = vmatpush.msra.mxu0 0.0
    %1957 = vmatpush.msra.mxu0 0.0
    %1958 = vmatpush.msra.mxu0 0.0
    %1959 = vmatpush.msra.mxu0 0.0
    %1960 = vmatpush.msra.mxu0 0.0
    %1961 = vmatpush.msra.mxu0 0.0
    %1962 = vmatpush.msra.mxu0 0.0
    %1963 = vmatpush.msra.mxu0 0.0
    %1964 = vmatpush.msra.mxu0 0.0
    %1965 = vmatpush.msra.mxu0 0.0
    %1966 = vmatpush.msra.mxu0 0.0
    %1967 = vmatpush.msra.mxu0 0.0
    %1968 = vmatpush.msra.mxu0 0.0
    %1969 = vmatpush.msra.mxu0 1.0
    %1970 = vmatmul.f32.gmra.mxu0 %v1932
    %v1971 = vpop.f32.mrf.mxu0
    %v1972 = vadd.f32 0.0, %v1971
    %1973 = vdwg.mxu0
    %v1974 = vmax.f32 %v1972, 1.0
    %1976 = vset.pattern.permute.xlu0 0
    %1977 = vperm.xlu0 %1976, %v1974
    %v1978 = vpop.permute.xlu0 %1977
    %v1980 = vrcp.pop %v1978
    %v1981 = vmul.f32 %v1978, %v1980
    %v1982 = vsub.f32 1.0, %v1981
    %v1983 = vmul.f32 %v1980, %v1982
    %v1984 = vadd.f32 %v1980, %v1983
    %vm1985 = vweird.f32 %v1978
    %vm1986 = vweird.f32 %v1980
    %vm1987 = vmor %vm1985, %vm1986
    %v1988 = vsel %vm1987, %v1980, %v1984
    %v1989 = vand.u32 2147483647, %v1978
    %vm1990 = vcmp.eq.f32.partialorder %v1989, 8.507059e+37
    %v1991 = vand.u32 %v1978, 2147483648
    %v1992 = vor.u32 1.1754944e-38, %v1991
    %v1993 = vsel %vm1990, %v1992, %v1988
    %v1994 = vmul.f32 %v1952, %v1993
    %vm1995 = vcmp.gt.f32.partialorder %v1972, 0.0
    %v1996 = vsel %vm1995, 1, 0
    %1997 = vset.pattern.permute.xlu0 0
    %1998 = vperm.xlu0 %1997, %v1996
    %v1999 = vpop.permute.xlu0 %1998
    %vm2000 = vcmp.eq.s32.totalorder %v1999, 1
    %v2001 = vsel %vm2000, %v1994, %v1820
    %v2002 = vmul.f32 %v2001, %v2001
    %v2003 = vsel %vm1092, %v2002, 0.0
    %2004 = vadd.xlane.f32.xlu0 %v2003
    %v2005 = vpop.xlane.xlu0 %2004
    %v2006 = vmul.f32 %v2001, -2.0
    %v2008 = vsel %vm1097, %v2005, 0
    %2010 = vmatpush.xpose.msra.mxu0 0.0
    %2011 = vmatpush.xpose.msra.mxu0 0.0
    %2012 = vmatpush.xpose.msra.mxu0 0.0
    %2013 = vmatpush.xpose.msra.mxu0 0.0
    %2014 = vmatpush.xpose.msra.mxu0 0.0
    %2015 = vmatpush.xpose.msra.mxu0 0.0
    %2016 = vmatpush.xpose.msra.mxu0 0.0
    %2017 = vmatpush.xpose.msra.mxu0 0.0
    %2018 = vmatpush.xpose.msra.mxu0 0.0
    %2019 = vmatpush.xpose.msra.mxu0 0.0
    %2020 = vmatpush.xpose.msra.mxu0 0.0
    %2021 = vmatpush.xpose.msra.mxu0 0.0
    %2022 = vmatpush.xpose.msra.mxu0 0.0
    %2023 = vmatpush.xpose.msra.mxu0 0.0
    %2024 = vmatpush.xpose.msra.mxu0 0.0
    %2025 = vmatpush.xpose.msra.mxu0 %v2006
    %2026 = vmatmul.f32.gmra.mxu0 %v1088
    %v2027 = vpop.f32.mrf.mxu0
    %v2028 = vadd.f32 0.0, %v2027
    %2029 = vdwg.mxu0
    %2030 = vmatpush.xpose.msra.mxu0 0.0
    %2031 = vmatpush.xpose.msra.mxu0 0.0
    %2032 = vmatpush.xpose.msra.mxu0 0.0
    %2033 = vmatpush.xpose.msra.mxu0 0.0
    %2034 = vmatpush.xpose.msra.mxu0 0.0
    %2035 = vmatpush.xpose.msra.mxu0 0.0
    %2036 = vmatpush.xpose.msra.mxu0 0.0
    %2037 = vmatpush.xpose.msra.mxu0 0.0
    %2038 = vmatpush.xpose.msra.mxu0 0.0
    %2039 = vmatpush.xpose.msra.mxu0 0.0
    %2040 = vmatpush.xpose.msra.mxu0 0.0
    %2041 = vmatpush.xpose.msra.mxu0 0.0
    %2042 = vmatpush.xpose.msra.mxu0 0.0
    %2043 = vmatpush.xpose.msra.mxu0 0.0
    %2044 = vmatpush.xpose.msra.mxu0 0.0
    %2045 = vmatpush.xpose.msra.mxu0 %v2008
    %2046 = vmatmul.f32.gmra.mxu0 %v1099
    %v2047 = vpop.f32.mrf.mxu0
    %v2048 = vadd.f32 %v2028, %v2047
    %2049 = vdwg.mxu0
    %2051 = vrot.lane.b32.xlu0 %v2048, 1
    %v2052 = vpop.permute.xlu0 %2051
    %vm2054 = vcmp.lt.f32.partialorder %v2048, %v2052
    %v2055 = vsel %vm2054, %v2048, %v2052
    %v2056 = vsel %vm2054, 1, 0
    %2058 = vrot.lane.b32.xlu0 %v2055, 1
    %v2059 = vpop.permute.xlu0 %2058
    %vm2061 = vcmp.lt.f32.partialorder %v2048, %v2059
    %v2062 = vsel %vm2061, %v2048, %v2059
    %2063 = vrot.lane.b32.xlu0 %v2056, 1
    %v2064 = vpop.permute.xlu0 %2063
    %v2065 = vsel %vm2061, 2, %v2064
    %2067 = vrot.lane.b32.xlu0 %v2062, 1
    %v2068 = vpop.permute.xlu0 %2067
    %vm2070 = vcmp.lt.f32.partialorder %v2048, %v2068
    %2071 = vrot.lane.b32.xlu0 %v2065, 1
    %v2072 = vpop.permute.xlu0 %2071
    %v2073 = vsel %vm2070, 3, %v2072
    %2074 = vset.pattern.permute.xlu0 3
    %2075 = vperm.xlu0 %2074, %v2073
    %v2076 = vpop.permute.xlu0 %2075
    %vm2077 = vcmp.eq.s32.totalorder %v2076, %v1090
    %v2078 = vsel %vm2077, 1, 0
    %v2079 = vcvt.s32.f32 %v2078
    %2080 = vxpose.xlu0.b32.start [1/16] %v2079, 128
    %2081 = vxpose.xlu0.b32.cont [2/16] 0.0, 128
    %2082 = vxpose.xlu0.b32.cont [3/16] 0.0, 128
    %2083 = vxpose.xlu0.b32.cont [4/16] 0.0, 128
    %2084 = vxpose.xlu0.b32.cont [5/16] 0.0, 128
    %2085 = vxpose.xlu0.b32.cont [6/16] 0.0, 128
    %2086 = vxpose.xlu0.b32.cont [7/16] 0.0, 128
    %2087 = vxpose.xlu0.b32.cont [8/16] 0.0, 128
    %2088 = vxpose.xlu0.b32.cont [9/16] 0.0, 128
    %2089 = vxpose.xlu0.b32.cont [10/16] 0.0, 128
    %2090 = vxpose.xlu0.b32.cont [11/16] 0.0, 128
    %2091 = vxpose.xlu0.b32.cont [12/16] 0.0, 128
    %2092 = vxpose.xlu0.b32.cont [13/16] 0.0, 128
    %2093 = vxpose.xlu0.b32.cont [14/16] 0.0, 128
    %2094 = vxpose.xlu0.b32.cont [15/16] 0.0, 128
    %2095 = vxpose.xlu0.b32.end [16/16] 0.0, 128
    %v2096 = vpop.trf.xlu0
    %v2097 = vpop.trf.xlu0
    %v2098 = vpop.trf.xlu0
    %v2099 = vpop.trf.xlu0
    %v2100 = vpop.trf.xlu0
    %v2101 = vpop.trf.xlu0
    %v2102 = vpop.trf.xlu0
    %v2103 = vpop.trf.xlu0
    %v2104 = vpop.trf.xlu0
    %v2105 = vpop.trf.xlu0
    %v2106 = vpop.trf.xlu0
    %v2107 = vpop.trf.xlu0
    %v2108 = vpop.trf.xlu0
    %v2109 = vpop.trf.xlu0
    %v2110 = vpop.trf.xlu0
    %v2111 = vpop.trf.xlu0
    %v2113 = vsel %vm1206, %v2096, 0
    %2115 = vmatpush.msra.mxu0 0.0
    %2116 = vmatpush.msra.mxu0 0.0
    %2117 = vmatpush.msra.mxu0 0.0
    %2118 = vmatpush.msra.mxu0 0.0
    %2119 = vmatpush.msra.mxu0 0.0
    %2120 = vmatpush.msra.mxu0 0.0
    %2121 = vmatpush.msra.mxu0 0.0
    %2122 = vmatpush.msra.mxu0 0.0
    %2123 = vmatpush.msra.mxu0 0.0
    %2124 = vmatpush.msra.mxu0 0.0
    %2125 = vmatpush.msra.mxu0 0.0
    %2126 = vmatpush.msra.mxu0 0.0
    %2127 = vmatpush.msra.mxu0 0.0
    %2128 = vmatpush.msra.mxu0 0.0
    %2129 = vmatpush.msra.mxu0 0.0
    %2130 = vmatpush.msra.mxu0 %v1088
    %2131 = vmatmul.f32.gmra.mxu0 %v2113
    %v2132 = vpop.f32.mrf.mxu0
    %v2133 = vadd.f32 0.0, %v2132
    %2134 = vdwg.mxu0
    %2135 = vmatpush.msra.mxu0 0.0
    %2136 = vmatpush.msra.mxu0 0.0
    %2137 = vmatpush.msra.mxu0 0.0
    %2138 = vmatpush.msra.mxu0 0.0
    %2139 = vmatpush.msra.mxu0 0.0
    %2140 = vmatpush.msra.mxu0 0.0
    %2141 = vmatpush.msra.mxu0 0.0
    %2142 = vmatpush.msra.mxu0 0.0
    %2143 = vmatpush.msra.mxu0 0.0
    %2144 = vmatpush.msra.mxu0 0.0
    %2145 = vmatpush.msra.mxu0 0.0
    %2146 = vmatpush.msra.mxu0 0.0
    %2147 = vmatpush.msra.mxu0 0.0
    %2148 = vmatpush.msra.mxu0 0.0
    %2149 = vmatpush.msra.mxu0 0.0
    %2150 = vmatpush.msra.mxu0 1.0
    %2151 = vmatmul.f32.gmra.mxu0 %v2113
    %v2152 = vpop.f32.mrf.mxu0
    %v2153 = vadd.f32 0.0, %v2152
    %2154 = vdwg.mxu0
    %v2155 = vmax.f32 %v2153, 1.0
    %2157 = vset.pattern.permute.xlu0 0
    %2158 = vperm.xlu0 %2157, %v2155
    %v2159 = vpop.permute.xlu0 %2158
    %v2161 = vrcp.pop %v2159
    %v2162 = vmul.f32 %v2159, %v2161
    %v2163 = vsub.f32 1.0, %v2162
    %v2164 = vmul.f32 %v2161, %v2163
    %v2165 = vadd.f32 %v2161, %v2164
    %vm2166 = vweird.f32 %v2159
    %vm2167 = vweird.f32 %v2161
    %vm2168 = vmor %vm2166, %vm2167
    %v2169 = vsel %vm2168, %v2161, %v2165
    %v2170 = vand.u32 2147483647, %v2159
    %vm2171 = vcmp.eq.f32.partialorder %v2170, 8.507059e+37
    %v2172 = vand.u32 %v2159, 2147483648
    %v2173 = vor.u32 1.1754944e-38, %v2172
    %v2174 = vsel %vm2171, %v2173, %v2169
    %v2175 = vmul.f32 %v2133, %v2174
    %vm2176 = vcmp.gt.f32.partialorder %v2153, 0.0
    %v2177 = vsel %vm2176, 1, 0
    %2178 = vset.pattern.permute.xlu0 0
    %2179 = vperm.xlu0 %2178, %v2177
    %v2180 = vpop.permute.xlu0 %2179
    %vm2181 = vcmp.eq.s32.totalorder %v2180, 1
    %v2182 = vsel %vm2181, %v2175, %v2001
    %v2183 = vmul.f32 %v2182, %v2182
    %v2184 = vsel %vm1092, %v2183, 0.0
    %2185 = vadd.xlane.f32.xlu0 %v2184
    %v2186 = vpop.xlane.xlu0 %2185
    %v2187 = vmul.f32 %v2182, -2.0
    %v2189 = vsel %vm1097, %v2186, 0
    %2191 = vmatpush.xpose.msra.mxu0 0.0
    %2192 = vmatpush.xpose.msra.mxu0 0.0
    %2193 = vmatpush.xpose.msra.mxu0 0.0
    %2194 = vmatpush.xpose.msra.mxu0 0.0
    %2195 = vmatpush.xpose.msra.mxu0 0.0
    %2196 = vmatpush.xpose.msra.mxu0 0.0
    %2197 = vmatpush.xpose.msra.mxu0 0.0
    %2198 = vmatpush.xpose.msra.mxu0 0.0
    %2199 = vmatpush.xpose.msra.mxu0 0.0
    %2200 = vmatpush.xpose.msra.mxu0 0.0
    %2201 = vmatpush.xpose.msra.mxu0 0.0
    %2202 = vmatpush.xpose.msra.mxu0 0.0
    %2203 = vmatpush.xpose.msra.mxu0 0.0
    %2204 = vmatpush.xpose.msra.mxu0 0.0
    %2205 = vmatpush.xpose.msra.mxu0 0.0
    %2206 = vmatpush.xpose.msra.mxu0 %v2187
    %2207 = vmatmul.f32.gmra.mxu0 %v1088
    %v2208 = vpop.f32.mrf.mxu0
    %v2209 = vadd.f32 0.0, %v2208
    %2210 = vdwg.mxu0
    %2211 = vmatpush.xpose.msra.mxu0 0.0
    %2212 = vmatpush.xpose.msra.mxu0 0.0
    %2213 = vmatpush.xpose.msra.mxu0 0.0
    %2214 = vmatpush.xpose.msra.mxu0 0.0
    %2215 = vmatpush.xpose.msra.mxu0 0.0
    %2216 = vmatpush.xpose.msra.mxu0 0.0
    %2217 = vmatpush.xpose.msra.mxu0 0.0
    %2218 = vmatpush.xpose.msra.mxu0 0.0
    %2219 = vmatpush.xpose.msra.mxu0 0.0
    %2220 = vmatpush.xpose.msra.mxu0 0.0
    %2221 = vmatpush.xpose.msra.mxu0 0.0
    %2222 = vmatpush.xpose.msra.mxu0 0.0
    %2223 = vmatpush.xpose.msra.mxu0 0.0
    %2224 = vmatpush.xpose.msra.mxu0 0.0
    %2225 = vmatpush.xpose.msra.mxu0 0.0
    %2226 = vmatpush.xpose.msra.mxu0 %v2189
    %2227 = vmatmul.f32.gmra.mxu0 %v1099
    %v2228 = vpop.f32.mrf.mxu0
    %v2229 = vadd.f32 %v2209, %v2228
    %2230 = vdwg.mxu0
    %2232 = vrot.lane.b32.xlu0 %v2229, 1
    %v2233 = vpop.permute.xlu0 %2232
    %vm2235 = vcmp.lt.f32.partialorder %v2229, %v2233
    %v2236 = vsel %vm2235, %v2229, %v2233
    %v2237 = vsel %vm2235, 1, 0
    %2239 = vrot.lane.b32.xlu0 %v2236, 1
    %v2240 = vpop.permute.xlu0 %2239
    %vm2242 = vcmp.lt.f32.partialorder %v2229, %v2240
    %v2243 = vsel %vm2242, %v2229, %v2240
    %2244 = vrot.lane.b32.xlu0 %v2237, 1
    %v2245 = vpop.permute.xlu0 %2244
    %v2246 = vsel %vm2242, 2, %v2245
    %2248 = vrot.lane.b32.xlu0 %v2243, 1
    %v2249 = vpop.permute.xlu0 %2248
    %vm2251 = vcmp.lt.f32.partialorder %v2229, %v2249
    %2252 = vrot.lane.b32.xlu0 %v2246, 1
    %v2253 = vpop.permute.xlu0 %2252
    %v2254 = vsel %vm2251, 3, %v2253
    %2255 = vset.pattern.permute.xlu0 3
    %2256 = vperm.xlu0 %2255, %v2254
    %v2257 = vpop.permute.xlu0 %2256
    %vm2258 = vcmp.eq.s32.totalorder %v2257, %v1090
    %v2259 = vsel %vm2258, 1, 0
    %v2260 = vcvt.s32.f32 %v2259
    %2261 = vxpose.xlu0.b32.start [1/16] %v2260, 128
    %2262 = vxpose.xlu0.b32.cont [2/16] 0.0, 128
    %2263 = vxpose.xlu0.b32.cont [3/16] 0.0, 128
    %2264 = vxpose.xlu0.b32.cont [4/16] 0.0, 128
    %2265 = vxpose.xlu0.b32.cont [5/16] 0.0, 128
    %2266 = vxpose.xlu0.b32.cont [6/16] 0.0, 128
    %2267 = vxpose.xlu0.b32.cont [7/16] 0.0, 128
    %2268 = vxpose.xlu0.b32.cont [8/16] 0.0, 128
    %2269 = vxpose.xlu0.b32.cont [9/16] 0.0, 128
    %2270 = vxpose.xlu0.b32.cont [10/16] 0.0, 128
    %2271 = vxpose.xlu0.b32.cont [11/16] 0.0, 128
    %2272 = vxpose.xlu0.b32.cont [12/16] 0.0, 128
    %2273 = vxpose.xlu0.b32.cont [13/16] 0.0, 128
    %2274 = vxpose.xlu0.b32.cont [14/16] 0.0, 128
    %2275 = vxpose.xlu0.b32.cont [15/16] 0.0, 128
    %2276 = vxpose.xlu0.b32.end [16/16] 0.0, 128
    %v2277 = vpop.trf.xlu0
    %v2278 = vpop.trf.xlu0
    %v2279 = vpop.trf.xlu0
    %v2280 = vpop.trf.xlu0
    %v2281 = vpop.trf.xlu0
    %v2282 = vpop.trf.xlu0
    %v2283 = vpop.trf.xlu0
    %v2284 = vpop.trf.xlu0
    %v2285 = vpop.trf.xlu0
    %v2286 = vpop.trf.xlu0
    %v2287 = vpop.trf.xlu0
    %v2288 = vpop.trf.xlu0
    %v2289 = vpop.trf.xlu0
    %v2290 = vpop.trf.xlu0
    %v2291 = vpop.trf.xlu0
    %v2292 = vpop.trf.xlu0
    %v2294 = vsel %vm1206, %v2277, 0
    %2296 = vmatpush.msra.mxu0 0.0
    %2297 = vmatpush.msra.mxu0 0.0
    %2298 = vmatpush.msra.mxu0 0.0
    %2299 = vmatpush.msra.mxu0 0.0
    %2300 = vmatpush.msra.mxu0 0.0
    %2301 = vmatpush.msra.mxu0 0.0
    %2302 = vmatpush.msra.mxu0 0.0
    %2303 = vmatpush.msra.mxu0 0.0
    %2304 = vmatpush.msra.mxu0 0.0
    %2305 = vmatpush.msra.mxu0 0.0
    %2306 = vmatpush.msra.mxu0 0.0
    %2307 = vmatpush.msra.mxu0 0.0
    %2308 = vmatpush.msra.mxu0 0.0
    %2309 = vmatpush.msra.mxu0 0.0
    %2310 = vmatpush.msra.mxu0 0.0
    %2311 = vmatpush.msra.mxu0 %v1088
    %2312 = vmatmul.f32.gmra.mxu0 %v2294
    %v2313 = vpop.f32.mrf.mxu0
    %v2314 = vadd.f32 0.0, %v2313
    %2315 = vdwg.mxu0
    %2316 = vmatpush.msra.mxu0 0.0
    %2317 = vmatpush.msra.mxu0 0.0
    %2318 = vmatpush.msra.mxu0 0.0
    %2319 = vmatpush.msra.mxu0 0.0
    %2320 = vmatpush.msra.mxu0 0.0
    %2321 = vmatpush.msra.mxu0 0.0
    %2322 = vmatpush.msra.mxu0 0.0
    %2323 = vmatpush.msra.mxu0 0.0
    %2324 = vmatpush.msra.mxu0 0.0
    %2325 = vmatpush.msra.mxu0 0.0
    %2326 = vmatpush.msra.mxu0 0.0
    %2327 = vmatpush.msra.mxu0 0.0
    %2328 = vmatpush.msra.mxu0 0.0
    %2329 = vmatpush.msra.mxu0 0.0
    %2330 = vmatpush.msra.mxu0 0.0
    %2331 = vmatpush.msra.mxu0 1.0
    %2332 = vmatmul.f32.gmra.mxu0 %v2294
    %v2333 = vpop.f32.mrf.mxu0
    %v2334 = vadd.f32 0.0, %v2333
    %2335 = vdwg.mxu0
    %v2336 = vmax.f32 %v2334, 1.0
    %2338 = vset.pattern.permute.xlu0 0
    %2339 = vperm.xlu0 %2338, %v2336
    %v2340 = vpop.permute.xlu0 %2339
    %v2342 = vrcp.pop %v2340
    %v2343 = vmul.f32 %v2340, %v2342
    %v2344 = vsub.f32 1.0, %v2343
    %v2345 = vmul.f32 %v2342, %v2344
    %v2346 = vadd.f32 %v2342, %v2345
    %vm2347 = vweird.f32 %v2340
    %vm2348 = vweird.f32 %v2342
    %vm2349 = vmor %vm2347, %vm2348
    %v2350 = vsel %vm2349, %v2342, %v2346
    %v2351 = vand.u32 2147483647, %v2340
    %vm2352 = vcmp.eq.f32.partialorder %v2351, 8.507059e+37
    %v2353 = vand.u32 %v2340, 2147483648
    %v2354 = vor.u32 1.1754944e-38, %v2353
    %v2355 = vsel %vm2352, %v2354, %v2350
    %v2356 = vmul.f32 %v2314, %v2355
    %vm2357 = vcmp.gt.f32.partialorder %v2334, 0.0
    %v2358 = vsel %vm2357, 1, 0
    %2359 = vset.pattern.permute.xlu0 0
    %2360 = vperm.xlu0 %2359, %v2358
    %v2361 = vpop.permute.xlu0 %2360
    %vm2362 = vcmp.eq.s32.totalorder %v2361, 1
    %v2363 = vsel %vm2362, %v2356, %v2182
    %v2364 = vmul.f32 %v2363, %v2363
    %v2365 = vsel %vm1092, %v2364, 0.0
    %2366 = vadd.xlane.f32.xlu0 %v2365
    %v2367 = vpop.xlane.xlu0 %2366
    %v2368 = vmul.f32 %v2363, -2.0
    %v2370 = vsel %vm1097, %v2367, 0
    %2372 = vmatpush.xpose.msra.mxu0 0.0
    %2373 = vmatpush.xpose.msra.mxu0 0.0
    %2374 = vmatpush.xpose.msra.mxu0 0.0
    %2375 = vmatpush.xpose.msra.mxu0 0.0
    %2376 = vmatpush.xpose.msra.mxu0 0.0
    %2377 = vmatpush.xpose.msra.mxu0 0.0
    %2378 = vmatpush.xpose.msra.mxu0 0.0
    %2379 = vmatpush.xpose.msra.mxu0 0.0
    %2380 = vmatpush.xpose.msra.mxu0 0.0
    %2381 = vmatpush.xpose.msra.mxu0 0.0
    %2382 = vmatpush.xpose.msra.mxu0 0.0
    %2383 = vmatpush.xpose.msra.mxu0 0.0
    %2384 = vmatpush.xpose.msra.mxu0 0.0
    %2385 = vmatpush.xpose.msra.mxu0 0.0
    %2386 = vmatpush.xpose.msra.mxu0 0.0
    %2387 = vmatpush.xpose.msra.mxu0 %v2368
    %2388 = vmatmul.f32.gmra.mxu0 %v1088
    %v2389 = vpop.f32.mrf.mxu0
    %v2390 = vadd.f32 0.0, %v2389
    %2391 = vdwg.mxu0
    %2392 = vmatpush.xpose.msra.mxu0 0.0
    %2393 = vmatpush.xpose.msra.mxu0 0.0
    %2394 = vmatpush.xpose.msra.mxu0 0.0
    %2395 = vmatpush.xpose.msra.mxu0 0.0
    %2396 = vmatpush.xpose.msra.mxu0 0.0
    %2397 = vmatpush.xpose.msra.mxu0 0.0
    %2398 = vmatpush.xpose.msra.mxu0 0.0
    %2399 = vmatpush.xpose.msra.mxu0 0.0
    %2400 = vmatpush.xpose.msra.mxu0 0.0
    %2401 = vmatpush.xpose.msra.mxu0 0.0
    %2402 = vmatpush.xpose.msra.mxu0 0.0
    %2403 = vmatpush.xpose.msra.mxu0 0.0
    %2404 = vmatpush.xpose.msra.mxu0 0.0
    %2405 = vmatpush.xpose.msra.mxu0 0.0
    %2406 = vmatpush.xpose.msra.mxu0 0.0
    %2407 = vmatpush.xpose.msra.mxu0 %v2370
    %2408 = vmatmul.f32.gmra.mxu0 %v1099
    %v2409 = vpop.f32.mrf.mxu0
    %v2410 = vadd.f32 %v2390, %v2409
    %2411 = vdwg.mxu0
    %2413 = vrot.lane.b32.xlu0 %v2410, 1
    %v2414 = vpop.permute.xlu0 %2413
    %vm2416 = vcmp.lt.f32.partialorder %v2410, %v2414
    %v2417 = vsel %vm2416, %v2410, %v2414
    %v2418 = vsel %vm2416, 1, 0
    %2420 = vrot.lane.b32.xlu0 %v2417, 1
    %v2421 = vpop.permute.xlu0 %2420
    %vm2423 = vcmp.lt.f32.partialorder %v2410, %v2421
    %v2424 = vsel %vm2423, %v2410, %v2421
    %2425 = vrot.lane.b32.xlu0 %v2418, 1
    %v2426 = vpop.permute.xlu0 %2425
    %v2427 = vsel %vm2423, 2, %v2426
    %2429 = vrot.lane.b32.xlu0 %v2424, 1
    %v2430 = vpop.permute.xlu0 %2429
    %vm2432 = vcmp.lt.f32.partialorder %v2410, %v2430
    %2433 = vrot.lane.b32.xlu0 %v2427, 1
    %v2434 = vpop.permute.xlu0 %2433
    %v2435 = vsel %vm2432, 3, %v2434
    %2436 = vset.pattern.permute.xlu0 3
    %2437 = vperm.xlu0 %2436, %v2435
    %v2438 = vpop.permute.xlu0 %2437
    %vm2439 = vcmp.eq.s32.totalorder %v2438, %v1090
    %v2440 = vsel %vm2439, 1, 0
    %v2441 = vcvt.s32.f32 %v2440
    %2442 = vxpose.xlu0.b32.start [1/16] %v2441, 128
    %2443 = vxpose.xlu0.b32.cont [2/16] 0.0, 128
    %2444 = vxpose.xlu0.b32.cont [3/16] 0.0, 128
    %2445 = vxpose.xlu0.b32.cont [4/16] 0.0, 128
    %2446 = vxpose.xlu0.b32.cont [5/16] 0.0, 128
    %2447 = vxpose.xlu0.b32.cont [6/16] 0.0, 128
    %2448 = vxpose.xlu0.b32.cont [7/16] 0.0, 128
    %2449 = vxpose.xlu0.b32.cont [8/16] 0.0, 128
    %2450 = vxpose.xlu0.b32.cont [9/16] 0.0, 128
    %2451 = vxpose.xlu0.b32.cont [10/16] 0.0, 128
    %2452 = vxpose.xlu0.b32.cont [11/16] 0.0, 128
    %2453 = vxpose.xlu0.b32.cont [12/16] 0.0, 128
    %2454 = vxpose.xlu0.b32.cont [13/16] 0.0, 128
    %2455 = vxpose.xlu0.b32.cont [14/16] 0.0, 128
    %2456 = vxpose.xlu0.b32.cont [15/16] 0.0, 128
    %2457 = vxpose.xlu0.b32.end [16/16] 0.0, 128
    %v2458 = vpop.trf.xlu0
    %v2459 = vpop.trf.xlu0
    %v2460 = vpop.trf.xlu0
    %v2461 = vpop.trf.xlu0
    %v2462 = vpop.trf.xlu0
    %v2463 = vpop.trf.xlu0
    %v2464 = vpop.trf.xlu0
    %v2465 = vpop.trf.xlu0
    %v2466 = vpop.trf.xlu0
    %v2467 = vpop.trf.xlu0
    %v2468 = vpop.trf.xlu0
    %v2469 = vpop.trf.xlu0
    %v2470 = vpop.trf.xlu0
    %v2471 = vpop.trf.xlu0
    %v2472 = vpop.trf.xlu0
    %v2473 = vpop.trf.xlu0
    %v2475 = vsel %vm1206, %v2458, 0
    %2477 = vmatpush.msra.mxu0 0.0
    %2478 = vmatpush.msra.mxu0 0.0
    %2479 = vmatpush.msra.mxu0 0.0
    %2480 = vmatpush.msra.mxu0 0.0
    %2481 = vmatpush.msra.mxu0 0.0
    %2482 = vmatpush.msra.mxu0 0.0
    %2483 = vmatpush.msra.mxu0 0.0
    %2484 = vmatpush.msra.mxu0 0.0
    %2485 = vmatpush.msra.mxu0 0.0
    %2486 = vmatpush.msra.mxu0 0.0
    %2487 = vmatpush.msra.mxu0 0.0
    %2488 = vmatpush.msra.mxu0 0.0
    %2489 = vmatpush.msra.mxu0 0.0
    %2490 = vmatpush.msra.mxu0 0.0
    %2491 = vmatpush.msra.mxu0 0.0
    %2492 = vmatpush.msra.mxu0 %v1088
    %2493 = vmatmul.f32.gmra.mxu0 %v2475
    %v2494 = vpop.f32.mrf.mxu0
    %v2495 = vadd.f32 0.0, %v2494
    %2496 = vdwg.mxu0
    %2497 = vmatpush.msra.mxu0 0.0
    %2498 = vmatpush.msra.mxu0 0.0
    %2499 = vmatpush.msra.mxu0 0.0
    %2500 = vmatpush.msra.mxu0 0.0
    %2501 = vmatpush.msra.mxu0 0.0
    %2502 = vmatpush.msra.mxu0 0.0
    %2503 = vmatpush.msra.mxu0 0.0
    %2504 = vmatpush.msra.mxu0 0.0
    %2505 = vmatpush.msra.mxu0 0.0
    %2506 = vmatpush.msra.mxu0 0.0
    %2507 = vmatpush.msra.mxu0 0.0
    %2508 = vmatpush.msra.mxu0 0.0
    %2509 = vmatpush.msra.mxu0 0.0
    %2510 = vmatpush.msra.mxu0 0.0
    %2511 = vmatpush.msra.mxu0 0.0
    %2512 = vmatpush.msra.mxu0 1.0
    %2513 = vmatmul.f32.gmra.mxu0 %v2475
    %v2514 = vpop.f32.mrf.mxu0
    %v2515 = vadd.f32 0.0, %v2514
    %2516 = vdwg.mxu0
    %v2517 = vmax.f32 %v2515, 1.0
    %2519 = vset.pattern.permute.xlu0 0
    %2520 = vperm.xlu0 %2519, %v2517
    %v2521 = vpop.permute.xlu0 %2520
    %v2523 = vrcp.pop %v2521
    %v2524 = vmul.f32 %v2521, %v2523
    %v2525 = vsub.f32 1.0, %v2524
    %v2526 = vmul.f32 %v2523, %v2525
    %v2527 = vadd.f32 %v2523, %v2526
    %vm2528 = vweird.f32 %v2521
    %vm2529 = vweird.f32 %v2523
    %vm2530 = vmor %vm2528, %vm2529
    %v2531 = vsel %vm2530, %v2523, %v2527
    %v2532 = vand.u32 2147483647, %v2521
    %vm2533 = vcmp.eq.f32.partialorder %v2532, 8.507059e+37
    %v2534 = vand.u32 %v2521, 2147483648
    %v2535 = vor.u32 1.1754944e-38, %v2534
    %v2536 = vsel %vm2533, %v2535, %v2531
    %v2537 = vmul.f32 %v2495, %v2536
    %vm2538 = vcmp.gt.f32.partialorder %v2515, 0.0
    %v2539 = vsel %vm2538, 1, 0
    %2540 = vset.pattern.permute.xlu0 0
    %2541 = vperm.xlu0 %2540, %v2539
    %v2542 = vpop.permute.xlu0 %2541
    %vm2543 = vcmp.eq.s32.totalorder %v2542, 1
    %v2544 = vsel %vm2543, %v2537, %v2363
    %v2545 = vmul.f32 %v2544, %v2544
    %v2546 = vsel %vm1092, %v2545, 0.0
    %2547 = vadd.xlane.f32.xlu0 %v2546
    %v2548 = vpop.xlane.xlu0 %2547
    %v2549 = vmul.f32 %v2544, -2.0
    %v2551 = vsel %vm1097, %v2548, 0
    %2553 = vmatpush.xpose.msra.mxu0 0.0
    %2554 = vmatpush.xpose.msra.mxu0 0.0
    %2555 = vmatpush.xpose.msra.mxu0 0.0
    %2556 = vmatpush.xpose.msra.mxu0 0.0
    %2557 = vmatpush.xpose.msra.mxu0 0.0
    %2558 = vmatpush.xpose.msra.mxu0 0.0
    %2559 = vmatpush.xpose.msra.mxu0 0.0
    %2560 = vmatpush.xpose.msra.mxu0 0.0
    %2561 = vmatpush.xpose.msra.mxu0 0.0
    %2562 = vmatpush.xpose.msra.mxu0 0.0
    %2563 = vmatpush.xpose.msra.mxu0 0.0
    %2564 = vmatpush.xpose.msra.mxu0 0.0
    %2565 = vmatpush.xpose.msra.mxu0 0.0
    %2566 = vmatpush.xpose.msra.mxu0 0.0
    %2567 = vmatpush.xpose.msra.mxu0 0.0
    %2568 = vmatpush.xpose.msra.mxu0 %v2549
    %2569 = vmatmul.f32.gmra.mxu0 %v1088
    %v2570 = vpop.f32.mrf.mxu0
    %v2571 = vadd.f32 0.0, %v2570
    %2572 = vdwg.mxu0
    %2573 = vmatpush.xpose.msra.mxu0 0.0
    %2574 = vmatpush.xpose.msra.mxu0 0.0
    %2575 = vmatpush.xpose.msra.mxu0 0.0
    %2576 = vmatpush.xpose.msra.mxu0 0.0
    %2577 = vmatpush.xpose.msra.mxu0 0.0
    %2578 = vmatpush.xpose.msra.mxu0 0.0
    %2579 = vmatpush.xpose.msra.mxu0 0.0
    %2580 = vmatpush.xpose.msra.mxu0 0.0
    %2581 = vmatpush.xpose.msra.mxu0 0.0
    %2582 = vmatpush.xpose.msra.mxu0 0.0
    %2583 = vmatpush.xpose.msra.mxu0 0.0
    %2584 = vmatpush.xpose.msra.mxu0 0.0
    %2585 = vmatpush.xpose.msra.mxu0 0.0
    %2586 = vmatpush.xpose.msra.mxu0 0.0
    %2587 = vmatpush.xpose.msra.mxu0 0.0
    %2588 = vmatpush.xpose.msra.mxu0 %v2551
    %2589 = vmatmul.f32.gmra.mxu0 %v1099
    %v2590 = vpop.f32.mrf.mxu0
    %v2591 = vadd.f32 %v2571, %v2590
    %2592 = vdwg.mxu0
    %2594 = vrot.lane.b32.xlu0 %v2591, 1
    %v2595 = vpop.permute.xlu0 %2594
    %vm2597 = vcmp.lt.f32.partialorder %v2591, %v2595
    %v2598 = vsel %vm2597, %v2591, %v2595
    %v2599 = vsel %vm2597, 1, 0
    %2601 = vrot.lane.b32.xlu0 %v2598, 1
    %v2602 = vpop.permute.xlu0 %2601
    %vm2604 = vcmp.lt.f32.partialorder %v2591, %v2602
    %v2605 = vsel %vm2604, %v2591, %v2602
    %2606 = vrot.lane.b32.xlu0 %v2599, 1
    %v2607 = vpop.permute.xlu0 %2606
    %v2608 = vsel %vm2604, 2, %v2607
    %2610 = vrot.lane.b32.xlu0 %v2605, 1
    %v2611 = vpop.permute.xlu0 %2610
    %vm2613 = vcmp.lt.f32.partialorder %v2591, %v2611
    %2614 = vrot.lane.b32.xlu0 %v2608, 1
    %v2615 = vpop.permute.xlu0 %2614
    %v2616 = vsel %vm2613, 3, %v2615
    %2617 = vset.pattern.permute.xlu0 3
    %2618 = vperm.xlu0 %2617, %v2616
    %v2619 = vpop.permute.xlu0 %2618
    %vm2620 = vcmp.eq.s32.totalorder %v2619, %v1090
    %v2621 = vsel %vm2620, 1, 0
    %v2622 = vcvt.s32.f32 %v2621
    %2623 = vxpose.xlu0.b32.start [1/16] %v2622, 128
    %2624 = vxpose.xlu0.b32.cont [2/16] 0.0, 128
    %2625 = vxpose.xlu0.b32.cont [3/16] 0.0, 128
    %2626 = vxpose.xlu0.b32.cont [4/16] 0.0, 128
    %2627 = vxpose.xlu0.b32.cont [5/16] 0.0, 128
    %2628 = vxpose.xlu0.b32.cont [6/16] 0.0, 128
    %2629 = vxpose.xlu0.b32.cont [7/16] 0.0, 128
    %2630 = vxpose.xlu0.b32.cont [8/16] 0.0, 128
    %2631 = vxpose.xlu0.b32.cont [9/16] 0.0, 128
    %2632 = vxpose.xlu0.b32.cont [10/16] 0.0, 128
    %2633 = vxpose.xlu0.b32.cont [11/16] 0.0, 128
    %2634 = vxpose.xlu0.b32.cont [12/16] 0.0, 128
    %2635 = vxpose.xlu0.b32.cont [13/16] 0.0, 128
    %2636 = vxpose.xlu0.b32.cont [14/16] 0.0, 128
    %2637 = vxpose.xlu0.b32.cont [15/16] 0.0, 128
    %2638 = vxpose.xlu0.b32.end [16/16] 0.0, 128
    %v2639 = vpop.trf.xlu0
    %v2640 = vpop.trf.xlu0
    %v2641 = vpop.trf.xlu0
    %v2642 = vpop.trf.xlu0
    %v2643 = vpop.trf.xlu0
    %v2644 = vpop.trf.xlu0
    %v2645 = vpop.trf.xlu0
    %v2646 = vpop.trf.xlu0
    %v2647 = vpop.trf.xlu0
    %v2648 = vpop.trf.xlu0
    %v2649 = vpop.trf.xlu0
    %v2650 = vpop.trf.xlu0
    %v2651 = vpop.trf.xlu0
    %v2652 = vpop.trf.xlu0
    %v2653 = vpop.trf.xlu0
    %v2654 = vpop.trf.xlu0
    %v2656 = vsel %vm1206, %v2639, 0
    %2658 = vmatpush.msra.mxu0 0.0
    %2659 = vmatpush.msra.mxu0 0.0
    %2660 = vmatpush.msra.mxu0 0.0
    %2661 = vmatpush.msra.mxu0 0.0
    %2662 = vmatpush.msra.mxu0 0.0
    %2663 = vmatpush.msra.mxu0 0.0
    %2664 = vmatpush.msra.mxu0 0.0
    %2665 = vmatpush.msra.mxu0 0.0
    %2666 = vmatpush.msra.mxu0 0.0
    %2667 = vmatpush.msra.mxu0 0.0
    %2668 = vmatpush.msra.mxu0 0.0
    %2669 = vmatpush.msra.mxu0 0.0
    %2670 = vmatpush.msra.mxu0 0.0
    %2671 = vmatpush.msra.mxu0 0.0
    %2672 = vmatpush.msra.mxu0 0.0
    %2673 = vmatpush.msra.mxu0 %v1088
    %2674 = vmatmul.f32.gmra.mxu0 %v2656
    %v2675 = vpop.f32.mrf.mxu0
    %v2676 = vadd.f32 0.0, %v2675
    %2677 = vdwg.mxu0
    %2678 = vmatpush.msra.mxu0 0.0
    %2679 = vmatpush.msra.mxu0 0.0
    %2680 = vmatpush.msra.mxu0 0.0
    %2681 = vmatpush.msra.mxu0 0.0
    %2682 = vmatpush.msra.mxu0 0.0
    %2683 = vmatpush.msra.mxu0 0.0
    %2684 = vmatpush.msra.mxu0 0.0
    %2685 = vmatpush.msra.mxu0 0.0
    %2686 = vmatpush.msra.mxu0 0.0
    %2687 = vmatpush.msra.mxu0 0.0
    %2688 = vmatpush.msra.mxu0 0.0
    %2689 = vmatpush.msra.mxu0 0.0
    %2690 = vmatpush.msra.mxu0 0.0
    %2691 = vmatpush.msra.mxu0 0.0
    %2692 = vmatpush.msra.mxu0 0.0
    %2693 = vmatpush.msra.mxu0 1.0
    %2694 = vmatmul.f32.gmra.mxu0 %v2656
    %v2695 = vpop.f32.mrf.mxu0
    %v2696 = vadd.f32 0.0, %v2695
    %2697 = vdwg.mxu0
    %v2698 = vmax.f32 %v2696, 1.0
    %2700 = vset.pattern.permute.xlu0 0
    %2701 = vperm.xlu0 %2700, %v2698
    %v2702 = vpop.permute.xlu0 %2701
    %v2704 = vrcp.pop %v2702
    %v2705 = vmul.f32 %v2702, %v2704
    %v2706 = vsub.f32 1.0, %v2705
    %v2707 = vmul.f32 %v2704, %v2706
    %v2708 = vadd.f32 %v2704, %v2707
    %vm2709 = vweird.f32 %v2702
    %vm2710 = vweird.f32 %v2704
    %vm2711 = vmor %vm2709, %vm2710
    %v2712 = vsel %vm2711, %v2704, %v2708
    %v2713 = vand.u32 2147483647, %v2702
    %vm2714 = vcmp.eq.f32.partialorder %v2713, 8.507059e+37
    %v2715 = vand.u32 %v2702, 2147483648
    %v2716 = vor.u32 1.1754944e-38, %v2715
    %v2717 = vsel %vm2714, %v2716, %v2712
    %v2718 = vmul.f32 %v2676, %v2717
    %vm2719 = vcmp.gt.f32.partialorder %v2696, 0.0
    %v2720 = vsel %vm2719, 1, 0
    %2721 = vset.pattern.permute.xlu0 0
    %2722 = vperm.xlu0 %2721, %v2720
    %v2723 = vpop.permute.xlu0 %2722
    %vm2724 = vcmp.eq.s32.totalorder %v2723, 1
    %v2725 = vsel %vm2724, %v2718, %v2544
    %v2726 = vmul.f32 %v2725, %v2725
    %v2727 = vsel %vm1092, %v2726, 0.0
    %2728 = vadd.xlane.f32.xlu0 %v2727
    %v2729 = vpop.xlane.xlu0 %2728
    %v2730 = vmul.f32 %v2725, -2.0
    %v2732 = vsel %vm1097, %v2729, 0
    %2734 = vmatpush.xpose.msra.mxu0 0.0
    %2735 = vmatpush.xpose.msra.mxu0 0.0
    %2736 = vmatpush.xpose.msra.mxu0 0.0
    %2737 = vmatpush.xpose.msra.mxu0 0.0
    %2738 = vmatpush.xpose.msra.mxu0 0.0
    %2739 = vmatpush.xpose.msra.mxu0 0.0
    %2740 = vmatpush.xpose.msra.mxu0 0.0
    %2741 = vmatpush.xpose.msra.mxu0 0.0
    %2742 = vmatpush.xpose.msra.mxu0 0.0
    %2743 = vmatpush.xpose.msra.mxu0 0.0
    %2744 = vmatpush.xpose.msra.mxu0 0.0
    %2745 = vmatpush.xpose.msra.mxu0 0.0
    %2746 = vmatpush.xpose.msra.mxu0 0.0
    %2747 = vmatpush.xpose.msra.mxu0 0.0
    %2748 = vmatpush.xpose.msra.mxu0 0.0
    %2749 = vmatpush.xpose.msra.mxu0 %v2730
    %2750 = vmatmul.f32.gmra.mxu0 %v1088
    %v2751 = vpop.f32.mrf.mxu0
    %v2752 = vadd.f32 0.0, %v2751
    %2753 = vdwg.mxu0
    %2754 = vmatpush.xpose.msra.mxu0 0.0
    %2755 = vmatpush.xpose.msra.mxu0 0.0
    %2756 = vmatpush.xpose.msra.mxu0 0.0
    %2757 = vmatpush.xpose.msra.mxu0 0.0
    %2758 = vmatpush.xpose.msra.mxu0 0.0
    %2759 = vmatpush.xpose.msra.mxu0 0.0
    %2760 = vmatpush.xpose.msra.mxu0 0.0
    %2761 = vmatpush.xpose.msra.mxu0 0.0
    %2762 = vmatpush.xpose.msra.mxu0 0.0
    %2763 = vmatpush.xpose.msra.mxu0 0.0
    %2764 = vmatpush.xpose.msra.mxu0 0.0
    %2765 = vmatpush.xpose.msra.mxu0 0.0
    %2766 = vmatpush.xpose.msra.mxu0 0.0
    %2767 = vmatpush.xpose.msra.mxu0 0.0
    %2768 = vmatpush.xpose.msra.mxu0 0.0
    %2769 = vmatpush.xpose.msra.mxu0 %v2732
    %2770 = vmatmul.f32.gmra.mxu0 %v1099
    %v2771 = vpop.f32.mrf.mxu0
    %v2772 = vadd.f32 %v2752, %v2771
    %2773 = vdwg.mxu0
    %2775 = vrot.lane.b32.xlu0 %v2772, 1
    %v2776 = vpop.permute.xlu0 %2775
    %vm2778 = vcmp.lt.f32.partialorder %v2772, %v2776
    %v2779 = vsel %vm2778, %v2772, %v2776
    %v2780 = vsel %vm2778, 1, 0
    %2782 = vrot.lane.b32.xlu0 %v2779, 1
    %v2783 = vpop.permute.xlu0 %2782
    %vm2785 = vcmp.lt.f32.partialorder %v2772, %v2783
    %v2786 = vsel %vm2785, %v2772, %v2783
    %2787 = vrot.lane.b32.xlu0 %v2780, 1
    %v2788 = vpop.permute.xlu0 %2787
    %v2789 = vsel %vm2785, 2, %v2788
    %2791 = vrot.lane.b32.xlu0 %v2786, 1
    %v2792 = vpop.permute.xlu0 %2791
    %vm2794 = vcmp.lt.f32.partialorder %v2772, %v2792
    %2795 = vrot.lane.b32.xlu0 %v2789, 1
    %v2796 = vpop.permute.xlu0 %2795
    %v2797 = vsel %vm2794, 3, %v2796
    %2798 = vset.pattern.permute.xlu0 3
    %2799 = vperm.xlu0 %2798, %v2797
    %v2800 = vpop.permute.xlu0 %2799
    %vm2801 = vcmp.eq.s32.totalorder %v2800, %v1090
    %v2802 = vsel %vm2801, 1, 0
    %v2803 = vcvt.s32.f32 %v2802
    %2804 = vxpose.xlu0.b32.start [1/16] %v2803, 128
    %2805 = vxpose.xlu0.b32.cont [2/16] 0.0, 128
    %2806 = vxpose.xlu0.b32.cont [3/16] 0.0, 128
    %2807 = vxpose.xlu0.b32.cont [4/16] 0.0, 128
    %2808 = vxpose.xlu0.b32.cont [5/16] 0.0, 128
    %2809 = vxpose.xlu0.b32.cont [6/16] 0.0, 128
    %2810 = vxpose.xlu0.b32.cont [7/16] 0.0, 128
    %2811 = vxpose.xlu0.b32.cont [8/16] 0.0, 128
    %2812 = vxpose.xlu0.b32.cont [9/16] 0.0, 128
    %2813 = vxpose.xlu0.b32.cont [10/16] 0.0, 128
    %2814 = vxpose.xlu0.b32.cont [11/16] 0.0, 128
    %2815 = vxpose.xlu0.b32.cont [12/16] 0.0, 128
    %2816 = vxpose.xlu0.b32.cont [13/16] 0.0, 128
    %2817 = vxpose.xlu0.b32.cont [14/16] 0.0, 128
    %2818 = vxpose.xlu0.b32.cont [15/16] 0.0, 128
    %2819 = vxpose.xlu0.b32.end [16/16] 0.0, 128
    %v2820 = vpop.trf.xlu0
    %v2821 = vpop.trf.xlu0
    %v2822 = vpop.trf.xlu0
    %v2823 = vpop.trf.xlu0
    %v2824 = vpop.trf.xlu0
    %v2825 = vpop.trf.xlu0
    %v2826 = vpop.trf.xlu0
    %v2827 = vpop.trf.xlu0
    %v2828 = vpop.trf.xlu0
    %v2829 = vpop.trf.xlu0
    %v2830 = vpop.trf.xlu0
    %v2831 = vpop.trf.xlu0
    %v2832 = vpop.trf.xlu0
    %v2833 = vpop.trf.xlu0
    %v2834 = vpop.trf.xlu0
    %v2835 = vpop.trf.xlu0
    %v2837 = vsel %vm1206, %v2820, 0
    %2839 = vmatpush.msra.mxu0 0.0
    %2840 = vmatpush.msra.mxu0 0.0
    %2841 = vmatpush.msra.mxu0 0.0
    %2842 = vmatpush.msra.mxu0 0.0
    %2843 = vmatpush.msra.mxu0 0.0
    %2844 = vmatpush.msra.mxu0 0.0
    %2845 = vmatpush.msra.mxu0 0.0
    %2846 = vmatpush.msra.mxu0 0.0
    %2847 = vmatpush.msra.mxu0 0.0
    %2848 = vmatpush.msra.mxu0 0.0
    %2849 = vmatpush.msra.mxu0 0.0
    %2850 = vmatpush.msra.mxu0 0.0
    %2851 = vmatpush.msra.mxu0 0.0
    %2852 = vmatpush.msra.mxu0 0.0
    %2853 = vmatpush.msra.mxu0 0.0
    %2854 = vmatpush.msra.mxu0 %v1088
    %2855 = vmatmul.f32.gmra.mxu0 %v2837
    %v2856 = vpop.f32.mrf.mxu0
    %v2857 = vadd.f32 0.0, %v2856
    %2858 = vdwg.mxu0
    %2859 = vmatpush.msra.mxu0 0.0
    %2860 = vmatpush.msra.mxu0 0.0
    %2861 = vmatpush.msra.mxu0 0.0
    %2862 = vmatpush.msra.mxu0 0.0
    %2863 = vmatpush.msra.mxu0 0.0
    %2864 = vmatpush.msra.mxu0 0.0
    %2865 = vmatpush.msra.mxu0 0.0
    %2866 = vmatpush.msra.mxu0 0.0
    %2867 = vmatpush.msra.mxu0 0.0
    %2868 = vmatpush.msra.mxu0 0.0
    %2869 = vmatpush.msra.mxu0 0.0
    %2870 = vmatpush.msra.mxu0 0.0
    %2871 = vmatpush.msra.mxu0 0.0
    %2872 = vmatpush.msra.mxu0 0.0
    %2873 = vmatpush.msra.mxu0 0.0
    %2874 = vmatpush.msra.mxu0 1.0
    %2875 = vmatmul.f32.gmra.mxu0 %v2837
    %v2876 = vpop.f32.mrf.mxu0
    %v2877 = vadd.f32 0.0, %v2876
    %2878 = vdwg.mxu0
    %v2879 = vmax.f32 %v2877, 1.0
    %2881 = vset.pattern.permute.xlu0 0
    %2882 = vperm.xlu0 %2881, %v2879
    %v2883 = vpop.permute.xlu0 %2882
    %v2885 = vrcp.pop %v2883
    %v2886 = vmul.f32 %v2883, %v2885
    %v2887 = vsub.f32 1.0, %v2886
    %v2888 = vmul.f32 %v2885, %v2887
    %v2889 = vadd.f32 %v2885, %v2888
    %vm2890 = vweird.f32 %v2883
    %vm2891 = vweird.f32 %v2885
    %vm2892 = vmor %vm2890, %vm2891
    %v2893 = vsel %vm2892, %v2885, %v2889
    %v2894 = vand.u32 2147483647, %v2883
    %vm2895 = vcmp.eq.f32.partialorder %v2894, 8.507059e+37
    %v2896 = vand.u32 %v2883, 2147483648
    %v2897 = vor.u32 1.1754944e-38, %v2896
    %v2898 = vsel %vm2895, %v2897, %v2893
    %v2899 = vmul.f32 %v2857, %v2898
    %vm2900 = vcmp.gt.f32.partialorder %v2877, 0.0
    %v2901 = vsel %vm2900, 1, 0
    %2902 = vset.pattern.permute.xlu0 0
    %2903 = vperm.xlu0 %2902, %v2901
    %v2904 = vpop.permute.xlu0 %2903
    %vm2905 = vcmp.eq.s32.totalorder %v2904, 1
    %v2906 = vsel %vm2905, %v2899, %v2725
    %v2907 = vmul.f32 %v2906, %v2906
    %v2908 = vsel %vm1092, %v2907, 0.0
    %2909 = vadd.xlane.f32.xlu0 %v2908
    %v2910 = vpop.xlane.xlu0 %2909
    %v2911 = vmul.f32 %v2906, -2.0
    %v2913 = vsel %vm1097, %v2910, 0
    %2915 = vmatpush.xpose.msra.mxu0 0.0
    %2916 = vmatpush.xpose.msra.mxu0 0.0
    %2917 = vmatpush.xpose.msra.mxu0 0.0
    %2918 = vmatpush.xpose.msra.mxu0 0.0
    %2919 = vmatpush.xpose.msra.mxu0 0.0
    %2920 = vmatpush.xpose.msra.mxu0 0.0
    %2921 = vmatpush.xpose.msra.mxu0 0.0
    %2922 = vmatpush.xpose.msra.mxu0 0.0
    %2923 = vmatpush.xpose.msra.mxu0 0.0
    %2924 = vmatpush.xpose.msra.mxu0 0.0
    %2925 = vmatpush.xpose.msra.mxu0 0.0
    %2926 = vmatpush.xpose.msra.mxu0 0.0
    %2927 = vmatpush.xpose.msra.mxu0 0.0
    %2928 = vmatpush.xpose.msra.mxu0 0.0
    %2929 = vmatpush.xpose.msra.mxu0 0.0
    %2930 = vmatpush.xpose.msra.mxu0 %v2911
    %2931 = vmatmul.f32.gmra.mxu0 %v1088
    %v2932 = vpop.f32.mrf.mxu0
    %v2933 = vadd.f32 0.0, %v2932
    %2934 = vdwg.mxu0
    %2935 = vmatpush.xpose.msra.mxu0 0.0
    %2936 = vmatpush.xpose.msra.mxu0 0.0
    %2937 = vmatpush.xpose.msra.mxu0 0.0
    %2938 = vmatpush.xpose.msra.mxu0 0.0
    %2939 = vmatpush.xpose.msra.mxu0 0.0
    %2940 = vmatpush.xpose.msra.mxu0 0.0
    %2941 = vmatpush.xpose.msra.mxu0 0.0
    %2942 = vmatpush.xpose.msra.mxu0 0.0
    %2943 = vmatpush.xpose.msra.mxu0 0.0
    %2944 = vmatpush.xpose.msra.mxu0 0.0
    %2945 = vmatpush.xpose.msra.mxu0 0.0
    %2946 = vmatpush.xpose.msra.mxu0 0.0
    %2947 = vmatpush.xpose.msra.mxu0 0.0
    %2948 = vmatpush.xpose.msra.mxu0 0.0
    %2949 = vmatpush.xpose.msra.mxu0 0.0
    %2950 = vmatpush.xpose.msra.mxu0 %v2913
    %2951 = vmatmul.f32.gmra.mxu0 %v1099
    %v2952 = vpop.f32.mrf.mxu0
    %v2953 = vadd.f32 %v2933, %v2952
    %2954 = vdwg.mxu0
    %2956 = vrot.lane.b32.xlu0 %v2953, 1
    %v2957 = vpop.permute.xlu0 %2956
    %vm2959 = vcmp.lt.f32.partialorder %v2953, %v2957
    %v2960 = vsel %vm2959, %v2953, %v2957
    %v2961 = vsel %vm2959, 1, 0
    %2963 = vrot.lane.b32.xlu0 %v2960, 1
    %v2964 = vpop.permute.xlu0 %2963
    %vm2966 = vcmp.lt.f32.partialorder %v2953, %v2964
    %v2967 = vsel %vm2966, %v2953, %v2964
    %2968 = vrot.lane.b32.xlu0 %v2961, 1
    %v2969 = vpop.permute.xlu0 %2968
    %v2970 = vsel %vm2966, 2, %v2969
    %2972 = vrot.lane.b32.xlu0 %v2967, 1
    %v2973 = vpop.permute.xlu0 %2972
    %vm2975 = vcmp.lt.f32.partialorder %v2953, %v2973
    %2976 = vrot.lane.b32.xlu0 %v2970, 1
    %v2977 = vpop.permute.xlu0 %2976
    %v2978 = vsel %vm2975, 3, %v2977
    %v2980 = vperm.slane %v1058, 0
    %2982 = vmatpush.msra.mxu0 %v1057
    %2983 = vmatpush.msra.mxu0 %v1056
    %2984 = vmatpush.msra.mxu0 %v1055
    %2985 = vmatpush.msra.mxu0 %v1054
    %2986 = vmatpush.msra.mxu0 %v1053
    %2987 = vmatpush.msra.mxu0 %v1052
    %2988 = vmatpush.msra.mxu0 %v1051
    %2989 = vmatpush.msra.mxu0 %v1050
    %2990 = vmatpush.msra.mxu0 %v1049
    %2991 = vmatpush.msra.mxu0 %v1048
    %2992 = vmatpush.msra.mxu0 %v1047
    %2993 = vmatpush.msra.mxu0 %v1046
    %2994 = vmatpush.msra.mxu0 %v1045
    %2995 = vmatpush.msra.mxu0 %v1044
    %2996 = vmatpush.msra.mxu0 %v1043
    %2997 = vmatpush.msra.mxu0 %v1042
    %2998 = vmatmul.f32.gmra.mxu0 %v1087
    %v2999 = vpop.f32.mrf.mxu0
    %v3000 = vadd.f32 %v2980, %v2999
    %3001 = vmatmul.f32.gmra.mxu0 %v1088
    %v3002 = vpop.f32.mrf.mxu0
    %v3003 = vadd.f32 %v2980, %v3002
    %3004 = vdwg.mxu0
    %3005 = vmax.xlane.f32.xlu0 %v3000
    %v3006 = vpop.xlane.xlu0 %3005
    %3007 = vmax.xlane.f32.xlu0 %v3003
    %v3008 = vpop.xlane.xlu0 %3007
    %v3009 = vsub.f32 %v3000, %v3006
    %v3010 = vsub.f32 %v3003, %v3008
    %v3011 = vmul.f32 %v3009, 1.442695
    %v3012 = vpow.pop %v3011
    %v3013 = vmul.f32 %v3010, 1.442695
    %v3014 = vpow.pop %v3013
    %3015 = vadd.xlane.f32.xlu0 %v3012
    %v3016 = vpop.xlane.xlu0 %3015
    %3017 = vadd.xlane.f32.xlu0 %v3014
    %v3018 = vpop.xlane.xlu0 %3017
    %v3019 = vrcp.pop %v3016
    %v3020 = vrcp.pop %v3018
    %v3021 = vmul.f32 %v3012, %v3019
    %v3022 = vmul.f32 %v3014, %v3020
    %3023 = vst [vmem:[%s6] sm:$0xff] %v1087
    %3024 = vst [vmem:[%s6 + $0x8] sm:$0xff] %v1088
    %3025 = vst [vmem:[%s7] sm:$0xff] %v3021
    %3026 = vst [vmem:[%s7 + $0x8] sm:$0xff] %v3022
    %3027 = vrot.lane.b32.xlu0 %v2978, 125
    %v3028 = vpop.permute.xlu0 %3027
    %3029 = vst.msk [vmem:[%s8] sm:$0xff] %vm1097, %v3028
    %3030 = vst [vmem:[#allocation8] sm:$0xf] %v2906
    // Predicated region
    $region38: #{model_forward.1} parent=1 // pred_check
      _
    $region39: #{model_forward.1} parent=1 // pred_check_branch
      %3032 = sbr.rel (0) target = $region41
    $region40: #{model_forward.1} parent=1 // pred_region
      _
    $region41: #{model_forward.1} parent=1 // pred_fallthru
      _
    // Predicated region
    $region42: #{model_forward.1} parent=1 // pred_check
      _
    $region43: #{model_forward.1} parent=1 // pred_check_branch
      %3034 = sbr.rel (0) target = $region45
    $region44: #{model_forward.1} parent=1 // pred_region
      _
    $region45: #{model_forward.1} parent=1 // pred_fallthru
      _
    // Predicated region
    $region46: #{model_forward.1} parent=1 // pred_check
      _
    $region47: #{model_forward.1} parent=1 // pred_check_branch
      %3036 = sbr.rel (0) target = $region49
    $region48: #{model_forward.1} parent=1 // pred_region
      _
    $region49: #{model_forward.1} parent=1 // pred_fallthru
      _
    // Predicated region
    $region50: #{model_forward.1} parent=1 // pred_check
      _
    $region51: #{model_forward.1} parent=1 // pred_check_branch
      %3038 = sbr.rel (0) target = $region53
    $region52: #{model_forward.1} parent=1 // pred_region
      %3040 = vsyncadd [#allocation4], 0
      %s3042 = sshll.u32 [#allocation8], 4
      %s3043 = int_to_ptr.vmem [resolvable:$true] %s3042
      %s3044 = sshll.u32 %s9, 4
      %s3045 = int_to_ptr.hbm [resolvable:$true] %s3044
      %3047 = dma.vmem_to_hbm [thread:$0]  %s3043, 64, %s3045, [#allocation4]
    $region53: #{model_forward.1} parent=1 // pred_fallthru
      _
    // Predicated region
    $region54: #{model_forward.1} parent=1 // pred_check
      _
    $region55: #{model_forward.1} parent=1 // pred_check_branch
      %3049 = sbr.rel (0) target = $region57
    $region56: #{model_forward.1} parent=1 // pred_region
      _
    $region57: #{model_forward.1} parent=1 // pred_fallthru
      _
    // Predicated region
    $region58: #{model_forward.1} parent=1 // pred_check
      _
    $region59: #{model_forward.1} parent=1 // pred_check_branch
      %3051 = sbr.rel (0) target = $region61
    $region60: #{model_forward.1} parent=1 // pred_region
      _
    $region61: #{model_forward.1} parent=1 // pred_fallthru
      _
    // Predicated region
    $region62: #{model_forward.1} parent=1 // pred_check
      _
    $region63: #{model_forward.1} parent=1 // pred_check_branch
      %3053 = sbr.rel (0) target = $region65
    $region64: #{model_forward.1} parent=1 // pred_region
      _
    $region65: #{model_forward.1} parent=1 // pred_fallthru
      _
    // Predicated region
    $region66: #{model_forward.1} parent=1 // pred_check
      _
    $region67: #{model_forward.1} parent=1 // pred_check_branch
      %3055 = sbr.rel (0) target = $region69
    $region68: #{model_forward.1} parent=1 // pred_region
      %3057 = dma.done [#allocation4], 64
    $region69: #{model_forward.1} parent=1 // pred_fallthru
      _
    %3058 = vsyncpa [#allocation3], 1
    %3059 = vsyncpa [#allocation6], 1
    %3060 = vsyncpa [#allocation4], 1

</llo_original>
